<compile_context>
chip_gen: v5e
topology: v5e:2x2
jax: 0.10.0
libtpu: 0.0.40
codegen_flags: <defaults>
</compile_context>

<pallas_src>
import functools

import jax
import jax.numpy as jnp
import numpy as np
from jax.experimental import pallas as pl
from jax.experimental.pallas import tpu as pltpu


# -----------------------------------------------------------------------------
# Pallas kernel
# -----------------------------------------------------------------------------
def _layer_norm(v, g, b):
    # all-f32 LayerNorm (eps matches nn.LayerNorm default 1e-5)
    mu = jnp.mean(v, axis=-1, keepdims=True)
    xc = v - mu
    var = jnp.mean(xc * xc, axis=-1, keepdims=True)
    return xc * jax.lax.rsqrt(var + 1e-5) * g + b


def basic_transformer_block_kernel(
    x_ref, ctx_ref,
    # norm1 + attn1 (self-attention)
    g1_ref, be1_ref, wq1_ref, wk1_ref, wv1_ref, wo1_ref, bo1_ref,
    # norm2 + attn2 (cross-attention)
    g2_ref, be2_ref, wq2_ref, wk2_ref, wv2_ref, wo2_ref, bo2_ref,
    # norm3 + GEGLU feed-forward (w1 split into value/gate halves)
    g3_ref, be3_ref, w1a_ref, b1a_ref, w1b_ref, b1b_ref, w2_ref, b2_ref,
    o_ref,
    *, H, DH,
):
    f32 = jnp.float32
    bf16 = jnp.bfloat16
    scale = DH ** -0.5

    # current batch element (block is (1, N, D) / (1, M, Dc))
    x = x_ref[0].astype(f32)        # (N, D)  residual stream stays f32
    ctx = ctx_ref[0].astype(bf16)   # (M, Dc) only ever a matmul operand

    # --- hoist parameters: each ref read exactly once ---
    g1, be1 = g1_ref[...], be1_ref[...]
    g2, be2 = g2_ref[...], be2_ref[...]
    g3, be3 = g3_ref[...], be3_ref[...]
    wq1, wk1, wv1 = wq1_ref[...], wk1_ref[...], wv1_ref[...]
    wo1, bo1 = wo1_ref[...], bo1_ref[...]
    wq2, wk2, wv2 = wq2_ref[...], wk2_ref[...], wv2_ref[...]
    wo2, bo2 = wo2_ref[...], bo2_ref[...]
    w1a, b1a = w1a_ref[...], b1a_ref[...]
    w1b, b1b = w1b_ref[...], b1b_ref[...]
    w2, b2 = w2_ref[...], b2_ref[...]

    def attention(xq_bf, xc_bf, wq, wk, wv, wo, bo):
        # xq_bf: (nq, D) bf16 query stream, xc_bf: (nk, Dc) bf16 key/value stream
        nq = xq_bf.shape[0]
        nk = xc_bf.shape[0]

        q = jnp.dot(xq_bf, wq, preferred_element_type=f32) * scale  # (nq, H*DH)
        k = jnp.dot(xc_bf, wk, preferred_element_type=f32)          # (nk, H*DH)
        v = jnp.dot(xc_bf, wv, preferred_element_type=f32)          # (nk, H*DH)

        # heads -> leading batch axis of a batched matmul ('b n (h d)' grouping)
        qh = q.reshape(nq, H, DH).transpose(1, 0, 2).astype(bf16)   # (H, nq, DH)
        kh = k.reshape(nk, H, DH).transpose(1, 0, 2).astype(bf16)   # (H, nk, DH)
        vh = v.reshape(nk, H, DH).transpose(1, 0, 2).astype(bf16)   # (H, nk, DH)

        # sim[h, i, j] = q[h, i, :] . k[h, j, :]   (scale already folded into q)
        sim = jax.lax.dot_general(
            qh, kh, (((2,), (2,)), ((0,), (0,))),
            preferred_element_type=f32)                              # (H, nq, nk)
        sim = sim - jnp.max(sim, axis=-1, keepdims=True)
        p = jnp.exp(sim)
        denom = jnp.sum(p, axis=-1, keepdims=True)
        attnw = p * pl.reciprocal(denom, approx=True)                # softmax, f32

        out = jax.lax.dot_general(
            attnw.astype(bf16), vh, (((2,), (1,)), ((0,), (0,))),
            preferred_element_type=f32)                              # (H, nq, DH)
        out = out.transpose(1, 0, 2).reshape(nq, H * DH)             # (nq, H*DH)
        return jnp.dot(out.astype(bf16), wo, preferred_element_type=f32) + bo

    # ---- x = attn1(norm1(x)) + x  (self-attention) ----
    n1 = _layer_norm(x, g1, be1).astype(bf16)
    x = attention(n1, n1, wq1, wk1, wv1, wo1, bo1) + x

    # ---- x = attn2(norm2(x), context) + x  (cross-attention) ----
    n2 = _layer_norm(x, g2, be2).astype(bf16)
    x = attention(n2, ctx, wq2, wk2, wv2, wo2, bo2) + x

    # ---- x = ff(norm3(x)) + x  (GEGLU feed-forward, split projection) ----
    n3 = _layer_norm(x, g3, be3).astype(bf16)
    a = jnp.dot(n3, w1a, preferred_element_type=f32) + b1a           # (N, FF)
    gate = jnp.dot(n3, w1b, preferred_element_type=f32) + b1b        # (N, FF)
    hidden = (a * jax.nn.gelu(gate, approximate=True)).astype(bf16)
    ff_out = jnp.dot(hidden, w2, preferred_element_type=f32) + b2

    o_ref[0] = (ff_out + x).astype(o_ref.dtype)


# -----------------------------------------------------------------------------
# Wrapper
# -----------------------------------------------------------------------------
_PARAM_ORDER = (
    "g1", "be1", "wq1", "wk1", "wv1", "wo1", "bo1",
    "g2", "be2", "wq2", "wk2", "wv2", "wo2", "bo2",
    "g3", "be3", "w1a", "b1a", "w1b", "b1b", "w2", "b2",
)
_BF16_WEIGHTS = frozenset(
    {"wq1", "wk1", "wv1", "wo1", "wq2", "wk2", "wv2", "wo2", "w1a", "w1b", "w2"}
)


def basic_transformer_block(x, context, params, *, n_heads, d_head):
    """x: (B, N, dim) f32, context: (B, M, context_dim) f32."""
    B, N, D = x.shape
    Bc, M, Dc = context.shape
    assert Bc == B
    inner = n_heads * d_head
    ff_inner = 4 * D

    # weights -> bf16 (full MXU rate, half the VMEM); gammas/betas/biases stay f32
    flat = [
        params[name].astype(jnp.bfloat16 if name in _BF16_WEIGHTS else jnp.float32)
        for name in _PARAM_ORDER
    ]

    kernel = functools.partial(
        basic_transformer_block_kernel, H=n_heads, DH=d_head)

    weight_spec = pl.BlockSpec(memory_space=pltpu.MemorySpace.VMEM)
    in_specs = [
        pl.BlockSpec((1, N, D), lambda b: (b, 0, 0)),     # x, one batch per step
        pl.BlockSpec((1, M, Dc), lambda b: (b, 0, 0)),    # context
    ] + [weight_spec] * len(flat)
    out_spec = pl.BlockSpec((1, N, D), lambda b: (b, 0, 0))

    # advisory cost estimate so XLA can overlap neighbouring ops
    flops = int(2 * B * (
        3 * N * D * inner            # attn1 q/k/v
        + 2 * N * N * inner          # attn1 sim + attn*v
        + N * inner * D              # attn1 out proj
        + N * D * inner              # attn2 q
        + 2 * M * Dc * inner         # attn2 k/v
        + 2 * N * M * inner          # attn2 sim + attn*v
        + N * inner * D              # attn2 out proj
        + 3 * N * D * ff_inner))     # GEGLU (2 proj) + out proj
    transcendentals = int(B * (n_heads * N * (N + M) + N * ff_inner + 3 * N))
    bytes_accessed = int(
        x.size * x.dtype.itemsize
        + context.size * context.dtype.itemsize
        + x.size * 4                                   # output
        + sum(int(w.size) * w.dtype.itemsize for w in flat))

    out = pl.pallas_call(
        kernel,
        out_shape=jax.ShapeDtypeStruct((B, N, D), jnp.float32),
        grid=(B,),
        in_specs=in_specs,
        out_specs=out_spec,
        compiler_params=pltpu.CompilerParams(
            dimension_semantics=("parallel",),          # 2nd TC on v7x for free
            vmem_limit_bytes=64 * 1024 * 1024,
        ),
        cost_estimate=pl.CostEstimate(
            flops=flops,
            transcendentals=transcendentals,
            bytes_accessed=bytes_accessed),
    )(x, context, *flat)
    return out


# -----------------------------------------------------------------------------
# Pure-JAX reference (mirrors the PyTorch math, f32) for a sanity check
# -----------------------------------------------------------------------------
def reference_block(x, ctx, p, *, n_heads, d_head):
    def ln(v, g, b):
        mu = jnp.mean(v, -1, keepdims=True)
        var = jnp.mean((v - mu) ** 2, -1, keepdims=True)
        return (v - mu) * jax.lax.rsqrt(var + 1e-5) * g + b

    def attn(xq, xc, wq, wk, wv, wo, bo):
        B, Nq, _ = xq.shape
        Nk = xc.shape[1]
        q = xq @ wq
        k = xc @ wk
        v = xc @ wv

        def split(t, n):
            return t.reshape(B, n, n_heads, d_head).transpose(0, 2, 1, 3)

        qh, kh, vh = split(q, Nq), split(k, Nk), split(v, Nk)
        sim = jnp.einsum("bhid,bhjd->bhij", qh, kh) * (d_head ** -0.5)
        a = jax.nn.softmax(sim, axis=-1)
        o = jnp.einsum("bhij,bhjd->bhid", a, vh)
        o = o.transpose(0, 2, 1, 3).reshape(B, Nq, n_heads * d_head)
        return o @ wo + bo

    n1 = ln(x, p["g1"], p["be1"])
    x = attn(n1, n1, p["wq1"], p["wk1"], p["wv1"], p["wo1"], p["bo1"]) + x
    n2 = ln(x, p["g2"], p["be2"])
    x = attn(n2, ctx, p["wq2"], p["wk2"], p["wv2"], p["wo2"], p["bo2"]) + x
    n3 = ln(x, p["g3"], p["be3"])
    a = n3 @ p["w1a"] + p["b1a"]
    gate = n3 @ p["w1b"] + p["b1b"]
    x = (a * jax.nn.gelu(gate, approximate=True)) @ p["w2"] + p["b2"] + x
    return x


# -----------------------------------------------------------------------------
# Deterministic parameter construction + run
# -----------------------------------------------------------------------------
def make_params(key, dim, context_dim, n_heads, d_head):
    inner = n_heads * d_head
    ff_inner = 4 * dim
    keys = jax.random.split(key, 11)
    nrm = lambda k, shape: (0.02 * jax.random.normal(k, shape)).astype(jnp.float32)
    ones = lambda n: jnp.ones((1, n), jnp.float32)
    zeros = lambda n: jnp.zeros((1, n), jnp.float32)
    return {
        # norm1 / attn1 (self)
        "g1": ones(dim), "be1": zeros(dim),
        "wq1": nrm(keys[0], (dim, inner)),
        "wk1": nrm(keys[1], (dim, inner)),
        "wv1": nrm(keys[2], (dim, inner)),
        "wo1": nrm(keys[3], (inner, dim)), "bo1": zeros(dim),
        # norm2 / attn2 (cross)
        "g2": ones(dim), "be2": zeros(dim),
        "wq2": nrm(keys[4], (dim, inner)),
        "wk2": nrm(keys[5], (context_dim, inner)),
        "wv2": nrm(keys[6], (context_dim, inner)),
        "wo2": nrm(keys[7], (inner, dim)), "bo2": zeros(dim),
        # norm3 / GEGLU feed-forward (w1 pre-split into value / gate halves)
        "g3": ones(dim), "be3": zeros(dim),
        "w1a": nrm(keys[8], (dim, ff_inner)), "b1a": zeros(ff_inner),
        "w1b": nrm(keys[9], (dim, ff_inner)), "b1b": zeros(ff_inner),
        "w2": nrm(keys[10], (ff_inner, dim)), "b2": zeros(dim),
    }


if __name__ == "__main__":
    # Small but lane/sublane-friendly shapes: D = inner = 128 (full lane tile),
    # N/M multiples of 8 (full sublane tile) -> unmasked vst on the output.
    B, N, M = 2, 16, 16
    dim, n_heads, d_head = 128, 4, 32
    context_dim = 64

    key = jax.random.PRNGKey(0)
    kx, kc, kp = jax.random.split(key, 3)
    x = jax.random.normal(kx, (B, N, dim), jnp.float32)
    context = jax.random.normal(kc, (B, M, context_dim), jnp.float32)
    params = make_params(kp, dim, context_dim, n_heads, d_head)

    out = basic_transformer_block(x, context, params,
                                  n_heads=n_heads, d_head=d_head)
    out = jax.block_until_ready(out)

    ref = reference_block(x, context, params, n_heads=n_heads, d_head=d_head)
    assert out.shape == (B, N, dim)
    # bf16 matmul operands + approx reciprocal -> compare against the f32
    # reference with a correspondingly relaxed (but still tight) tolerance.
    np.testing.assert_allclose(np.asarray(out), np.asarray(ref),
                               rtol=2e-2, atol=2e-2)
    print("KERNEL_OK")
</pallas_src>

<mosaic_0001>
module attributes {stable_mosaic.version = 11 : i64} {
  func.func @basic_transformer_block_kernel(%arg0: i32, %arg1: memref<1x16x128xf32, #tpu.memory_space<vmem>>, %arg2: memref<1x16x64xf32, #tpu.memory_space<vmem>>, %arg3: memref<1x128xf32, #tpu.memory_space<vmem>>, %arg4: memref<1x128xf32, #tpu.memory_space<vmem>>, %arg5: memref<128x128xbf16, #tpu.memory_space<vmem>>, %arg6: memref<128x128xbf16, #tpu.memory_space<vmem>>, %arg7: memref<128x128xbf16, #tpu.memory_space<vmem>>, %arg8: memref<128x128xbf16, #tpu.memory_space<vmem>>, %arg9: memref<1x128xf32, #tpu.memory_space<vmem>>, %arg10: memref<1x128xf32, #tpu.memory_space<vmem>>, %arg11: memref<1x128xf32, #tpu.memory_space<vmem>>, %arg12: memref<128x128xbf16, #tpu.memory_space<vmem>>, %arg13: memref<64x128xbf16, #tpu.memory_space<vmem>>, %arg14: memref<64x128xbf16, #tpu.memory_space<vmem>>, %arg15: memref<128x128xbf16, #tpu.memory_space<vmem>>, %arg16: memref<1x128xf32, #tpu.memory_space<vmem>>, %arg17: memref<1x128xf32, #tpu.memory_space<vmem>>, %arg18: memref<1x128xf32, #tpu.memory_space<vmem>>, %arg19: memref<128x512xbf16, #tpu.memory_space<vmem>>, %arg20: memref<1x512xf32, #tpu.memory_space<vmem>>, %arg21: memref<128x512xbf16, #tpu.memory_space<vmem>>, %arg22: memref<1x512xf32, #tpu.memory_space<vmem>>, %arg23: memref<512x128xbf16, #tpu.memory_space<vmem>>, %arg24: memref<1x128xf32, #tpu.memory_space<vmem>>, %arg25: memref<1x16x128xf32, #tpu.memory_space<vmem>>) attributes {dimension_semantics = [#tpu.dimension_semantics<parallel>], iteration_bounds = array<i64: 2>, scalar_prefetch = 0 : i64, scratch_operands = 0 : i64, tpu.core_type = #tpu.core_type<tc>, window_params = [{transform_indices = @transform_0, window_bounds = array<i64: 1, 16, 128>}, {transform_indices = @transform_1, window_bounds = array<i64: 1, 16, 64>}, {pipeline_mode = #tpu.pipeline_mode<synchronous>, transform_indices = @transform_2, window_bounds = array<i64: 1, 128>}, {pipeline_mode = #tpu.pipeline_mode<synchronous>, transform_indices = @transform_3, window_bounds = array<i64: 1, 128>}, {pipeline_mode = #tpu.pipeline_mode<synchronous>, transform_indices = @transform_4, window_bounds = array<i64: 128, 128>}, {pipeline_mode = #tpu.pipeline_mode<synchronous>, transform_indices = @transform_5, window_bounds = array<i64: 128, 128>}, {pipeline_mode = #tpu.pipeline_mode<synchronous>, transform_indices = @transform_6, window_bounds = array<i64: 128, 128>}, {pipeline_mode = #tpu.pipeline_mode<synchronous>, transform_indices = @transform_7, window_bounds = array<i64: 128, 128>}, {pipeline_mode = #tpu.pipeline_mode<synchronous>, transform_indices = @transform_8, window_bounds = array<i64: 1, 128>}, {pipeline_mode = #tpu.pipeline_mode<synchronous>, transform_indices = @transform_9, window_bounds = array<i64: 1, 128>}, {pipeline_mode = #tpu.pipeline_mode<synchronous>, transform_indices = @transform_10, window_bounds = array<i64: 1, 128>}, {pipeline_mode = #tpu.pipeline_mode<synchronous>, transform_indices = @transform_11, window_bounds = array<i64: 128, 128>}, {pipeline_mode = #tpu.pipeline_mode<synchronous>, transform_indices = @transform_12, window_bounds = array<i64: 64, 128>}, {pipeline_mode = #tpu.pipeline_mode<synchronous>, transform_indices = @transform_13, window_bounds = array<i64: 64, 128>}, {pipeline_mode = #tpu.pipeline_mode<synchronous>, transform_indices = @transform_14, window_bounds = array<i64: 128, 128>}, {pipeline_mode = #tpu.pipeline_mode<synchronous>, transform_indices = @transform_15, window_bounds = array<i64: 1, 128>}, {pipeline_mode = #tpu.pipeline_mode<synchronous>, transform_indices = @transform_16, window_bounds = array<i64: 1, 128>}, {pipeline_mode = #tpu.pipeline_mode<synchronous>, transform_indices = @transform_17, window_bounds = array<i64: 1, 128>}, {pipeline_mode = #tpu.pipeline_mode<synchronous>, transform_indices = @transform_18, window_bounds = array<i64: 128, 512>}, {pipeline_mode = #tpu.pipeline_mode<synchronous>, transform_indices = @transform_19, window_bounds = array<i64: 1, 512>}, {pipeline_mode = #tpu.pipeline_mode<synchronous>, transform_indices = @transform_20, window_bounds = array<i64: 128, 512>}, {pipeline_mode = #tpu.pipeline_mode<synchronous>, transform_indices = @transform_21, window_bounds = array<i64: 1, 512>}, {pipeline_mode = #tpu.pipeline_mode<synchronous>, transform_indices = @transform_22, window_bounds = array<i64: 512, 128>}, {pipeline_mode = #tpu.pipeline_mode<synchronous>, transform_indices = @transform_23, window_bounds = array<i64: 1, 128>}, {transform_indices = @transform_24, window_bounds = array<i64: 1, 16, 128>}]} {
    %c0 = arith.constant 0 : index
    %c0_0 = arith.constant 0 : index
    %c0_1 = arith.constant 0 : index
    %0 = vector.load %arg1[%c0, %c0_0, %c0_1] : memref<1x16x128xf32, #tpu.memory_space<vmem>>, vector<1x16x128xf32>
    %1 = vector.shape_cast %0 : vector<1x16x128xf32> to vector<16x128xf32>
    %c0_2 = arith.constant 0 : index
    %c0_3 = arith.constant 0 : index
    %c0_4 = arith.constant 0 : index
    %2 = vector.load %arg2[%c0_2, %c0_3, %c0_4] : memref<1x16x64xf32, #tpu.memory_space<vmem>>, vector<1x16x64xf32>
    %3 = vector.shape_cast %2 : vector<1x16x64xf32> to vector<16x64xf32>
    %4 = arith.truncf %3 : vector<16x64xf32> to vector<16x64xbf16>
    %c0_5 = arith.constant 0 : index
    %c0_6 = arith.constant 0 : index
    %5 = vector.load %arg3[%c0_5, %c0_6] : memref<1x128xf32, #tpu.memory_space<vmem>>, vector<1x128xf32>
    %c0_7 = arith.constant 0 : index
    %c0_8 = arith.constant 0 : index
    %6 = vector.load %arg4[%c0_7, %c0_8] : memref<1x128xf32, #tpu.memory_space<vmem>>, vector<1x128xf32>
    %c0_9 = arith.constant 0 : index
    %c0_10 = arith.constant 0 : index
    %7 = vector.load %arg10[%c0_9, %c0_10] : memref<1x128xf32, #tpu.memory_space<vmem>>, vector<1x128xf32>
    %c0_11 = arith.constant 0 : index
    %c0_12 = arith.constant 0 : index
    %8 = vector.load %arg11[%c0_11, %c0_12] : memref<1x128xf32, #tpu.memory_space<vmem>>, vector<1x128xf32>
    %c0_13 = arith.constant 0 : index
    %c0_14 = arith.constant 0 : index
    %9 = vector.load %arg17[%c0_13, %c0_14] : memref<1x128xf32, #tpu.memory_space<vmem>>, vector<1x128xf32>
    %c0_15 = arith.constant 0 : index
    %c0_16 = arith.constant 0 : index
    %10 = vector.load %arg18[%c0_15, %c0_16] : memref<1x128xf32, #tpu.memory_space<vmem>>, vector<1x128xf32>
    %c0_17 = arith.constant 0 : index
    %c0_18 = arith.constant 0 : index
    %11 = vector.load %arg5[%c0_17, %c0_18] : memref<128x128xbf16, #tpu.memory_space<vmem>>, vector<128x128xbf16>
    %c0_19 = arith.constant 0 : index
    %c0_20 = arith.constant 0 : index
    %12 = vector.load %arg6[%c0_19, %c0_20] : memref<128x128xbf16, #tpu.memory_space<vmem>>, vector<128x128xbf16>
    %c0_21 = arith.constant 0 : index
    %c0_22 = arith.constant 0 : index
    %13 = vector.load %arg7[%c0_21, %c0_22] : memref<128x128xbf16, #tpu.memory_space<vmem>>, vector<128x128xbf16>
    %c0_23 = arith.constant 0 : index
    %c0_24 = arith.constant 0 : index
    %14 = vector.load %arg8[%c0_23, %c0_24] : memref<128x128xbf16, #tpu.memory_space<vmem>>, vector<128x128xbf16>
    %c0_25 = arith.constant 0 : index
    %c0_26 = arith.constant 0 : index
    %15 = vector.load %arg9[%c0_25, %c0_26] : memref<1x128xf32, #tpu.memory_space<vmem>>, vector<1x128xf32>
    %c0_27 = arith.constant 0 : index
    %c0_28 = arith.constant 0 : index
    %16 = vector.load %arg12[%c0_27, %c0_28] : memref<128x128xbf16, #tpu.memory_space<vmem>>, vector<128x128xbf16>
    %c0_29 = arith.constant 0 : index
    %c0_30 = arith.constant 0 : index
    %17 = vector.load %arg13[%c0_29, %c0_30] : memref<64x128xbf16, #tpu.memory_space<vmem>>, vector<64x128xbf16>
    %c0_31 = arith.constant 0 : index
    %c0_32 = arith.constant 0 : index
    %18 = vector.load %arg14[%c0_31, %c0_32] : memref<64x128xbf16, #tpu.memory_space<vmem>>, vector<64x128xbf16>
    %c0_33 = arith.constant 0 : index
    %c0_34 = arith.constant 0 : index
    %19 = vector.load %arg15[%c0_33, %c0_34] : memref<128x128xbf16, #tpu.memory_space<vmem>>, vector<128x128xbf16>
    %c0_35 = arith.constant 0 : index
    %c0_36 = arith.constant 0 : index
    %20 = vector.load %arg16[%c0_35, %c0_36] : memref<1x128xf32, #tpu.memory_space<vmem>>, vector<1x128xf32>
    %c0_37 = arith.constant 0 : index
    %c0_38 = arith.constant 0 : index
    %21 = vector.load %arg19[%c0_37, %c0_38] : memref<128x512xbf16, #tpu.memory_space<vmem>>, vector<128x512xbf16>
    %c0_39 = arith.constant 0 : index
    %c0_40 = arith.constant 0 : index
    %22 = vector.load %arg20[%c0_39, %c0_40] : memref<1x512xf32, #tpu.memory_space<vmem>>, vector<1x512xf32>
    %c0_41 = arith.constant 0 : index
    %c0_42 = arith.constant 0 : index
    %23 = vector.load %arg21[%c0_41, %c0_42] : memref<128x512xbf16, #tpu.memory_space<vmem>>, vector<128x512xbf16>
    %c0_43 = arith.constant 0 : index
    %c0_44 = arith.constant 0 : index
    %24 = vector.load %arg22[%c0_43, %c0_44] : memref<1x512xf32, #tpu.memory_space<vmem>>, vector<1x512xf32>
    %c0_45 = arith.constant 0 : index
    %c0_46 = arith.constant 0 : index
    %25 = vector.load %arg23[%c0_45, %c0_46] : memref<512x128xbf16, #tpu.memory_space<vmem>>, vector<512x128xbf16>
    %c0_47 = arith.constant 0 : index
    %c0_48 = arith.constant 0 : index
    %26 = vector.load %arg24[%c0_47, %c0_48] : memref<1x128xf32, #tpu.memory_space<vmem>>, vector<1x128xf32>
    %cst = arith.constant dense<0.000000e+00> : vector<16xf32>
    %27 = vector.multi_reduction <add>, %1, %cst [1] : vector<16x128xf32> to vector<16xf32>
    %28 = vector.shape_cast %27 : vector<16xf32> to vector<16x1xf32>
    %cst_49 = arith.constant 1.280000e+02 : f32
    %29 = vector.broadcast %cst_49 : f32 to vector<16x1xf32>
    %30 = arith.divf %28, %29 : vector<16x1xf32>
    %31 = vector.broadcast %30 : vector<16x1xf32> to vector<16x128xf32>
    %32 = arith.subf %1, %31 : vector<16x128xf32>
    %33 = arith.mulf %32, %32 : vector<16x128xf32>
    %cst_50 = arith.constant dense<0.000000e+00> : vector<16xf32>
    %34 = vector.multi_reduction <add>, %33, %cst_50 [1] : vector<16x128xf32> to vector<16xf32>
    %35 = vector.shape_cast %34 : vector<16xf32> to vector<16x1xf32>
    %cst_51 = arith.constant 1.280000e+02 : f32
    %36 = vector.broadcast %cst_51 : f32 to vector<16x1xf32>
    %37 = arith.divf %35, %36 : vector<16x1xf32>
    %cst_52 = arith.constant 9.99999974E-6 : f32
    %38 = vector.broadcast %cst_52 : f32 to vector<16x1xf32>
    %39 = arith.addf %37, %38 : vector<16x1xf32>
    %40 = math.rsqrt %39 : vector<16x1xf32>
    %41 = vector.broadcast %40 : vector<16x1xf32> to vector<16x128xf32>
    %42 = arith.mulf %32, %41 : vector<16x128xf32>
    %43 = vector.broadcast %5 : vector<1x128xf32> to vector<16x128xf32>
    %44 = arith.mulf %42, %43 : vector<16x128xf32>
    %45 = vector.broadcast %6 : vector<1x128xf32> to vector<16x128xf32>
    %46 = arith.addf %44, %45 : vector<16x128xf32>
    %47 = arith.truncf %46 : vector<16x128xf32> to vector<16x128xbf16>
    %cst_53 = arith.constant dense<0.000000e+00> : vector<16x128xf32>
    %48 = tpu.matmul %47, %11, %cst_53 {dimension_numbers = #tpu.dot_dimension_numbers<[1], [0], [0], [1], [0, 0, 1, 1], [], []>} : vector<16x128xbf16>, vector<128x128xbf16>, vector<16x128xf32> -> vector<16x128xf32>
    %cst_54 = arith.constant 0.176776692 : f32
    %49 = vector.broadcast %cst_54 : f32 to vector<16x128xf32>
    %50 = arith.mulf %48, %49 : vector<16x128xf32>
    %cst_55 = arith.constant dense<0.000000e+00> : vector<16x128xf32>
    %51 = tpu.matmul %47, %12, %cst_55 {dimension_numbers = #tpu.dot_dimension_numbers<[1], [0], [0], [1], [0, 0, 1, 1], [], []>} : vector<16x128xbf16>, vector<128x128xbf16>, vector<16x128xf32> -> vector<16x128xf32>
    %cst_56 = arith.constant dense<0.000000e+00> : vector<16x128xf32>
    %52 = tpu.matmul %47, %13, %cst_56 {dimension_numbers = #tpu.dot_dimension_numbers<[1], [0], [0], [1], [0, 0, 1, 1], [], []>} : vector<16x128xbf16>, vector<128x128xbf16>, vector<16x128xf32> -> vector<16x128xf32>
    %53 = vector.shape_cast %50 : vector<16x128xf32> to vector<16x4x32xf32>
    %54 = tpu.transpose %53, [1, 0, 2] : vector<16x4x32xf32> -> vector<4x16x32xf32>
    %55 = arith.truncf %54 : vector<4x16x32xf32> to vector<4x16x32xbf16>
    %56 = vector.shape_cast %51 : vector<16x128xf32> to vector<16x4x32xf32>
    %57 = tpu.transpose %56, [1, 0, 2] : vector<16x4x32xf32> -> vector<4x16x32xf32>
    %58 = arith.truncf %57 : vector<4x16x32xf32> to vector<4x16x32xbf16>
    %59 = vector.shape_cast %52 : vector<16x128xf32> to vector<16x4x32xf32>
    %60 = tpu.transpose %59, [1, 0, 2] : vector<16x4x32xf32> -> vector<4x16x32xf32>
    %61 = arith.truncf %60 : vector<4x16x32xf32> to vector<4x16x32xbf16>
    %cst_57 = arith.constant dense<0.000000e+00> : vector<4x16x16xf32>
    %62 = tpu.matmul %55, %58, %cst_57 {dimension_numbers = #tpu.dot_dimension_numbers<[2], [2], [1], [1], [0, 0, 0, 1, 1, 1], [0], [0]>} : vector<4x16x32xbf16>, vector<4x16x32xbf16>, vector<4x16x16xf32> -> vector<4x16x16xf32>
    %cst_58 = arith.constant dense<0xFF800000> : vector<4x16xf32>
    %63 = vector.multi_reduction <maximumf>, %62, %cst_58 [2] : vector<4x16x16xf32> to vector<4x16xf32>
    %64 = vector.shape_cast %63 : vector<4x16xf32> to vector<4x16x1xf32>
    %65 = vector.broadcast %64 : vector<4x16x1xf32> to vector<4x16x16xf32>
    %66 = arith.subf %62, %65 : vector<4x16x16xf32>
    %67 = math.exp %66 : vector<4x16x16xf32>
    %cst_59 = arith.constant dense<0.000000e+00> : vector<4x16xf32>
    %68 = vector.multi_reduction <add>, %67, %cst_59 [2] : vector<4x16x16xf32> to vector<4x16xf32>
    %69 = vector.shape_cast %68 : vector<4x16xf32> to vector<4x16x1xf32>
    %70 = tpu.reciprocal %69 {approx = true} : vector<4x16x1xf32> -> vector<4x16x1xf32>
    %71 = vector.broadcast %70 : vector<4x16x1xf32> to vector<4x16x16xf32>
    %72 = arith.mulf %67, %71 : vector<4x16x16xf32>
    %73 = arith.truncf %72 : vector<4x16x16xf32> to vector<4x16x16xbf16>
    %cst_60 = arith.constant dense<0.000000e+00> : vector<4x16x32xf32>
    %74 = tpu.matmul %73, %61, %cst_60 {dimension_numbers = #tpu.dot_dimension_numbers<[2], [1], [1], [2], [0, 0, 0, 1, 1, 2], [0], [0]>} : vector<4x16x16xbf16>, vector<4x16x32xbf16>, vector<4x16x32xf32> -> vector<4x16x32xf32>
    %75 = tpu.transpose %74, [1, 0, 2] : vector<4x16x32xf32> -> vector<16x4x32xf32>
    %76 = vector.shape_cast %75 : vector<16x4x32xf32> to vector<16x128xf32>
    %77 = arith.truncf %76 : vector<16x128xf32> to vector<16x128xbf16>
    %cst_61 = arith.constant dense<0.000000e+00> : vector<16x128xf32>
    %78 = tpu.matmul %77, %14, %cst_61 {dimension_numbers = #tpu.dot_dimension_numbers<[1], [0], [0], [1], [0, 0, 1, 1], [], []>} : vector<16x128xbf16>, vector<128x128xbf16>, vector<16x128xf32> -> vector<16x128xf32>
    %79 = vector.broadcast %15 : vector<1x128xf32> to vector<16x128xf32>
    %80 = arith.addf %78, %79 : vector<16x128xf32>
    %81 = arith.addf %80, %1 : vector<16x128xf32>
    %cst_62 = arith.constant dense<0.000000e+00> : vector<16xf32>
    %82 = vector.multi_reduction <add>, %81, %cst_62 [1] : vector<16x128xf32> to vector<16xf32>
    %83 = vector.shape_cast %82 : vector<16xf32> to vector<16x1xf32>
    %cst_63 = arith.constant 1.280000e+02 : f32
    %84 = vector.broadcast %cst_63 : f32 to vector<16x1xf32>
    %85 = arith.divf %83, %84 : vector<16x1xf32>
    %86 = vector.broadcast %85 : vector<16x1xf32> to vector<16x128xf32>
    %87 = arith.subf %81, %86 : vector<16x128xf32>
    %88 = arith.mulf %87, %87 : vector<16x128xf32>
    %cst_64 = arith.constant dense<0.000000e+00> : vector<16xf32>
    %89 = vector.multi_reduction <add>, %88, %cst_64 [1] : vector<16x128xf32> to vector<16xf32>
    %90 = vector.shape_cast %89 : vector<16xf32> to vector<16x1xf32>
    %cst_65 = arith.constant 1.280000e+02 : f32
    %91 = vector.broadcast %cst_65 : f32 to vector<16x1xf32>
    %92 = arith.divf %90, %91 : vector<16x1xf32>
    %cst_66 = arith.constant 9.99999974E-6 : f32
    %93 = vector.broadcast %cst_66 : f32 to vector<16x1xf32>
    %94 = arith.addf %92, %93 : vector<16x1xf32>
    %95 = math.rsqrt %94 : vector<16x1xf32>
    %96 = vector.broadcast %95 : vector<16x1xf32> to vector<16x128xf32>
    %97 = arith.mulf %87, %96 : vector<16x128xf32>
    %98 = vector.broadcast %7 : vector<1x128xf32> to vector<16x128xf32>
    %99 = arith.mulf %97, %98 : vector<16x128xf32>
    %100 = vector.broadcast %8 : vector<1x128xf32> to vector<16x128xf32>
    %101 = arith.addf %99, %100 : vector<16x128xf32>
    %102 = arith.truncf %101 : vector<16x128xf32> to vector<16x128xbf16>
    %cst_67 = arith.constant dense<0.000000e+00> : vector<16x128xf32>
    %103 = tpu.matmul %102, %16, %cst_67 {dimension_numbers = #tpu.dot_dimension_numbers<[1], [0], [0], [1], [0, 0, 1, 1], [], []>} : vector<16x128xbf16>, vector<128x128xbf16>, vector<16x128xf32> -> vector<16x128xf32>
    %cst_68 = arith.constant 0.176776692 : f32
    %104 = vector.broadcast %cst_68 : f32 to vector<16x128xf32>
    %105 = arith.mulf %103, %104 : vector<16x128xf32>
    %cst_69 = arith.constant dense<0.000000e+00> : vector<16x128xf32>
    %106 = tpu.matmul %4, %17, %cst_69 {dimension_numbers = #tpu.dot_dimension_numbers<[1], [0], [0], [1], [0, 0, 1, 1], [], []>} : vector<16x64xbf16>, vector<64x128xbf16>, vector<16x128xf32> -> vector<16x128xf32>
    %cst_70 = arith.constant dense<0.000000e+00> : vector<16x128xf32>
    %107 = tpu.matmul %4, %18, %cst_70 {dimension_numbers = #tpu.dot_dimension_numbers<[1], [0], [0], [1], [0, 0, 1, 1], [], []>} : vector<16x64xbf16>, vector<64x128xbf16>, vector<16x128xf32> -> vector<16x128xf32>
    %108 = vector.shape_cast %105 : vector<16x128xf32> to vector<16x4x32xf32>
    %109 = tpu.transpose %108, [1, 0, 2] : vector<16x4x32xf32> -> vector<4x16x32xf32>
    %110 = arith.truncf %109 : vector<4x16x32xf32> to vector<4x16x32xbf16>
    %111 = vector.shape_cast %106 : vector<16x128xf32> to vector<16x4x32xf32>
    %112 = tpu.transpose %111, [1, 0, 2] : vector<16x4x32xf32> -> vector<4x16x32xf32>
    %113 = arith.truncf %112 : vector<4x16x32xf32> to vector<4x16x32xbf16>
    %114 = vector.shape_cast %107 : vector<16x128xf32> to vector<16x4x32xf32>
    %115 = tpu.transpose %114, [1, 0, 2] : vector<16x4x32xf32> -> vector<4x16x32xf32>
    %116 = arith.truncf %115 : vector<4x16x32xf32> to vector<4x16x32xbf16>
    %cst_71 = arith.constant dense<0.000000e+00> : vector<4x16x16xf32>
    %117 = tpu.matmul %110, %113, %cst_71 {dimension_numbers = #tpu.dot_dimension_numbers<[2], [2], [1], [1], [0, 0, 0, 1, 1, 1], [0], [0]>} : vector<4x16x32xbf16>, vector<4x16x32xbf16>, vector<4x16x16xf32> -> vector<4x16x16xf32>
    %cst_72 = arith.constant dense<0xFF800000> : vector<4x16xf32>
    %118 = vector.multi_reduction <maximumf>, %117, %cst_72 [2] : vector<4x16x16xf32> to vector<4x16xf32>
    %119 = vector.shape_cast %118 : vector<4x16xf32> to vector<4x16x1xf32>
    %120 = vector.broadcast %119 : vector<4x16x1xf32> to vector<4x16x16xf32>
    %121 = arith.subf %117, %120 : vector<4x16x16xf32>
    %122 = math.exp %121 : vector<4x16x16xf32>
    %cst_73 = arith.constant dense<0.000000e+00> : vector<4x16xf32>
    %123 = vector.multi_reduction <add>, %122, %cst_73 [2] : vector<4x16x16xf32> to vector<4x16xf32>
    %124 = vector.shape_cast %123 : vector<4x16xf32> to vector<4x16x1xf32>
    %125 = tpu.reciprocal %124 {approx = true} : vector<4x16x1xf32> -> vector<4x16x1xf32>
    %126 = vector.broadcast %125 : vector<4x16x1xf32> to vector<4x16x16xf32>
    %127 = arith.mulf %122, %126 : vector<4x16x16xf32>
    %128 = arith.truncf %127 : vector<4x16x16xf32> to vector<4x16x16xbf16>
    %cst_74 = arith.constant dense<0.000000e+00> : vector<4x16x32xf32>
    %129 = tpu.matmul %128, %116, %cst_74 {dimension_numbers = #tpu.dot_dimension_numbers<[2], [1], [1], [2], [0, 0, 0, 1, 1, 2], [0], [0]>} : vector<4x16x16xbf16>, vector<4x16x32xbf16>, vector<4x16x32xf32> -> vector<4x16x32xf32>
    %130 = tpu.transpose %129, [1, 0, 2] : vector<4x16x32xf32> -> vector<16x4x32xf32>
    %131 = vector.shape_cast %130 : vector<16x4x32xf32> to vector<16x128xf32>
    %132 = arith.truncf %131 : vector<16x128xf32> to vector<16x128xbf16>
    %cst_75 = arith.constant dense<0.000000e+00> : vector<16x128xf32>
    %133 = tpu.matmul %132, %19, %cst_75 {dimension_numbers = #tpu.dot_dimension_numbers<[1], [0], [0], [1], [0, 0, 1, 1], [], []>} : vector<16x128xbf16>, vector<128x128xbf16>, vector<16x128xf32> -> vector<16x128xf32>
    %134 = vector.broadcast %20 : vector<1x128xf32> to vector<16x128xf32>
    %135 = arith.addf %133, %134 : vector<16x128xf32>
    %136 = arith.addf %135, %81 : vector<16x128xf32>
    %cst_76 = arith.constant dense<0.000000e+00> : vector<16xf32>
    %137 = vector.multi_reduction <add>, %136, %cst_76 [1] : vector<16x128xf32> to vector<16xf32>
    %138 = vector.shape_cast %137 : vector<16xf32> to vector<16x1xf32>
    %cst_77 = arith.constant 1.280000e+02 : f32
    %139 = vector.broadcast %cst_77 : f32 to vector<16x1xf32>
    %140 = arith.divf %138, %139 : vector<16x1xf32>
    %141 = vector.broadcast %140 : vector<16x1xf32> to vector<16x128xf32>
    %142 = arith.subf %136, %141 : vector<16x128xf32>
    %143 = arith.mulf %142, %142 : vector<16x128xf32>
    %cst_78 = arith.constant dense<0.000000e+00> : vector<16xf32>
    %144 = vector.multi_reduction <add>, %143, %cst_78 [1] : vector<16x128xf32> to vector<16xf32>
    %145 = vector.shape_cast %144 : vector<16xf32> to vector<16x1xf32>
    %cst_79 = arith.constant 1.280000e+02 : f32
    %146 = vector.broadcast %cst_79 : f32 to vector<16x1xf32>
    %147 = arith.divf %145, %146 : vector<16x1xf32>
    %cst_80 = arith.constant 9.99999974E-6 : f32
    %148 = vector.broadcast %cst_80 : f32 to vector<16x1xf32>
    %149 = arith.addf %147, %148 : vector<16x1xf32>
    %150 = math.rsqrt %149 : vector<16x1xf32>
    %151 = vector.broadcast %150 : vector<16x1xf32> to vector<16x128xf32>
    %152 = arith.mulf %142, %151 : vector<16x128xf32>
    %153 = vector.broadcast %9 : vector<1x128xf32> to vector<16x128xf32>
    %154 = arith.mulf %152, %153 : vector<16x128xf32>
    %155 = vector.broadcast %10 : vector<1x128xf32> to vector<16x128xf32>
    %156 = arith.addf %154, %155 : vector<16x128xf32>
    %157 = arith.truncf %156 : vector<16x128xf32> to vector<16x128xbf16>
    %cst_81 = arith.constant dense<0.000000e+00> : vector<16x512xf32>
    %158 = tpu.matmul %157, %21, %cst_81 {dimension_numbers = #tpu.dot_dimension_numbers<[1], [0], [0], [1], [0, 0, 1, 1], [], []>} : vector<16x128xbf16>, vector<128x512xbf16>, vector<16x512xf32> -> vector<16x512xf32>
    %159 = vector.broadcast %22 : vector<1x512xf32> to vector<16x512xf32>
    %160 = arith.addf %158, %159 : vector<16x512xf32>
    %cst_82 = arith.constant dense<0.000000e+00> : vector<16x512xf32>
    %161 = tpu.matmul %157, %23, %cst_82 {dimension_numbers = #tpu.dot_dimension_numbers<[1], [0], [0], [1], [0, 0, 1, 1], [], []>} : vector<16x128xbf16>, vector<128x512xbf16>, vector<16x512xf32> -> vector<16x512xf32>
    %162 = vector.broadcast %24 : vector<1x512xf32> to vector<16x512xf32>
    %163 = arith.addf %161, %162 : vector<16x512xf32>
    %164 = arith.mulf %163, %163 : vector<16x512xf32>
    %165 = arith.mulf %163, %164 : vector<16x512xf32>
    %cst_83 = arith.constant 4.471500e-02 : f32
    %166 = vector.broadcast %cst_83 : f32 to vector<16x512xf32>
    %167 = arith.mulf %166, %165 : vector<16x512xf32>
    %168 = arith.addf %163, %167 : vector<16x512xf32>
    %cst_84 = arith.constant 0.797884583 : f32
    %169 = vector.broadcast %cst_84 : f32 to vector<16x512xf32>
    %170 = arith.mulf %169, %168 : vector<16x512xf32>
    %171 = math.tanh %170 : vector<16x512xf32>
    %cst_85 = arith.constant 1.000000e+00 : f32
    %172 = vector.broadcast %cst_85 : f32 to vector<16x512xf32>
    %173 = arith.addf %172, %171 : vector<16x512xf32>
    %cst_86 = arith.constant 5.000000e-01 : f32
    %174 = vector.broadcast %cst_86 : f32 to vector<16x512xf32>
    %175 = arith.mulf %174, %173 : vector<16x512xf32>
    %176 = arith.mulf %163, %175 : vector<16x512xf32>
    %177 = arith.mulf %160, %176 : vector<16x512xf32>
    %178 = arith.truncf %177 : vector<16x512xf32> to vector<16x512xbf16>
    %cst_87 = arith.constant dense<0.000000e+00> : vector<16x128xf32>
    %179 = tpu.matmul %178, %25, %cst_87 {dimension_numbers = #tpu.dot_dimension_numbers<[1], [0], [0], [1], [0, 0, 1, 1], [], []>} : vector<16x512xbf16>, vector<512x128xbf16>, vector<16x128xf32> -> vector<16x128xf32>
    %180 = vector.broadcast %26 : vector<1x128xf32> to vector<16x128xf32>
    %181 = arith.addf %179, %180 : vector<16x128xf32>
    %182 = arith.addf %181, %136 : vector<16x128xf32>
    %c0_88 = arith.constant 0 : index
    %c0_89 = arith.constant 0 : index
    %c0_90 = arith.constant 0 : index
    %183 = vector.load %arg25[%c0_88, %c0_89, %c0_90] : memref<1x16x128xf32, #tpu.memory_space<vmem>>, vector<1x16x128xf32>
    %184 = vector.shape_cast %183 : vector<1x16x128xf32> to vector<16x128xf32>
    %185 = vector.shape_cast %182 : vector<16x128xf32> to vector<1x16x128xf32>
    tpu.vector_store %arg25[%c0_88, %c0_89, %c0_90], %185 {strides = array<i32>} : memref<1x16x128xf32, #tpu.memory_space<vmem>>, vector<1x16x128xf32>,
    return
  }
  func.func @transform_0(%arg0: i32) -> (i32, i32, i32) {
    %c0_i32 = arith.constant 0 : i32
    %c0_i32_0 = arith.constant 0 : i32
    %c0_i32_1 = arith.constant 0 : i32
    return %arg0, %c0_i32, %c0_i32_0 : i32, i32, i32
  }
  func.func @transform_1(%arg0: i32) -> (i32, i32, i32) {
    %c0_i32 = arith.constant 0 : i32
    %c0_i32_0 = arith.constant 0 : i32
    %c0_i32_1 = arith.constant 0 : i32
    return %arg0, %c0_i32, %c0_i32_0 : i32, i32, i32
  }
  func.func @transform_2(%arg0: i32) -> (i32, i32) {
    %c0_i32 = arith.constant 0 : i32
    %c0_i32_0 = arith.constant 0 : i32
    %c0_i32_1 = arith.constant 0 : i32
    return %c0_i32, %c0_i32_0 : i32, i32
  }
  func.func @transform_3(%arg0: i32) -> (i32, i32) {
    %c0_i32 = arith.constant 0 : i32
    %c0_i32_0 = arith.constant 0 : i32
    %c0_i32_1 = arith.constant 0 : i32
    return %c0_i32, %c0_i32_0 : i32, i32
  }
  func.func @transform_4(%arg0: i32) -> (i32, i32) {
    %c0_i32 = arith.constant 0 : i32
    %c0_i32_0 = arith.constant 0 : i32
    %c0_i32_1 = arith.constant 0 : i32
    return %c0_i32, %c0_i32_0 : i32, i32
  }
  func.func @transform_5(%arg0: i32) -> (i32, i32) {
    %c0_i32 = arith.constant 0 : i32
    %c0_i32_0 = arith.constant 0 : i32
    %c0_i32_1 = arith.constant 0 : i32
    return %c0_i32, %c0_i32_0 : i32, i32
  }
  func.func @transform_6(%arg0: i32) -> (i32, i32) {
    %c0_i32 = arith.constant 0 : i32
    %c0_i32_0 = arith.constant 0 : i32
    %c0_i32_1 = arith.constant 0 : i32
    return %c0_i32, %c0_i32_0 : i32, i32
  }
  func.func @transform_7(%arg0: i32) -> (i32, i32) {
    %c0_i32 = arith.constant 0 : i32
    %c0_i32_0 = arith.constant 0 : i32
    %c0_i32_1 = arith.constant 0 : i32
    return %c0_i32, %c0_i32_0 : i32, i32
  }
  func.func @transform_8(%arg0: i32) -> (i32, i32) {
    %c0_i32 = arith.constant 0 : i32
    %c0_i32_0 = arith.constant 0 : i32
    %c0_i32_1 = arith.constant 0 : i32
    return %c0_i32, %c0_i32_0 : i32, i32
  }
  func.func @transform_9(%arg0: i32) -> (i32, i32) {
    %c0_i32 = arith.constant 0 : i32
    %c0_i32_0 = arith.constant 0 : i32
    %c0_i32_1 = arith.constant 0 : i32
    return %c0_i32, %c0_i32_0 : i32, i32
  }
  func.func @transform_10(%arg0: i32) -> (i32, i32) {
    %c0_i32 = arith.constant 0 : i32
    %c0_i32_0 = arith.constant 0 : i32
    %c0_i32_1 = arith.constant 0 : i32
    return %c0_i32, %c0_i32_0 : i32, i32
  }
  func.func @transform_11(%arg0: i32) -> (i32, i32) {
    %c0_i32 = arith.constant 0 : i32
    %c0_i32_0 = arith.constant 0 : i32
    %c0_i32_1 = arith.constant 0 : i32
    return %c0_i32, %c0_i32_0 : i32, i32
  }
  func.func @transform_12(%arg0: i32) -> (i32, i32) {
    %c0_i32 = arith.constant 0 : i32
    %c0_i32_0 = arith.constant 0 : i32
    %c0_i32_1 = arith.constant 0 : i32
    return %c0_i32, %c0_i32_0 : i32, i32
  }
  func.func @transform_13(%arg0: i32) -> (i32, i32) {
    %c0_i32 = arith.constant 0 : i32
    %c0_i32_0 = arith.constant 0 : i32
    %c0_i32_1 = arith.constant 0 : i32
    return %c0_i32, %c0_i32_0 : i32, i32
  }
  func.func @transform_14(%arg0: i32) -> (i32, i32) {
    %c0_i32 = arith.constant 0 : i32
    %c0_i32_0 = arith.constant 0 : i32
    %c0_i32_1 = arith.constant 0 : i32
    return %c0_i32, %c0_i32_0 : i32, i32
  }
  func.func @transform_15(%arg0: i32) -> (i32, i32) {
    %c0_i32 = arith.constant 0 : i32
    %c0_i32_0 = arith.constant 0 : i32
    %c0_i32_1 = arith.constant 0 : i32
    return %c0_i32, %c0_i32_0 : i32, i32
  }
  func.func @transform_16(%arg0: i32) -> (i32, i32) {
    %c0_i32 = arith.constant 0 : i32
    %c0_i32_0 = arith.constant 0 : i32
    %c0_i32_1 = arith.constant 0 : i32
    return %c0_i32, %c0_i32_0 : i32, i32
  }
  func.func @transform_17(%arg0: i32) -> (i32, i32) {
    %c0_i32 = arith.constant 0 : i32
    %c0_i32_0 = arith.constant 0 : i32
    %c0_i32_1 = arith.constant 0 : i32
    return %c0_i32, %c0_i32_0 : i32, i32
  }
  func.func @transform_18(%arg0: i32) -> (i32, i32) {
    %c0_i32 = arith.constant 0 : i32
    %c0_i32_0 = arith.constant 0 : i32
    %c0_i32_1 = arith.constant 0 : i32
    return %c0_i32, %c0_i32_0 : i32, i32
  }
  func.func @transform_19(%arg0: i32) -> (i32, i32) {
    %c0_i32 = arith.constant 0 : i32
    %c0_i32_0 = arith.constant 0 : i32
    %c0_i32_1 = arith.constant 0 : i32
    return %c0_i32, %c0_i32_0 : i32, i32
  }
  func.func @transform_20(%arg0: i32) -> (i32, i32) {
    %c0_i32 = arith.constant 0 : i32
    %c0_i32_0 = arith.constant 0 : i32
    %c0_i32_1 = arith.constant 0 : i32
    return %c0_i32, %c0_i32_0 : i32, i32
  }
  func.func @transform_21(%arg0: i32) -> (i32, i32) {
    %c0_i32 = arith.constant 0 : i32
    %c0_i32_0 = arith.constant 0 : i32
    %c0_i32_1 = arith.constant 0 : i32
    return %c0_i32, %c0_i32_0 : i32, i32
  }
  func.func @transform_22(%arg0: i32) -> (i32, i32) {
    %c0_i32 = arith.constant 0 : i32
    %c0_i32_0 = arith.constant 0 : i32
    %c0_i32_1 = arith.constant 0 : i32
    return %c0_i32, %c0_i32_0 : i32, i32
  }
  func.func @transform_23(%arg0: i32) -> (i32, i32) {
    %c0_i32 = arith.constant 0 : i32
    %c0_i32_0 = arith.constant 0 : i32
    %c0_i32_1 = arith.constant 0 : i32
    return %c0_i32, %c0_i32_0 : i32, i32
  }
  func.func @transform_24(%arg0: i32) -> (i32, i32, i32) {
    %c0_i32 = arith.constant 0 : i32
    %c0_i32_0 = arith.constant 0 : i32
    %c0_i32_1 = arith.constant 0 : i32
    return %arg0, %c0_i32, %c0_i32_0 : i32, i32, i32
  }
}

</mosaic_0001>

<llo_original>
// kernel: tpu_custom_call.1
$region0: #{tpu_custom_call.1}
  #allocation0 [shape = 'u32[]', space=smem, size = 0x4, offset = 0x4, fixed_abs, tag = 'smem constant byte address 0x4 - core index']
  #allocation1 [shape = 'u32[72,128]{1,0:T(1,128)}', space=vmem, size = 0x9000, scoped, tag = 'internal scratch']
  %s0 = inlined_call_operand.hbm [shape: f32[2,16,128], index: 0, kind: input, shape index: {}]
  %s1 = inlined_call_operand.hbm [shape: f32[2,16,64], index: 1, kind: input, shape index: {}]
  %s2 = inlined_call_operand.hbm [shape: f32[1,128], index: 2, kind: input, shape index: {}]
  %s3 = inlined_call_operand.hbm [shape: f32[1,128], index: 3, kind: input, shape index: {}]
  %s4 = inlined_call_operand.hbm [shape: bf16[128,128], index: 4, kind: input, shape index: {}]
  %s5 = inlined_call_operand.hbm [shape: bf16[128,128], index: 5, kind: input, shape index: {}]
  %s6 = inlined_call_operand.hbm [shape: bf16[128,128], index: 6, kind: input, shape index: {}]
  %s7 = inlined_call_operand.hbm [shape: bf16[128,128], index: 7, kind: input, shape index: {}]
  %s8 = inlined_call_operand.hbm [shape: f32[1,128], index: 8, kind: input, shape index: {}]
  %s9 = inlined_call_operand.hbm [shape: f32[1,128], index: 9, kind: input, shape index: {}]
  %s10 = inlined_call_operand.vmem [shape: f32[1,128], index: 10, kind: input, shape index: {}]
  %s11 = inlined_call_operand.hbm [shape: bf16[128,128], index: 11, kind: input, shape index: {}]
  %s12 = inlined_call_operand.hbm [shape: bf16[64,128], index: 12, kind: input, shape index: {}]
  %s13 = inlined_call_operand.hbm [shape: bf16[64,128], index: 13, kind: input, shape index: {}]
  %s14 = inlined_call_operand.hbm [shape: bf16[128,128], index: 14, kind: input, shape index: {}]
  %s15 = inlined_call_operand.vmem [shape: f32[1,128], index: 15, kind: input, shape index: {}]
  %s16 = inlined_call_operand.vmem [shape: f32[1,128], index: 16, kind: input, shape index: {}]
  %s17 = inlined_call_operand.vmem [shape: f32[1,128], index: 17, kind: input, shape index: {}]
  %s18 = inlined_call_operand.hbm [shape: bf16[128,512], index: 18, kind: input, shape index: {}]
  %s19 = inlined_call_operand.vmem [shape: f32[1,512], index: 19, kind: input, shape index: {}]
  %s20 = inlined_call_operand.hbm [shape: bf16[128,512], index: 20, kind: input, shape index: {}]
  %s21 = inlined_call_operand.vmem [shape: f32[1,512], index: 21, kind: input, shape index: {}]
  %s22 = inlined_call_operand.hbm [shape: bf16[512,128], index: 22, kind: input, shape index: {}]
  %s23 = inlined_call_operand.vmem [shape: f32[1,128], index: 23, kind: input, shape index: {}]
  %s24 = inlined_call_operand.hbm [shape: f32[2,16,128], index: 24, kind: output, shape index: {}]
  %s25 = sld [smem:[#allocation0]]
  $region197: #{tpu_custom_call.1} parent=0
    _
  %s27 = ssub.s32 1, %s25
  %s28 = scalar_select 0, %s27, %s25
  $region1: #{tpu_custom_call.1} parent=0
    #allocation2 [shape = 'u8[16384]{0}', space=vmem, size = 0x4000, scoped, tag = 'input window, operand 0']
    #allocation3 [shape = 's32[2]{0}', space=sflag, size = 0x8, scoped, tag = 'scoped memory for tpu_custom_call.1']
    #allocation4 [shape = 's32[2]{0}', space=sflag, size = 0x8, scoped, tag = 'scoped memory for tpu_custom_call.1']
    #allocation5 [shape = 'u8[16384]{0}', space=vmem, size = 0x4000, scoped, tag = 'input window, operand 1']
    #allocation6 [shape = 's32[2]{0}', space=sflag, size = 0x8, scoped, tag = 'scoped memory for tpu_custom_call.1']
    #allocation7 [shape = 'u8[512]{0}', space=vmem, size = 0x400, scoped, tag = 'input window, operand 2, single buffered']
    #allocation8 [shape = 'u8[512]{0}', space=vmem, size = 0x400, scoped, tag = 'input window, operand 3, single buffered']
    #allocation9 [shape = 's32[1]{0}', space=sflag, size = 0x4, scoped, tag = 'scoped memory for tpu_custom_call.1']
    #allocation10 [shape = 'u8[32768]{0}', space=vmem, size = 0x8000, scoped, tag = 'input window, operand 4, single buffered']
    #allocation11 [shape = 'u8[32768]{0}', space=vmem, size = 0x8000, scoped, tag = 'input window, operand 5, single buffered']
    #allocation12 [shape = 's32[1]{0}', space=sflag, size = 0x4, scoped, tag = 'scoped memory for tpu_custom_call.1']
    #allocation13 [shape = 'u8[32768]{0}', space=vmem, size = 0x8000, scoped, tag = 'input window, operand 6, single buffered']
    #allocation14 [shape = 'u8[32768]{0}', space=vmem, size = 0x8000, scoped, tag = 'input window, operand 7, single buffered']
    #allocation15 [shape = 's32[1]{0}', space=sflag, size = 0x4, scoped, tag = 'scoped memory for tpu_custom_call.1']
    #allocation16 [shape = 'u8[512]{0}', space=vmem, size = 0x400, scoped, tag = 'input window, operand 8, single buffered']
    #allocation17 [shape = 'u8[512]{0}', space=vmem, size = 0x400, scoped, tag = 'input window, operand 9, single buffered']
    #allocation18 [shape = 's32[1]{0}', space=sflag, size = 0x4, scoped, tag = 'scoped memory for tpu_custom_call.1']
    #allocation19 [shape = 'u8[32768]{0}', space=vmem, size = 0x8000, scoped, tag = 'input window, operand 11, single buffered']
    #allocation20 [shape = 'u8[16384]{0}', space=vmem, size = 0x4000, scoped, tag = 'input window, operand 12, single buffered']
    #allocation21 [shape = 's32[1]{0}', space=sflag, size = 0x4, scoped, tag = 'scoped memory for tpu_custom_call.1']
    #allocation22 [shape = 'u8[16384]{0}', space=vmem, size = 0x4000, scoped, tag = 'input window, operand 13, single buffered']
    #allocation23 [shape = 'u8[32768]{0}', space=vmem, size = 0x8000, scoped, tag = 'input window, operand 14, single buffered']
    #allocation24 [shape = 's32[1]{0}', space=sflag, size = 0x4, scoped, tag = 'scoped memory for tpu_custom_call.1']
    #allocation25 [shape = 'u8[131072]{0}', space=vmem, size = 0x20000, scoped, tag = 'input window, operand 18, single buffered']
    #allocation26 [shape = 'u8[131072]{0}', space=vmem, size = 0x20000, scoped, tag = 'input window, operand 20, single buffered']
    #allocation27 [shape = 's32[1]{0}', space=sflag, size = 0x4, scoped, tag = 'scoped memory for tpu_custom_call.1']
    #allocation28 [shape = 'u8[131072]{0}', space=vmem, size = 0x20000, scoped, tag = 'input window, operand 22, single buffered']
    #allocation29 [shape = 'u8[16384]{0}', space=vmem, size = 0x4000, scoped, tag = 'output window, operand 0']
    %29 = vsyncpa [#allocation3], 0
    %s30 = scalar_lea.sflag [#allocation3], 1
    %31 = vsyncpa %s30, 0
    %32 = vsyncpa [#allocation6], 0
    %s33 = scalar_lea.sflag [#allocation6], 1
    %34 = vsyncpa %s33, 0
    %35 = vsyncpa [#allocation9], 0
    %36 = vsyncpa [#allocation12], 0
    %37 = vsyncpa [#allocation15], 0
    %38 = vsyncpa [#allocation18], 0
    %39 = vsyncpa [#allocation21], 0
    %40 = vsyncpa [#allocation24], 0
    %41 = vsyncpa [#allocation27], 0
    %42 = vsyncpa [#allocation4], 0
    %s43 = scalar_lea.sflag [#allocation4], 1
    %44 = vsyncpa %s43, 0
    loop: start=0, step=1, limit=4
    $region2: #{tpu_custom_call.1} parent=1 // loop_pre_header
      _
    $region3: #{tpu_custom_call.1} parent=1 // loop_header
      %s46 = sphi 0, %s50
      %p47 = scmp.ge.s32.totalorder %s46, 4
      %s56 = sphi 0, %s58
      %s59 = sphi 0, %s56
      %s60 = sphi 0, %s59
      %s76 = sphi 0, %s60
      %s82 = sphi 0, %s84
      %s85 = sphi 0, %s82
      %s86 = sphi 0, %s85
      %s102 = sphi 0, %s86
      %s106 = sphi 0, %s106
      %s108 = sphi 0, %s106
      %s109 = sphi 0, %s108
      %s123 = sphi 0, %s109
      %s127 = sphi 0, %s127
      %s129 = sphi 0, %s127
      %s130 = sphi 0, %s129
      %s144 = sphi 0, %s130
      %s148 = sphi 0, %s148
      %s150 = sphi 0, %s148
      %s151 = sphi 0, %s150
      %s165 = sphi 0, %s151
      %s169 = sphi 0, %s169
      %s171 = sphi 0, %s169
      %s172 = sphi 0, %s171
      %s186 = sphi 0, %s172
      %s190 = sphi 0, %s190
      %s192 = sphi 0, %s190
      %s193 = sphi 0, %s192
      %s207 = sphi 0, %s193
      %s211 = sphi 0, %s211
      %s213 = sphi 0, %s211
      %s214 = sphi 0, %s213
      %s228 = sphi 0, %s214
      %s232 = sphi 0, %s232
      %s234 = sphi 0, %s232
      %s235 = sphi 0, %s234
      %s249 = sphi 0, %s235
      %s253 = sphi 0, %s253
      %s255 = sphi 0, %s253
      %s256 = sphi 0, %s255
      %s270 = sphi 0, %s256
      %s274 = sphi 0, %s274
      %s276 = sphi 0, %s274
      %s277 = sphi 0, %s276
      %s291 = sphi 0, %s277
      %s295 = sphi 0, %s295
      %s297 = sphi 0, %s295
      %s298 = sphi 0, %s297
      %s312 = sphi 0, %s298
      %s316 = sphi 0, %s316
      %s318 = sphi 0, %s316
      %s319 = sphi 0, %s318
      %s333 = sphi 0, %s319
      %s337 = sphi 0, %s337
      %s339 = sphi 0, %s337
      %s340 = sphi 0, %s339
      %s354 = sphi 0, %s340
      %s358 = sphi 0, %s358
      %s360 = sphi 0, %s358
      %s361 = sphi 0, %s360
      %s375 = sphi 0, %s361
      %s379 = sphi 0, %s379
      %s381 = sphi 0, %s379
      %s382 = sphi 0, %s381
      %s396 = sphi 0, %s382
      %s400 = sphi 0, %s400
      %s402 = sphi 0, %s400
      %s403 = sphi 0, %s402
      %s417 = sphi 0, %s403
      %s421 = sphi 0, %s421
      %s423 = sphi 0, %s421
      %s424 = sphi 0, %s423
      %s438 = sphi 0, %s424
      %s442 = sphi 0, %s442
      %s444 = sphi 0, %s442
      %s445 = sphi 0, %s444
      %s459 = sphi 0, %s445
      %s463 = sphi 0, %s463
      %s465 = sphi 0, %s463
      %s466 = sphi 0, %s465
      %s480 = sphi 0, %s466
      %s484 = sphi 0, %s484
      %s486 = sphi 0, %s484
      %s487 = sphi 0, %s486
      %s501 = sphi 0, %s487
      %s505 = sphi 0, %s505
      %s507 = sphi 0, %s505
      %s508 = sphi 0, %s507
      %s522 = sphi 0, %s508
      %s526 = sphi 0, %s526
      %s528 = sphi 0, %s526
      %s529 = sphi 0, %s528
      %s543 = sphi 0, %s529
      %s547 = sphi 0, %s547
      %s549 = sphi 0, %s547
      %s550 = sphi 0, %s549
      %s564 = sphi 0, %s550
      %s570 = sphi 0, %s572
      %s573 = sphi 0, %s570
      %s574 = sphi 0, %s573
      %s590 = sphi 0, %s574
    $region4: #{tpu_custom_call.1} parent=1 // loop_header_branch
      %49 = sbr.rel (%p47) target = $region8
    $region5: #{tpu_custom_call.1} parent=1 // loop_body
      %s51 = ssub.s32 %s46, 1
      %s52 = ssub.s32 %s46, 2
      %s53 = sadd.s32 %s46, 1
      %s54 = ssub.s32 %s46, %s53
      %p55 = scmp.eq.s32.totalorder %s54, 0
      %s57 = sadd.s32 %s56, 1
      %s58 = scalar_select %p55, %s56, %s57
      %p61 = pneg %p55
      %p62 = scmp.eq.s32.totalorder %s46, 1
      %p63 = por %p61, %p62
      %p64 = scmp.ne.s32.totalorder %s56, %s59
      %p65 = scmp.eq.s32.totalorder %s46, 0
      %p66 = por %p64, %p65
      %p67 = scmp.ne.s32.totalorder %s56, %s59
      %p68 = scmp.eq.s32.totalorder %s51, 1
      %p69 = por %p67, %p68
      %p70 = scmp.ne.s32.totalorder %s59, %s60
      %p71 = scmp.eq.s32.totalorder %s51, 0
      %p72 = por %p70, %p71
      %p73 = scmp.ne.s32.totalorder %s59, %s60
      %p74 = scmp.eq.s32.totalorder %s52, 1
      %p75 = por %p73, %p74
      %p77 = scmp.ne.s32.totalorder %s60, %s76
      %p78 = scmp.eq.s32.totalorder %s52, 0
      %p79 = por %p77, %p78
      %s80 = ssub.s32 %s46, %s53
      %p81 = scmp.eq.s32.totalorder %s80, 0
      %s83 = sadd.s32 %s82, 1
      %s84 = scalar_select %p81, %s82, %s83
      %p87 = pneg %p81
      %p88 = scmp.eq.s32.totalorder %s46, 1
      %p89 = por %p87, %p88
      %p90 = scmp.ne.s32.totalorder %s82, %s85
      %p91 = scmp.eq.s32.totalorder %s46, 0
      %p92 = por %p90, %p91
      %p93 = scmp.ne.s32.totalorder %s82, %s85
      %p94 = scmp.eq.s32.totalorder %s51, 1
      %p95 = por %p93, %p94
      %p96 = scmp.ne.s32.totalorder %s85, %s86
      %p97 = scmp.eq.s32.totalorder %s51, 0
      %p98 = por %p96, %p97
      %p99 = scmp.ne.s32.totalorder %s85, %s86
      %p100 = scmp.eq.s32.totalorder %s52, 1
      %p101 = por %p99, %p100
      %p103 = scmp.ne.s32.totalorder %s86, %s102
      %p104 = scmp.eq.s32.totalorder %s52, 0
      %p105 = por %p103, %p104
      %s107 = sadd.s32 %s106, 1
      %p110 = scmp.eq.s32.totalorder %s46, 1
      %p111 = scmp.ne.s32.totalorder %s106, %s108
      %p112 = scmp.eq.s32.totalorder %s46, 0
      %p113 = por %p111, %p112
      %p114 = scmp.ne.s32.totalorder %s106, %s108
      %p115 = scmp.eq.s32.totalorder %s51, 1
      %p116 = por %p114, %p115
      %p117 = scmp.ne.s32.totalorder %s108, %s109
      %p118 = scmp.eq.s32.totalorder %s51, 0
      %p119 = por %p117, %p118
      %p120 = scmp.ne.s32.totalorder %s108, %s109
      %p121 = scmp.eq.s32.totalorder %s52, 1
      %p122 = por %p120, %p121
      %p124 = scmp.ne.s32.totalorder %s109, %s123
      %p125 = scmp.eq.s32.totalorder %s52, 0
      %p126 = por %p124, %p125
      %s128 = sadd.s32 %s127, 1
      %p131 = scmp.eq.s32.totalorder %s46, 1
      %p132 = scmp.ne.s32.totalorder %s127, %s129
      %p133 = scmp.eq.s32.totalorder %s46, 0
      %p134 = por %p132, %p133
      %p135 = scmp.ne.s32.totalorder %s127, %s129
      %p136 = scmp.eq.s32.totalorder %s51, 1
      %p137 = por %p135, %p136
      %p138 = scmp.ne.s32.totalorder %s129, %s130
      %p139 = scmp.eq.s32.totalorder %s51, 0
      %p140 = por %p138, %p139
      %p141 = scmp.ne.s32.totalorder %s129, %s130
      %p142 = scmp.eq.s32.totalorder %s52, 1
      %p143 = por %p141, %p142
      %p145 = scmp.ne.s32.totalorder %s130, %s144
      %p146 = scmp.eq.s32.totalorder %s52, 0
      %p147 = por %p145, %p146
      %s149 = sadd.s32 %s148, 1
      %p152 = scmp.eq.s32.totalorder %s46, 1
      %p153 = scmp.ne.s32.totalorder %s148, %s150
      %p154 = scmp.eq.s32.totalorder %s46, 0
      %p155 = por %p153, %p154
      %p156 = scmp.ne.s32.totalorder %s148, %s150
      %p157 = scmp.eq.s32.totalorder %s51, 1
      %p158 = por %p156, %p157
      %p159 = scmp.ne.s32.totalorder %s150, %s151
      %p160 = scmp.eq.s32.totalorder %s51, 0
      %p161 = por %p159, %p160
      %p162 = scmp.ne.s32.totalorder %s150, %s151
      %p163 = scmp.eq.s32.totalorder %s52, 1
      %p164 = por %p162, %p163
      %p166 = scmp.ne.s32.totalorder %s151, %s165
      %p167 = scmp.eq.s32.totalorder %s52, 0
      %p168 = por %p166, %p167
      %s170 = sadd.s32 %s169, 1
      %p173 = scmp.eq.s32.totalorder %s46, 1
      %p174 = scmp.ne.s32.totalorder %s169, %s171
      %p175 = scmp.eq.s32.totalorder %s46, 0
      %p176 = por %p174, %p175
      %p177 = scmp.ne.s32.totalorder %s169, %s171
      %p178 = scmp.eq.s32.totalorder %s51, 1
      %p179 = por %p177, %p178
      %p180 = scmp.ne.s32.totalorder %s171, %s172
      %p181 = scmp.eq.s32.totalorder %s51, 0
      %p182 = por %p180, %p181
      %p183 = scmp.ne.s32.totalorder %s171, %s172
      %p184 = scmp.eq.s32.totalorder %s52, 1
      %p185 = por %p183, %p184
      %p187 = scmp.ne.s32.totalorder %s172, %s186
      %p188 = scmp.eq.s32.totalorder %s52, 0
      %p189 = por %p187, %p188
      %s191 = sadd.s32 %s190, 1
      %p194 = scmp.eq.s32.totalorder %s46, 1
      %p195 = scmp.ne.s32.totalorder %s190, %s192
      %p196 = scmp.eq.s32.totalorder %s46, 0
      %p197 = por %p195, %p196
      %p198 = scmp.ne.s32.totalorder %s190, %s192
      %p199 = scmp.eq.s32.totalorder %s51, 1
      %p200 = por %p198, %p199
      %p201 = scmp.ne.s32.totalorder %s192, %s193
      %p202 = scmp.eq.s32.totalorder %s51, 0
      %p203 = por %p201, %p202
      %p204 = scmp.ne.s32.totalorder %s192, %s193
      %p205 = scmp.eq.s32.totalorder %s52, 1
      %p206 = por %p204, %p205
      %p208 = scmp.ne.s32.totalorder %s193, %s207
      %p209 = scmp.eq.s32.totalorder %s52, 0
      %p210 = por %p208, %p209
      %s212 = sadd.s32 %s211, 1
      %p215 = scmp.eq.s32.totalorder %s46, 1
      %p216 = scmp.ne.s32.totalorder %s211, %s213
      %p217 = scmp.eq.s32.totalorder %s46, 0
      %p218 = por %p216, %p217
      %p219 = scmp.ne.s32.totalorder %s211, %s213
      %p220 = scmp.eq.s32.totalorder %s51, 1
      %p221 = por %p219, %p220
      %p222 = scmp.ne.s32.totalorder %s213, %s214
      %p223 = scmp.eq.s32.totalorder %s51, 0
      %p224 = por %p222, %p223
      %p225 = scmp.ne.s32.totalorder %s213, %s214
      %p226 = scmp.eq.s32.totalorder %s52, 1
      %p227 = por %p225, %p226
      %p229 = scmp.ne.s32.totalorder %s214, %s228
      %p230 = scmp.eq.s32.totalorder %s52, 0
      %p231 = por %p229, %p230
      %s233 = sadd.s32 %s232, 1
      %p236 = scmp.eq.s32.totalorder %s46, 1
      %p237 = scmp.ne.s32.totalorder %s232, %s234
      %p238 = scmp.eq.s32.totalorder %s46, 0
      %p239 = por %p237, %p238
      %p240 = scmp.ne.s32.totalorder %s232, %s234
      %p241 = scmp.eq.s32.totalorder %s51, 1
      %p242 = por %p240, %p241
      %p243 = scmp.ne.s32.totalorder %s234, %s235
      %p244 = scmp.eq.s32.totalorder %s51, 0
      %p245 = por %p243, %p244
      %p246 = scmp.ne.s32.totalorder %s234, %s235
      %p247 = scmp.eq.s32.totalorder %s52, 1
      %p248 = por %p246, %p247
      %p250 = scmp.ne.s32.totalorder %s235, %s249
      %p251 = scmp.eq.s32.totalorder %s52, 0
      %p252 = por %p250, %p251
      %s254 = sadd.s32 %s253, 1
      %p257 = scmp.eq.s32.totalorder %s46, 1
      %p258 = scmp.ne.s32.totalorder %s253, %s255
      %p259 = scmp.eq.s32.totalorder %s46, 0
      %p260 = por %p258, %p259
      %p261 = scmp.ne.s32.totalorder %s253, %s255
      %p262 = scmp.eq.s32.totalorder %s51, 1
      %p263 = por %p261, %p262
      %p264 = scmp.ne.s32.totalorder %s255, %s256
      %p265 = scmp.eq.s32.totalorder %s51, 0
      %p266 = por %p264, %p265
      %p267 = scmp.ne.s32.totalorder %s255, %s256
      %p268 = scmp.eq.s32.totalorder %s52, 1
      %p269 = por %p267, %p268
      %p271 = scmp.ne.s32.totalorder %s256, %s270
      %p272 = scmp.eq.s32.totalorder %s52, 0
      %p273 = por %p271, %p272
      %s275 = sadd.s32 %s274, 1
      %p278 = scmp.eq.s32.totalorder %s46, 1
      %p279 = scmp.ne.s32.totalorder %s274, %s276
      %p280 = scmp.eq.s32.totalorder %s46, 0
      %p281 = por %p279, %p280
      %p282 = scmp.ne.s32.totalorder %s274, %s276
      %p283 = scmp.eq.s32.totalorder %s51, 1
      %p284 = por %p282, %p283
      %p285 = scmp.ne.s32.totalorder %s276, %s277
      %p286 = scmp.eq.s32.totalorder %s51, 0
      %p287 = por %p285, %p286
      %p288 = scmp.ne.s32.totalorder %s276, %s277
      %p289 = scmp.eq.s32.totalorder %s52, 1
      %p290 = por %p288, %p289
      %p292 = scmp.ne.s32.totalorder %s277, %s291
      %p293 = scmp.eq.s32.totalorder %s52, 0
      %p294 = por %p292, %p293
      %s296 = sadd.s32 %s295, 1
      %p299 = scmp.eq.s32.totalorder %s46, 1
      %p300 = scmp.ne.s32.totalorder %s295, %s297
      %p301 = scmp.eq.s32.totalorder %s46, 0
      %p302 = por %p300, %p301
      %p303 = scmp.ne.s32.totalorder %s295, %s297
      %p304 = scmp.eq.s32.totalorder %s51, 1
      %p305 = por %p303, %p304
      %p306 = scmp.ne.s32.totalorder %s297, %s298
      %p307 = scmp.eq.s32.totalorder %s51, 0
      %p308 = por %p306, %p307
      %p309 = scmp.ne.s32.totalorder %s297, %s298
      %p310 = scmp.eq.s32.totalorder %s52, 1
      %p311 = por %p309, %p310
      %p313 = scmp.ne.s32.totalorder %s298, %s312
      %p314 = scmp.eq.s32.totalorder %s52, 0
      %p315 = por %p313, %p314
      %s317 = sadd.s32 %s316, 1
      %p320 = scmp.eq.s32.totalorder %s46, 1
      %p321 = scmp.ne.s32.totalorder %s316, %s318
      %p322 = scmp.eq.s32.totalorder %s46, 0
      %p323 = por %p321, %p322
      %p324 = scmp.ne.s32.totalorder %s316, %s318
      %p325 = scmp.eq.s32.totalorder %s51, 1
      %p326 = por %p324, %p325
      %p327 = scmp.ne.s32.totalorder %s318, %s319
      %p328 = scmp.eq.s32.totalorder %s51, 0
      %p329 = por %p327, %p328
      %p330 = scmp.ne.s32.totalorder %s318, %s319
      %p331 = scmp.eq.s32.totalorder %s52, 1
      %p332 = por %p330, %p331
      %p334 = scmp.ne.s32.totalorder %s319, %s333
      %p335 = scmp.eq.s32.totalorder %s52, 0
      %p336 = por %p334, %p335
      %s338 = sadd.s32 %s337, 1
      %p341 = scmp.eq.s32.totalorder %s46, 1
      %p342 = scmp.ne.s32.totalorder %s337, %s339
      %p343 = scmp.eq.s32.totalorder %s46, 0
      %p344 = por %p342, %p343
      %p345 = scmp.ne.s32.totalorder %s337, %s339
      %p346 = scmp.eq.s32.totalorder %s51, 1
      %p347 = por %p345, %p346
      %p348 = scmp.ne.s32.totalorder %s339, %s340
      %p349 = scmp.eq.s32.totalorder %s51, 0
      %p350 = por %p348, %p349
      %p351 = scmp.ne.s32.totalorder %s339, %s340
      %p352 = scmp.eq.s32.totalorder %s52, 1
      %p353 = por %p351, %p352
      %p355 = scmp.ne.s32.totalorder %s340, %s354
      %p356 = scmp.eq.s32.totalorder %s52, 0
      %p357 = por %p355, %p356
      %s359 = sadd.s32 %s358, 1
      %p362 = scmp.eq.s32.totalorder %s46, 1
      %p363 = scmp.ne.s32.totalorder %s358, %s360
      %p364 = scmp.eq.s32.totalorder %s46, 0
      %p365 = por %p363, %p364
      %p366 = scmp.ne.s32.totalorder %s358, %s360
      %p367 = scmp.eq.s32.totalorder %s51, 1
      %p368 = por %p366, %p367
      %p369 = scmp.ne.s32.totalorder %s360, %s361
      %p370 = scmp.eq.s32.totalorder %s51, 0
      %p371 = por %p369, %p370
      %p372 = scmp.ne.s32.totalorder %s360, %s361
      %p373 = scmp.eq.s32.totalorder %s52, 1
      %p374 = por %p372, %p373
      %p376 = scmp.ne.s32.totalorder %s361, %s375
      %p377 = scmp.eq.s32.totalorder %s52, 0
      %p378 = por %p376, %p377
      %s380 = sadd.s32 %s379, 1
      %p383 = scmp.eq.s32.totalorder %s46, 1
      %p384 = scmp.ne.s32.totalorder %s379, %s381
      %p385 = scmp.eq.s32.totalorder %s46, 0
      %p386 = por %p384, %p385
      %p387 = scmp.ne.s32.totalorder %s379, %s381
      %p388 = scmp.eq.s32.totalorder %s51, 1
      %p389 = por %p387, %p388
      %p390 = scmp.ne.s32.totalorder %s381, %s382
      %p391 = scmp.eq.s32.totalorder %s51, 0
      %p392 = por %p390, %p391
      %p393 = scmp.ne.s32.totalorder %s381, %s382
      %p394 = scmp.eq.s32.totalorder %s52, 1
      %p395 = por %p393, %p394
      %p397 = scmp.ne.s32.totalorder %s382, %s396
      %p398 = scmp.eq.s32.totalorder %s52, 0
      %p399 = por %p397, %p398
      %s401 = sadd.s32 %s400, 1
      %p404 = scmp.eq.s32.totalorder %s46, 1
      %p405 = scmp.ne.s32.totalorder %s400, %s402
      %p406 = scmp.eq.s32.totalorder %s46, 0
      %p407 = por %p405, %p406
      %p408 = scmp.ne.s32.totalorder %s400, %s402
      %p409 = scmp.eq.s32.totalorder %s51, 1
      %p410 = por %p408, %p409
      %p411 = scmp.ne.s32.totalorder %s402, %s403
      %p412 = scmp.eq.s32.totalorder %s51, 0
      %p413 = por %p411, %p412
      %p414 = scmp.ne.s32.totalorder %s402, %s403
      %p415 = scmp.eq.s32.totalorder %s52, 1
      %p416 = por %p414, %p415
      %p418 = scmp.ne.s32.totalorder %s403, %s417
      %p419 = scmp.eq.s32.totalorder %s52, 0
      %p420 = por %p418, %p419
      %s422 = sadd.s32 %s421, 1
      %p425 = scmp.eq.s32.totalorder %s46, 1
      %p426 = scmp.ne.s32.totalorder %s421, %s423
      %p427 = scmp.eq.s32.totalorder %s46, 0
      %p428 = por %p426, %p427
      %p429 = scmp.ne.s32.totalorder %s421, %s423
      %p430 = scmp.eq.s32.totalorder %s51, 1
      %p431 = por %p429, %p430
      %p432 = scmp.ne.s32.totalorder %s423, %s424
      %p433 = scmp.eq.s32.totalorder %s51, 0
      %p434 = por %p432, %p433
      %p435 = scmp.ne.s32.totalorder %s423, %s424
      %p436 = scmp.eq.s32.totalorder %s52, 1
      %p437 = por %p435, %p436
      %p439 = scmp.ne.s32.totalorder %s424, %s438
      %p440 = scmp.eq.s32.totalorder %s52, 0
      %p441 = por %p439, %p440
      %s443 = sadd.s32 %s442, 1
      %p446 = scmp.eq.s32.totalorder %s46, 1
      %p447 = scmp.ne.s32.totalorder %s442, %s444
      %p448 = scmp.eq.s32.totalorder %s46, 0
      %p449 = por %p447, %p448
      %p450 = scmp.ne.s32.totalorder %s442, %s444
      %p451 = scmp.eq.s32.totalorder %s51, 1
      %p452 = por %p450, %p451
      %p453 = scmp.ne.s32.totalorder %s444, %s445
      %p454 = scmp.eq.s32.totalorder %s51, 0
      %p455 = por %p453, %p454
      %p456 = scmp.ne.s32.totalorder %s444, %s445
      %p457 = scmp.eq.s32.totalorder %s52, 1
      %p458 = por %p456, %p457
      %p460 = scmp.ne.s32.totalorder %s445, %s459
      %p461 = scmp.eq.s32.totalorder %s52, 0
      %p462 = por %p460, %p461
      %s464 = sadd.s32 %s463, 1
      %p467 = scmp.eq.s32.totalorder %s46, 1
      %p468 = scmp.ne.s32.totalorder %s463, %s465
      %p469 = scmp.eq.s32.totalorder %s46, 0
      %p470 = por %p468, %p469
      %p471 = scmp.ne.s32.totalorder %s463, %s465
      %p472 = scmp.eq.s32.totalorder %s51, 1
      %p473 = por %p471, %p472
      %p474 = scmp.ne.s32.totalorder %s465, %s466
      %p475 = scmp.eq.s32.totalorder %s51, 0
      %p476 = por %p474, %p475
      %p477 = scmp.ne.s32.totalorder %s465, %s466
      %p478 = scmp.eq.s32.totalorder %s52, 1
      %p479 = por %p477, %p478
      %p481 = scmp.ne.s32.totalorder %s466, %s480
      %p482 = scmp.eq.s32.totalorder %s52, 0
      %p483 = por %p481, %p482
      %s485 = sadd.s32 %s484, 1
      %p488 = scmp.eq.s32.totalorder %s46, 1
      %p489 = scmp.ne.s32.totalorder %s484, %s486
      %p490 = scmp.eq.s32.totalorder %s46, 0
      %p491 = por %p489, %p490
      %p492 = scmp.ne.s32.totalorder %s484, %s486
      %p493 = scmp.eq.s32.totalorder %s51, 1
      %p494 = por %p492, %p493
      %p495 = scmp.ne.s32.totalorder %s486, %s487
      %p496 = scmp.eq.s32.totalorder %s51, 0
      %p497 = por %p495, %p496
      %p498 = scmp.ne.s32.totalorder %s486, %s487
      %p499 = scmp.eq.s32.totalorder %s52, 1
      %p500 = por %p498, %p499
      %p502 = scmp.ne.s32.totalorder %s487, %s501
      %p503 = scmp.eq.s32.totalorder %s52, 0
      %p504 = por %p502, %p503
      %s506 = sadd.s32 %s505, 1
      %p509 = scmp.eq.s32.totalorder %s46, 1
      %p510 = scmp.ne.s32.totalorder %s505, %s507
      %p511 = scmp.eq.s32.totalorder %s46, 0
      %p512 = por %p510, %p511
      %p513 = scmp.ne.s32.totalorder %s505, %s507
      %p514 = scmp.eq.s32.totalorder %s51, 1
      %p515 = por %p513, %p514
      %p516 = scmp.ne.s32.totalorder %s507, %s508
      %p517 = scmp.eq.s32.totalorder %s51, 0
      %p518 = por %p516, %p517
      %p519 = scmp.ne.s32.totalorder %s507, %s508
      %p520 = scmp.eq.s32.totalorder %s52, 1
      %p521 = por %p519, %p520
      %p523 = scmp.ne.s32.totalorder %s508, %s522
      %p524 = scmp.eq.s32.totalorder %s52, 0
      %p525 = por %p523, %p524
      %s527 = sadd.s32 %s526, 1
      %p530 = scmp.eq.s32.totalorder %s46, 1
      %p531 = scmp.ne.s32.totalorder %s526, %s528
      %p532 = scmp.eq.s32.totalorder %s46, 0
      %p533 = por %p531, %p532
      %p534 = scmp.ne.s32.totalorder %s526, %s528
      %p535 = scmp.eq.s32.totalorder %s51, 1
      %p536 = por %p534, %p535
      %p537 = scmp.ne.s32.totalorder %s528, %s529
      %p538 = scmp.eq.s32.totalorder %s51, 0
      %p539 = por %p537, %p538
      %p540 = scmp.ne.s32.totalorder %s528, %s529
      %p541 = scmp.eq.s32.totalorder %s52, 1
      %p542 = por %p540, %p541
      %p544 = scmp.ne.s32.totalorder %s529, %s543
      %p545 = scmp.eq.s32.totalorder %s52, 0
      %p546 = por %p544, %p545
      %s548 = sadd.s32 %s547, 1
      %p551 = scmp.eq.s32.totalorder %s46, 1
      %p552 = scmp.ne.s32.totalorder %s547, %s549
      %p553 = scmp.eq.s32.totalorder %s46, 0
      %p554 = por %p552, %p553
      %p555 = scmp.ne.s32.totalorder %s547, %s549
      %p556 = scmp.eq.s32.totalorder %s51, 1
      %p557 = por %p555, %p556
      %p558 = scmp.ne.s32.totalorder %s549, %s550
      %p559 = scmp.eq.s32.totalorder %s51, 0
      %p560 = por %p558, %p559
      %p561 = scmp.ne.s32.totalorder %s549, %s550
      %p562 = scmp.eq.s32.totalorder %s52, 1
      %p563 = por %p561, %p562
      %p565 = scmp.ne.s32.totalorder %s550, %s564
      %p566 = scmp.eq.s32.totalorder %s52, 0
      %p567 = por %p565, %p566
      %s568 = ssub.s32 %s46, %s53
      %p569 = scmp.eq.s32.totalorder %s568, 0
      %s571 = sadd.s32 %s570, 1
      %s572 = scalar_select %p569, %s570, %s571
      %p575 = pneg %p569
      %p576 = scmp.eq.s32.totalorder %s46, 1
      %p577 = por %p575, %p576
      %p578 = scmp.ne.s32.totalorder %s570, %s573
      %p579 = scmp.eq.s32.totalorder %s46, 0
      %p580 = por %p578, %p579
      %p581 = scmp.ne.s32.totalorder %s570, %s573
      %p582 = scmp.eq.s32.totalorder %s51, 1
      %p583 = por %p581, %p582
      %p584 = scmp.ne.s32.totalorder %s573, %s574
      %p585 = scmp.eq.s32.totalorder %s51, 0
      %p586 = por %p584, %p585
      %p587 = scmp.ne.s32.totalorder %s573, %s574
      %p588 = scmp.eq.s32.totalorder %s52, 1
      %p589 = por %p587, %p588
      %p591 = scmp.ne.s32.totalorder %s574, %s590
      %p592 = scmp.eq.s32.totalorder %s52, 0
      %p593 = por %p591, %p592
      %p594 = scmp.le.s32.totalorder 1, %s46
      %p595 = scmp.lt.s32.totalorder %s46, 3
      %p596 = pnand %p594, %p595
      %p597 = pneg %p596
      // Predicated region
      $region9: #{tpu_custom_call.1} parent=5 // pred_check
        _
      $region10: #{tpu_custom_call.1} parent=5 // pred_check_branch
        %599 = sbr.rel (%p596) target = $region12
      $region11: #{tpu_custom_call.1} parent=5 // pred_region
        %s600 = ssub.s32 %s46, 1
        // Predicated region
        $region13: #{tpu_custom_call.1} parent=11 // pred_check
          %p601 = pneg %p119
        $region14: #{tpu_custom_call.1} parent=11 // pred_check_branch
          %603 = sbr.rel (%p601) target = $region16
        $region15: #{tpu_custom_call.1} parent=11 // pred_region
          %605 = vsyncadd [#allocation6], 0
          %s607 = sshll.u32 %s2, 4
          %s608 = int_to_ptr.hbm [resolvable:$true] %s607
          %s609 = sshll.u32 [#allocation7], 4
          %s610 = int_to_ptr.vmem [resolvable:$true] %s609
          %612 = dma.hbm_to_vmem [thread:$0]  %s608, 16, %s610, [#allocation6]
        $region16: #{tpu_custom_call.1} parent=11 // pred_fallthru
          _
        // Predicated region
        $region17: #{tpu_custom_call.1} parent=11 // pred_check
          %p613 = pneg %p140
        $region18: #{tpu_custom_call.1} parent=11 // pred_check_branch
          %615 = sbr.rel (%p613) target = $region20
        $region19: #{tpu_custom_call.1} parent=11 // pred_region
          %617 = vsyncadd [#allocation9], 0
          %s619 = sshll.u32 %s3, 4
          %s620 = int_to_ptr.hbm [resolvable:$true] %s619
          %s621 = sshll.u32 [#allocation8], 4
          %s622 = int_to_ptr.vmem [resolvable:$true] %s621
          %624 = dma.hbm_to_vmem [thread:$0]  %s620, 16, %s622, [#allocation9]
        $region20: #{tpu_custom_call.1} parent=11 // pred_fallthru
          _
        // Predicated region
        $region21: #{tpu_custom_call.1} parent=11 // pred_check
          %p625 = pneg %p161
        $region22: #{tpu_custom_call.1} parent=11 // pred_check_branch
          %627 = sbr.rel (%p625) target = $region24
        $region23: #{tpu_custom_call.1} parent=11 // pred_region
          %629 = vsyncadd [#allocation9], 0
          %s630 = sshll.u32 %s4, 4
          %s631 = int_to_ptr.hbm [resolvable:$true] %s630
          %s632 = sshll.u32 [#allocation10], 4
          %s633 = int_to_ptr.vmem [resolvable:$true] %s632
          %638 = dma.hbm_to_vmem [thread:$0]  %s631, 1024, %s633, [#allocation9], 64, 64, 4
        $region24: #{tpu_custom_call.1} parent=11 // pred_fallthru
          _
        // Predicated region
        $region25: #{tpu_custom_call.1} parent=11 // pred_check
          %p639 = pneg %p182
        $region26: #{tpu_custom_call.1} parent=11 // pred_check_branch
          %641 = sbr.rel (%p639) target = $region28
        $region27: #{tpu_custom_call.1} parent=11 // pred_region
          %643 = vsyncadd [#allocation12], 0
          %s644 = sshll.u32 %s5, 4
          %s645 = int_to_ptr.hbm [resolvable:$true] %s644
          %s646 = sshll.u32 [#allocation11], 4
          %s647 = int_to_ptr.vmem [resolvable:$true] %s646
          %652 = dma.hbm_to_vmem [thread:$0]  %s645, 1024, %s647, [#allocation12], 64, 64, 4
        $region28: #{tpu_custom_call.1} parent=11 // pred_fallthru
          _
        // Predicated region
        $region29: #{tpu_custom_call.1} parent=11 // pred_check
          %p653 = pneg %p203
        $region30: #{tpu_custom_call.1} parent=11 // pred_check_branch
          %655 = sbr.rel (%p653) target = $region32
        $region31: #{tpu_custom_call.1} parent=11 // pred_region
          %657 = vsyncadd [#allocation12], 0
          %s658 = sshll.u32 %s6, 4
          %s659 = int_to_ptr.hbm [resolvable:$true] %s658
          %s660 = sshll.u32 [#allocation13], 4
          %s661 = int_to_ptr.vmem [resolvable:$true] %s660
          %666 = dma.hbm_to_vmem [thread:$0]  %s659, 1024, %s661, [#allocation12], 64, 64, 4
        $region32: #{tpu_custom_call.1} parent=11 // pred_fallthru
          _
        // Predicated region
        $region33: #{tpu_custom_call.1} parent=11 // pred_check
          %p667 = pneg %p224
        $region34: #{tpu_custom_call.1} parent=11 // pred_check_branch
          %669 = sbr.rel (%p667) target = $region36
        $region35: #{tpu_custom_call.1} parent=11 // pred_region
          %671 = vsyncadd [#allocation15], 0
          %s672 = sshll.u32 %s7, 4
          %s673 = int_to_ptr.hbm [resolvable:$true] %s672
          %s674 = sshll.u32 [#allocation14], 4
          %s675 = int_to_ptr.vmem [resolvable:$true] %s674
          %680 = dma.hbm_to_vmem [thread:$0]  %s673, 1024, %s675, [#allocation15], 64, 64, 4
        $region36: #{tpu_custom_call.1} parent=11 // pred_fallthru
          _
        // Predicated region
        $region37: #{tpu_custom_call.1} parent=11 // pred_check
          %p681 = pneg %p245
        $region38: #{tpu_custom_call.1} parent=11 // pred_check_branch
          %683 = sbr.rel (%p681) target = $region40
        $region39: #{tpu_custom_call.1} parent=11 // pred_region
          %685 = vsyncadd [#allocation15], 0
          %s687 = sshll.u32 %s8, 4
          %s688 = int_to_ptr.hbm [resolvable:$true] %s687
          %s689 = sshll.u32 [#allocation16], 4
          %s690 = int_to_ptr.vmem [resolvable:$true] %s689
          %692 = dma.hbm_to_vmem [thread:$0]  %s688, 16, %s690, [#allocation15]
        $region40: #{tpu_custom_call.1} parent=11 // pred_fallthru
          _
        // Predicated region
        $region41: #{tpu_custom_call.1} parent=11 // pred_check
          %p693 = pneg %p266
        $region42: #{tpu_custom_call.1} parent=11 // pred_check_branch
          %695 = sbr.rel (%p693) target = $region44
        $region43: #{tpu_custom_call.1} parent=11 // pred_region
          %697 = vsyncadd [#allocation18], 0
          %s699 = sshll.u32 %s9, 4
          %s700 = int_to_ptr.hbm [resolvable:$true] %s699
          %s701 = sshll.u32 [#allocation17], 4
          %s702 = int_to_ptr.vmem [resolvable:$true] %s701
          %704 = dma.hbm_to_vmem [thread:$0]  %s700, 16, %s702, [#allocation18]
        $region44: #{tpu_custom_call.1} parent=11 // pred_fallthru
          _
        // Predicated region
        $region45: #{tpu_custom_call.1} parent=11 // pred_check
          %p705 = pneg %p287
        $region46: #{tpu_custom_call.1} parent=11 // pred_check_branch
          %707 = sbr.rel (%p705) target = $region48
        $region47: #{tpu_custom_call.1} parent=11 // pred_region
          _
        $region48: #{tpu_custom_call.1} parent=11 // pred_fallthru
          _
        // Predicated region
        $region49: #{tpu_custom_call.1} parent=11 // pred_check
          %p708 = pneg %p308
        $region50: #{tpu_custom_call.1} parent=11 // pred_check_branch
          %710 = sbr.rel (%p708) target = $region52
        $region51: #{tpu_custom_call.1} parent=11 // pred_region
          %712 = vsyncadd [#allocation18], 0
          %s713 = sshll.u32 %s11, 4
          %s714 = int_to_ptr.hbm [resolvable:$true] %s713
          %s715 = sshll.u32 [#allocation19], 4
          %s716 = int_to_ptr.vmem [resolvable:$true] %s715
          %721 = dma.hbm_to_vmem [thread:$0]  %s714, 1024, %s716, [#allocation18], 64, 64, 4
        $region52: #{tpu_custom_call.1} parent=11 // pred_fallthru
          _
        // Predicated region
        $region53: #{tpu_custom_call.1} parent=11 // pred_check
          %p722 = pneg %p329
        $region54: #{tpu_custom_call.1} parent=11 // pred_check_branch
          %724 = sbr.rel (%p722) target = $region56
        $region55: #{tpu_custom_call.1} parent=11 // pred_region
          %726 = vsyncadd [#allocation21], 0
          %s727 = sshll.u32 %s12, 4
          %s728 = int_to_ptr.hbm [resolvable:$true] %s727
          %s729 = sshll.u32 [#allocation20], 4
          %s730 = int_to_ptr.vmem [resolvable:$true] %s729
          %735 = dma.hbm_to_vmem [thread:$0]  %s728, 512, %s730, [#allocation21], 64, 64, 4
        $region56: #{tpu_custom_call.1} parent=11 // pred_fallthru
          _
        // Predicated region
        $region57: #{tpu_custom_call.1} parent=11 // pred_check
          %p736 = pneg %p350
        $region58: #{tpu_custom_call.1} parent=11 // pred_check_branch
          %738 = sbr.rel (%p736) target = $region60
        $region59: #{tpu_custom_call.1} parent=11 // pred_region
          %740 = vsyncadd [#allocation21], 0
          %s741 = sshll.u32 %s13, 4
          %s742 = int_to_ptr.hbm [resolvable:$true] %s741
          %s743 = sshll.u32 [#allocation22], 4
          %s744 = int_to_ptr.vmem [resolvable:$true] %s743
          %749 = dma.hbm_to_vmem [thread:$0]  %s742, 512, %s744, [#allocation21], 64, 64, 4
        $region60: #{tpu_custom_call.1} parent=11 // pred_fallthru
          _
        // Predicated region
        $region61: #{tpu_custom_call.1} parent=11 // pred_check
          %p750 = pneg %p371
        $region62: #{tpu_custom_call.1} parent=11 // pred_check_branch
          %752 = sbr.rel (%p750) target = $region64
        $region63: #{tpu_custom_call.1} parent=11 // pred_region
          %754 = vsyncadd [#allocation24], 0
          %s755 = sshll.u32 %s14, 4
          %s756 = int_to_ptr.hbm [resolvable:$true] %s755
          %s757 = sshll.u32 [#allocation23], 4
          %s758 = int_to_ptr.vmem [resolvable:$true] %s757
          %763 = dma.hbm_to_vmem [thread:$0]  %s756, 1024, %s758, [#allocation24], 64, 64, 4
        $region64: #{tpu_custom_call.1} parent=11 // pred_fallthru
          _
        // Predicated region
        $region65: #{tpu_custom_call.1} parent=11 // pred_check
          %p764 = pneg %p392
        $region66: #{tpu_custom_call.1} parent=11 // pred_check_branch
          %766 = sbr.rel (%p764) target = $region68
        $region67: #{tpu_custom_call.1} parent=11 // pred_region
          _
        $region68: #{tpu_custom_call.1} parent=11 // pred_fallthru
          _
        // Predicated region
        $region69: #{tpu_custom_call.1} parent=11 // pred_check
          %p767 = pneg %p413
        $region70: #{tpu_custom_call.1} parent=11 // pred_check_branch
          %769 = sbr.rel (%p767) target = $region72
        $region71: #{tpu_custom_call.1} parent=11 // pred_region
          _
        $region72: #{tpu_custom_call.1} parent=11 // pred_fallthru
          _
        // Predicated region
        $region73: #{tpu_custom_call.1} parent=11 // pred_check
          %p770 = pneg %p434
        $region74: #{tpu_custom_call.1} parent=11 // pred_check_branch
          %772 = sbr.rel (%p770) target = $region76
        $region75: #{tpu_custom_call.1} parent=11 // pred_region
          _
        $region76: #{tpu_custom_call.1} parent=11 // pred_fallthru
          _
        // Predicated region
        $region77: #{tpu_custom_call.1} parent=11 // pred_check
          %p773 = pneg %p455
        $region78: #{tpu_custom_call.1} parent=11 // pred_check_branch
          %775 = sbr.rel (%p773) target = $region80
        $region79: #{tpu_custom_call.1} parent=11 // pred_region
          %777 = vsyncadd [#allocation24], 0
          %s778 = sshll.u32 %s18, 4
          %s779 = int_to_ptr.hbm [resolvable:$true] %s778
          %s780 = sshll.u32 [#allocation25], 4
          %s781 = int_to_ptr.vmem [resolvable:$true] %s780
          %786 = dma.hbm_to_vmem [thread:$0]  %s779, 4096, %s781, [#allocation24], 256, 256, 16
        $region80: #{tpu_custom_call.1} parent=11 // pred_fallthru
          _
        // Predicated region
        $region81: #{tpu_custom_call.1} parent=11 // pred_check
          %p787 = pneg %p476
        $region82: #{tpu_custom_call.1} parent=11 // pred_check_branch
          %789 = sbr.rel (%p787) target = $region84
        $region83: #{tpu_custom_call.1} parent=11 // pred_region
          _
        $region84: #{tpu_custom_call.1} parent=11 // pred_fallthru
          _
        // Predicated region
        $region85: #{tpu_custom_call.1} parent=11 // pred_check
          %p790 = pneg %p497
        $region86: #{tpu_custom_call.1} parent=11 // pred_check_branch
          %792 = sbr.rel (%p790) target = $region88
        $region87: #{tpu_custom_call.1} parent=11 // pred_region
          %794 = vsyncadd [#allocation27], 0
          %s795 = sshll.u32 %s20, 4
          %s796 = int_to_ptr.hbm [resolvable:$true] %s795
          %s797 = sshll.u32 [#allocation26], 4
          %s798 = int_to_ptr.vmem [resolvable:$true] %s797
          %803 = dma.hbm_to_vmem [thread:$0]  %s796, 4096, %s798, [#allocation27], 256, 256, 16
        $region88: #{tpu_custom_call.1} parent=11 // pred_fallthru
          _
        // Predicated region
        $region89: #{tpu_custom_call.1} parent=11 // pred_check
          %p804 = pneg %p518
        $region90: #{tpu_custom_call.1} parent=11 // pred_check_branch
          %806 = sbr.rel (%p804) target = $region92
        $region91: #{tpu_custom_call.1} parent=11 // pred_region
          _
        $region92: #{tpu_custom_call.1} parent=11 // pred_fallthru
          _
        // Predicated region
        $region93: #{tpu_custom_call.1} parent=11 // pred_check
          %p807 = pneg %p539
        $region94: #{tpu_custom_call.1} parent=11 // pred_check_branch
          %809 = sbr.rel (%p807) target = $region96
        $region95: #{tpu_custom_call.1} parent=11 // pred_region
          %811 = vsyncadd [#allocation27], 0
          %s812 = sshll.u32 %s22, 4
          %s813 = int_to_ptr.hbm [resolvable:$true] %s812
          %s814 = sshll.u32 [#allocation28], 4
          %s815 = int_to_ptr.vmem [resolvable:$true] %s814
          %820 = dma.hbm_to_vmem [thread:$0]  %s813, 4096, %s815, [#allocation27], 64, 64, 4
        $region96: #{tpu_custom_call.1} parent=11 // pred_fallthru
          _
        // Predicated region
        $region97: #{tpu_custom_call.1} parent=11 // pred_check
          %p821 = pneg %p560
        $region98: #{tpu_custom_call.1} parent=11 // pred_check_branch
          %823 = sbr.rel (%p821) target = $region100
        $region99: #{tpu_custom_call.1} parent=11 // pred_region
          _
        $region100: #{tpu_custom_call.1} parent=11 // pred_fallthru
          _
      $region12: #{tpu_custom_call.1} parent=5 // pred_fallthru
        _
      %p824 = scmp.lt.s32.totalorder %s46, 2
      // Predicated region
      $region101: #{tpu_custom_call.1} parent=5 // pred_check
        %p825 = pneg %p824
      $region102: #{tpu_custom_call.1} parent=5 // pred_check_branch
        %827 = sbr.rel (%p825) target = $region104
      $region103: #{tpu_custom_call.1} parent=5 // pred_region
        // Predicated region
        $region105: #{tpu_custom_call.1} parent=103 // pred_check
          %p828 = pneg %p66
        $region106: #{tpu_custom_call.1} parent=103 // pred_check_branch
          %830 = sbr.rel (%p828) target = $region108
        $region107: #{tpu_custom_call.1} parent=103 // pred_region
          %s831 = sand.u32 %s56, 1
          %s832 = scalar_lea.sflag [#allocation3], %s831
          %s833 = sand.u32 %s56, 1
          %s834 = smul.addr %s833, 16
          %s835 = scalar_lea.vmem [#allocation2], %s834
          %837 = vsyncadd %s832, 0
          %s838 = smul.addr %s46, 2
          %s839 = smul.addr %s838, 8
          %s840 = scalar_lea.hbm %s0, %s839
          %s841 = sshll.u32 %s840, 4
          %s842 = int_to_ptr.hbm [resolvable:$true] %s841
          %s843 = sshll.u32 %s835, 4
          %s844 = int_to_ptr.vmem [resolvable:$true] %s843
          %849 = dma.hbm_to_vmem [thread:$0]  %s842, 256, %s844, %s832, 128, 128, 8
        $region108: #{tpu_custom_call.1} parent=103 // pred_fallthru
          _
        // Predicated region
        $region109: #{tpu_custom_call.1} parent=103 // pred_check
          %p850 = pneg %p92
        $region110: #{tpu_custom_call.1} parent=103 // pred_check_branch
          %852 = sbr.rel (%p850) target = $region112
        $region111: #{tpu_custom_call.1} parent=103 // pred_region
          %s853 = sand.u32 %s46, 1
          %s854 = scalar_lea.sflag [#allocation6], %s853
          %s855 = sand.u32 %s82, 1
          %s856 = smul.addr %s855, 16
          %s857 = scalar_lea.vmem [#allocation5], %s856
          %859 = vsyncadd %s854, 0
          %s860 = smul.addr %s46, 2
          %s861 = smul.addr %s860, 8
          %s862 = scalar_lea.hbm %s1, %s861
          %s863 = sshll.u32 %s862, 4
          %s864 = int_to_ptr.hbm [resolvable:$true] %s863
          %s865 = sshll.u32 %s857, 4
          %s866 = int_to_ptr.vmem [resolvable:$true] %s865
          %871 = dma.hbm_to_vmem [thread:$0]  %s864, 256, %s866, %s854, 128, 128, 8
        $region112: #{tpu_custom_call.1} parent=103 // pred_fallthru
          _
      $region104: #{tpu_custom_call.1} parent=5 // pred_fallthru
        _
      %p872 = scmp.le.s32.totalorder 1, %s46
      %p873 = scmp.lt.s32.totalorder %s46, 3
      %p874 = pnand %p872, %p873
      %p875 = pneg %p874
      // Predicated region
      $region113: #{tpu_custom_call.1} parent=5 // pred_check
        _
      $region114: #{tpu_custom_call.1} parent=5 // pred_check_branch
        %877 = sbr.rel (%p874) target = $region116
      $region115: #{tpu_custom_call.1} parent=5 // pred_region
        %s878 = ssub.s32 %s46, 1
        %s879 = sand.u32 %s59, 1
        %s880 = scalar_lea.sflag [#allocation3], %s879
        %s881 = sand.u32 %s59, 1
        %s882 = smul.addr %s881, 16
        %s883 = scalar_lea.vmem [#allocation2], %s882
        // Predicated region
        $region117: #{tpu_custom_call.1} parent=115 // pred_check
          %p884 = pneg %p72
        $region118: #{tpu_custom_call.1} parent=115 // pred_check_branch
          %886 = sbr.rel (%p884) target = $region120
        $region119: #{tpu_custom_call.1} parent=115 // pred_region
          %888 = dma.done %s880, 256
        $region120: #{tpu_custom_call.1} parent=115 // pred_fallthru
          _
        %s889 = sand.u32 %s51, 1
        %s890 = scalar_lea.sflag [#allocation6], %s889
        %s891 = sand.u32 %s85, 1
        %s892 = smul.addr %s891, 16
        %s893 = scalar_lea.vmem [#allocation5], %s892
        // Predicated region
        $region121: #{tpu_custom_call.1} parent=115 // pred_check
          %p894 = pneg %p98
        $region122: #{tpu_custom_call.1} parent=115 // pred_check_branch
          %896 = sbr.rel (%p894) target = $region124
        $region123: #{tpu_custom_call.1} parent=115 // pred_region
          %898 = dma.done %s890, 256
        $region124: #{tpu_custom_call.1} parent=115 // pred_fallthru
          _
        // Predicated region
        $region125: #{tpu_custom_call.1} parent=115 // pred_check
          %p899 = pneg %p119
        $region126: #{tpu_custom_call.1} parent=115 // pred_check_branch
          %901 = sbr.rel (%p899) target = $region128
        $region127: #{tpu_custom_call.1} parent=115 // pred_region
          %903 = dma.done [#allocation6], 16
        $region128: #{tpu_custom_call.1} parent=115 // pred_fallthru
          _
        // Predicated region
        $region129: #{tpu_custom_call.1} parent=115 // pred_check
          %p904 = pneg %p140
        $region130: #{tpu_custom_call.1} parent=115 // pred_check_branch
          %906 = sbr.rel (%p904) target = $region132
        $region131: #{tpu_custom_call.1} parent=115 // pred_region
          %908 = dma.done [#allocation9], 16
        $region132: #{tpu_custom_call.1} parent=115 // pred_fallthru
          _
        // Predicated region
        $region133: #{tpu_custom_call.1} parent=115 // pred_check
          %p909 = pneg %p161
        $region134: #{tpu_custom_call.1} parent=115 // pred_check_branch
          %911 = sbr.rel (%p909) target = $region136
        $region135: #{tpu_custom_call.1} parent=115 // pred_region
          %913 = dma.done [#allocation9], 1024
        $region136: #{tpu_custom_call.1} parent=115 // pred_fallthru
          _
        // Predicated region
        $region137: #{tpu_custom_call.1} parent=115 // pred_check
          %p914 = pneg %p182
        $region138: #{tpu_custom_call.1} parent=115 // pred_check_branch
          %916 = sbr.rel (%p914) target = $region140
        $region139: #{tpu_custom_call.1} parent=115 // pred_region
          %918 = dma.done [#allocation12], 1024
        $region140: #{tpu_custom_call.1} parent=115 // pred_fallthru
          _
        // Predicated region
        $region141: #{tpu_custom_call.1} parent=115 // pred_check
          %p919 = pneg %p203
        $region142: #{tpu_custom_call.1} parent=115 // pred_check_branch
          %921 = sbr.rel (%p919) target = $region144
        $region143: #{tpu_custom_call.1} parent=115 // pred_region
          %923 = dma.done [#allocation12], 1024
        $region144: #{tpu_custom_call.1} parent=115 // pred_fallthru
          _
        // Predicated region
        $region145: #{tpu_custom_call.1} parent=115 // pred_check
          %p924 = pneg %p224
        $region146: #{tpu_custom_call.1} parent=115 // pred_check_branch
          %926 = sbr.rel (%p924) target = $region148
        $region147: #{tpu_custom_call.1} parent=115 // pred_region
          %928 = dma.done [#allocation15], 1024
        $region148: #{tpu_custom_call.1} parent=115 // pred_fallthru
          _
        // Predicated region
        $region149: #{tpu_custom_call.1} parent=115 // pred_check
          %p929 = pneg %p245
        $region150: #{tpu_custom_call.1} parent=115 // pred_check_branch
          %931 = sbr.rel (%p929) target = $region152
        $region151: #{tpu_custom_call.1} parent=115 // pred_region
          %933 = dma.done [#allocation15], 16
        $region152: #{tpu_custom_call.1} parent=115 // pred_fallthru
          _
        // Predicated region
        $region153: #{tpu_custom_call.1} parent=115 // pred_check
          %p934 = pneg %p266
        $region154: #{tpu_custom_call.1} parent=115 // pred_check_branch
          %936 = sbr.rel (%p934) target = $region156
        $region155: #{tpu_custom_call.1} parent=115 // pred_region
          %938 = dma.done [#allocation18], 16
        $region156: #{tpu_custom_call.1} parent=115 // pred_fallthru
          _
        // Predicated region
        $region157: #{tpu_custom_call.1} parent=115 // pred_check
          %p939 = pneg %p308
        $region158: #{tpu_custom_call.1} parent=115 // pred_check_branch
          %941 = sbr.rel (%p939) target = $region160
        $region159: #{tpu_custom_call.1} parent=115 // pred_region
          %943 = dma.done [#allocation18], 1024
        $region160: #{tpu_custom_call.1} parent=115 // pred_fallthru
          _
        // Predicated region
        $region161: #{tpu_custom_call.1} parent=115 // pred_check
          %p944 = pneg %p329
        $region162: #{tpu_custom_call.1} parent=115 // pred_check_branch
          %946 = sbr.rel (%p944) target = $region164
        $region163: #{tpu_custom_call.1} parent=115 // pred_region
          %948 = dma.done [#allocation21], 512
        $region164: #{tpu_custom_call.1} parent=115 // pred_fallthru
          _
        // Predicated region
        $region165: #{tpu_custom_call.1} parent=115 // pred_check
          %p949 = pneg %p350
        $region166: #{tpu_custom_call.1} parent=115 // pred_check_branch
          %951 = sbr.rel (%p949) target = $region168
        $region167: #{tpu_custom_call.1} parent=115 // pred_region
          %953 = dma.done [#allocation21], 512
        $region168: #{tpu_custom_call.1} parent=115 // pred_fallthru
          _
        // Predicated region
        $region169: #{tpu_custom_call.1} parent=115 // pred_check
          %p954 = pneg %p371
        $region170: #{tpu_custom_call.1} parent=115 // pred_check_branch
          %956 = sbr.rel (%p954) target = $region172
        $region171: #{tpu_custom_call.1} parent=115 // pred_region
          %958 = dma.done [#allocation24], 1024
        $region172: #{tpu_custom_call.1} parent=115 // pred_fallthru
          _
        // Predicated region
        $region173: #{tpu_custom_call.1} parent=115 // pred_check
          %p959 = pneg %p455
        $region174: #{tpu_custom_call.1} parent=115 // pred_check_branch
          %961 = sbr.rel (%p959) target = $region176
        $region175: #{tpu_custom_call.1} parent=115 // pred_region
          %963 = dma.done [#allocation24], 4096
        $region176: #{tpu_custom_call.1} parent=115 // pred_fallthru
          _
        // Predicated region
        $region177: #{tpu_custom_call.1} parent=115 // pred_check
          %p964 = pneg %p497
        $region178: #{tpu_custom_call.1} parent=115 // pred_check_branch
          %966 = sbr.rel (%p964) target = $region180
        $region179: #{tpu_custom_call.1} parent=115 // pred_region
          %968 = dma.done [#allocation27], 4096
        $region180: #{tpu_custom_call.1} parent=115 // pred_fallthru
          _
        // Predicated region
        $region181: #{tpu_custom_call.1} parent=115 // pred_check
          %p969 = pneg %p539
        $region182: #{tpu_custom_call.1} parent=115 // pred_check_branch
          %971 = sbr.rel (%p969) target = $region184
        $region183: #{tpu_custom_call.1} parent=115 // pred_region
          %973 = dma.done [#allocation27], 4096
        $region184: #{tpu_custom_call.1} parent=115 // pred_fallthru
          _
        %s974 = sand.u32 %s59, 1
        %s975 = scalar_lea.sflag [#allocation3], %s974
        %s976 = sand.u32 %s59, 1
        %s977 = smul.addr %s976, 16
        %s978 = scalar_lea.vmem [#allocation2], %s977
        %p979 = pneg %p72
        %p980 = pneg %p69
        %s981 = sand.u32 %s51, 1
        %s982 = scalar_lea.sflag [#allocation6], %s981
        %s983 = sand.u32 %s85, 1
        %s984 = smul.addr %s983, 16
        %s985 = scalar_lea.vmem [#allocation5], %s984
        %p986 = pneg %p98
        %p987 = pneg %p95
        %p988 = pneg %p119
        %p989 = pneg %p116
        %p990 = pneg %p140
        %p991 = pneg %p137
        %p992 = pneg %p161
        %p993 = pneg %p158
        %p994 = pneg %p182
        %p995 = pneg %p179
        %p996 = pneg %p203
        %p997 = pneg %p200
        %p998 = pneg %p224
        %p999 = pneg %p221
        %p1000 = pneg %p245
        %p1001 = pneg %p242
        %p1002 = pneg %p266
        %p1003 = pneg %p263
        %p1004 = pneg %p287
        %p1005 = pneg %p284
        %p1006 = pneg %p308
        %p1007 = pneg %p305
        %p1008 = pneg %p329
        %p1009 = pneg %p326
        %p1010 = pneg %p350
        %p1011 = pneg %p347
        %p1012 = pneg %p371
        %p1013 = pneg %p368
        %p1014 = pneg %p392
        %p1015 = pneg %p389
        %p1016 = pneg %p413
        %p1017 = pneg %p410
        %p1018 = pneg %p434
        %p1019 = pneg %p431
        %p1020 = pneg %p455
        %p1021 = pneg %p452
        %p1022 = pneg %p476
        %p1023 = pneg %p473
        %p1024 = pneg %p497
        %p1025 = pneg %p494
        %p1026 = pneg %p518
        %p1027 = pneg %p515
        %p1028 = pneg %p539
        %p1029 = pneg %p536
        %p1030 = pneg %p560
        %p1031 = pneg %p557
        %p1032 = pneg %p586
        %p1033 = pneg %p583
        %s1034 = sand.u32 %s573, 1
        %s1035 = scalar_lea.sflag [#allocation4], %s1034
        %s1036 = sand.u32 %s573, 1
        %s1037 = smul.addr %s1036, 16
        %s1038 = scalar_lea.vmem [#allocation29], %s1037
        %v1040 = vld [vmem:[%s883] sm:$0xff]
        %v1041 = vld [vmem:[%s883 + $0x8] sm:$0xff]
        %v1042 = vld [vmem:[%s893] sm:$0xff]
        %v1043 = vld [vmem:[%s893 + $0x8] sm:$0xff]
        %v1044 = vpack.c.bf16 %v1043, %v1042
        %v1045 = vld [vmem:[#allocation7] sm:$0x1]
        %v1046 = vld [vmem:[#allocation8] sm:$0x1]
        %v1047 = vld [vmem:[#allocation17] sm:$0x1]
        %v1048 = vld [vmem:[%s10] sm:$0x1]
        %v1049 = vld [vmem:[%s16] sm:$0x1]
        %v1050 = vld [vmem:[%s17] sm:$0x1]
        %v1051 = vld [vmem:[#allocation10] sm:$0xf]
        %v1052 = vld [vmem:[#allocation10 + $0x4] sm:$0xf]
        %v1053 = vld [vmem:[#allocation10 + $0x8] sm:$0xf]
        %v1054 = vld [vmem:[#allocation10 + $0xc] sm:$0xf]
        %v1055 = vld [vmem:[#allocation10 + $0x10] sm:$0xf]
        %v1056 = vld [vmem:[#allocation10 + $0x14] sm:$0xf]
        %v1057 = vld [vmem:[#allocation10 + $0x18] sm:$0xf]
        %v1058 = vld [vmem:[#allocation10 + $0x1c] sm:$0xf]
        %v1059 = vld [vmem:[#allocation10 + $0x20] sm:$0xf]
        %v1060 = vld [vmem:[#allocation10 + $0x24] sm:$0xf]
        %v1061 = vld [vmem:[#allocation10 + $0x28] sm:$0xf]
        %v1062 = vld [vmem:[#allocation10 + $0x2c] sm:$0xf]
        %v1063 = vld [vmem:[#allocation10 + $0x30] sm:$0xf]
        %v1064 = vld [vmem:[#allocation10 + $0x34] sm:$0xf]
        %v1065 = vld [vmem:[#allocation10 + $0x38] sm:$0xf]
        %v1066 = vld [vmem:[#allocation10 + $0x3c] sm:$0xf]
        %v1067 = vld [vmem:[#allocation11] sm:$0xf]
        %v1068 = vld [vmem:[#allocation11 + $0x4] sm:$0xf]
        %v1069 = vld [vmem:[#allocation11 + $0x8] sm:$0xf]
        %v1070 = vld [vmem:[#allocation11 + $0xc] sm:$0xf]
        %v1071 = vld [vmem:[#allocation11 + $0x10] sm:$0xf]
        %v1072 = vld [vmem:[#allocation11 + $0x14] sm:$0xf]
        %v1073 = vld [vmem:[#allocation11 + $0x18] sm:$0xf]
        %v1074 = vld [vmem:[#allocation11 + $0x1c] sm:$0xf]
        %v1075 = vld [vmem:[#allocation11 + $0x20] sm:$0xf]
        %v1076 = vld [vmem:[#allocation11 + $0x24] sm:$0xf]
        %v1077 = vld [vmem:[#allocation11 + $0x28] sm:$0xf]
        %v1078 = vld [vmem:[#allocation11 + $0x2c] sm:$0xf]
        %v1079 = vld [vmem:[#allocation11 + $0x30] sm:$0xf]
        %v1080 = vld [vmem:[#allocation11 + $0x34] sm:$0xf]
        %v1081 = vld [vmem:[#allocation11 + $0x38] sm:$0xf]
        %v1082 = vld [vmem:[#allocation11 + $0x3c] sm:$0xf]
        %v1083 = vld [vmem:[#allocation13] sm:$0xf]
        %v1084 = vld [vmem:[#allocation13 + $0x4] sm:$0xf]
        %v1085 = vld [vmem:[#allocation13 + $0x8] sm:$0xf]
        %v1086 = vld [vmem:[#allocation13 + $0xc] sm:$0xf]
        %v1087 = vld [vmem:[#allocation13 + $0x10] sm:$0xf]
        %v1088 = vld [vmem:[#allocation13 + $0x14] sm:$0xf]
        %v1089 = vld [vmem:[#allocation13 + $0x18] sm:$0xf]
        %v1090 = vld [vmem:[#allocation13 + $0x1c] sm:$0xf]
        %v1091 = vld [vmem:[#allocation13 + $0x20] sm:$0xf]
        %v1092 = vld [vmem:[#allocation13 + $0x24] sm:$0xf]
        %v1093 = vld [vmem:[#allocation13 + $0x28] sm:$0xf]
        %v1094 = vld [vmem:[#allocation13 + $0x2c] sm:$0xf]
        %v1095 = vld [vmem:[#allocation13 + $0x30] sm:$0xf]
        %v1096 = vld [vmem:[#allocation13 + $0x34] sm:$0xf]
        %v1097 = vld [vmem:[#allocation13 + $0x38] sm:$0xf]
        %v1098 = vld [vmem:[#allocation13 + $0x3c] sm:$0xf]
        %v1099 = vld [vmem:[#allocation14] sm:$0xf]
        %v1100 = vld [vmem:[#allocation14 + $0x4] sm:$0xf]
        %v1101 = vld [vmem:[#allocation14 + $0x8] sm:$0xf]
        %v1102 = vld [vmem:[#allocation14 + $0xc] sm:$0xf]
        %v1103 = vld [vmem:[#allocation14 + $0x10] sm:$0xf]
        %v1104 = vld [vmem:[#allocation14 + $0x14] sm:$0xf]
        %v1105 = vld [vmem:[#allocation14 + $0x18] sm:$0xf]
        %v1106 = vld [vmem:[#allocation14 + $0x1c] sm:$0xf]
        %v1107 = vld [vmem:[#allocation14 + $0x20] sm:$0xf]
        %v1108 = vld [vmem:[#allocation14 + $0x24] sm:$0xf]
        %v1109 = vld [vmem:[#allocation14 + $0x28] sm:$0xf]
        %v1110 = vld [vmem:[#allocation14 + $0x2c] sm:$0xf]
        %v1111 = vld [vmem:[#allocation14 + $0x30] sm:$0xf]
        %v1112 = vld [vmem:[#allocation14 + $0x34] sm:$0xf]
        %v1113 = vld [vmem:[#allocation14 + $0x38] sm:$0xf]
        %v1114 = vld [vmem:[#allocation14 + $0x3c] sm:$0xf]
        %v1115 = vld [vmem:[#allocation16] sm:$0x1]
        %v1116 = vld [vmem:[#allocation19] sm:$0xf]
        %v1117 = vld [vmem:[#allocation19 + $0x4] sm:$0xf]
        %v1118 = vld [vmem:[#allocation19 + $0x8] sm:$0xf]
        %v1119 = vld [vmem:[#allocation19 + $0xc] sm:$0xf]
        %v1120 = vld [vmem:[#allocation19 + $0x10] sm:$0xf]
        %v1121 = vld [vmem:[#allocation19 + $0x14] sm:$0xf]
        %v1122 = vld [vmem:[#allocation19 + $0x18] sm:$0xf]
        %v1123 = vld [vmem:[#allocation19 + $0x1c] sm:$0xf]
        %v1124 = vld [vmem:[#allocation19 + $0x20] sm:$0xf]
        %v1125 = vld [vmem:[#allocation19 + $0x24] sm:$0xf]
        %v1126 = vld [vmem:[#allocation19 + $0x28] sm:$0xf]
        %v1127 = vld [vmem:[#allocation19 + $0x2c] sm:$0xf]
        %v1128 = vld [vmem:[#allocation19 + $0x30] sm:$0xf]
        %v1129 = vld [vmem:[#allocation19 + $0x34] sm:$0xf]
        %v1130 = vld [vmem:[#allocation19 + $0x38] sm:$0xf]
        %v1131 = vld [vmem:[#allocation19 + $0x3c] sm:$0xf]
        %v1132 = vld [vmem:[#allocation20] sm:$0xf]
        %v1133 = vld [vmem:[#allocation20 + $0x4] sm:$0xf]
        %v1134 = vld [vmem:[#allocation20 + $0x8] sm:$0xf]
        %v1135 = vld [vmem:[#allocation20 + $0xc] sm:$0xf]
        %v1136 = vld [vmem:[#allocation20 + $0x10] sm:$0xf]
        %v1137 = vld [vmem:[#allocation20 + $0x14] sm:$0xf]
        %v1138 = vld [vmem:[#allocation20 + $0x18] sm:$0xf]
        %v1139 = vld [vmem:[#allocation20 + $0x1c] sm:$0xf]
        %v1140 = vld [vmem:[#allocation22] sm:$0xf]
        %v1141 = vld [vmem:[#allocation22 + $0x4] sm:$0xf]
        %v1142 = vld [vmem:[#allocation22 + $0x8] sm:$0xf]
        %v1143 = vld [vmem:[#allocation22 + $0xc] sm:$0xf]
        %v1144 = vld [vmem:[#allocation22 + $0x10] sm:$0xf]
        %v1145 = vld [vmem:[#allocation22 + $0x14] sm:$0xf]
        %v1146 = vld [vmem:[#allocation22 + $0x18] sm:$0xf]
        %v1147 = vld [vmem:[#allocation22 + $0x1c] sm:$0xf]
        %v1148 = vld [vmem:[#allocation23] sm:$0xf]
        %v1149 = vld [vmem:[#allocation23 + $0x4] sm:$0xf]
        %v1150 = vld [vmem:[#allocation23 + $0x8] sm:$0xf]
        %v1151 = vld [vmem:[#allocation23 + $0xc] sm:$0xf]
        %v1152 = vld [vmem:[#allocation23 + $0x10] sm:$0xf]
        %v1153 = vld [vmem:[#allocation23 + $0x14] sm:$0xf]
        %v1154 = vld [vmem:[#allocation23 + $0x18] sm:$0xf]
        %v1155 = vld [vmem:[#allocation23 + $0x1c] sm:$0xf]
        %v1156 = vld [vmem:[#allocation23 + $0x20] sm:$0xf]
        %v1157 = vld [vmem:[#allocation23 + $0x24] sm:$0xf]
        %v1158 = vld [vmem:[#allocation23 + $0x28] sm:$0xf]
        %v1159 = vld [vmem:[#allocation23 + $0x2c] sm:$0xf]
        %v1160 = vld [vmem:[#allocation23 + $0x30] sm:$0xf]
        %v1161 = vld [vmem:[#allocation23 + $0x34] sm:$0xf]
        %v1162 = vld [vmem:[#allocation23 + $0x38] sm:$0xf]
        %v1163 = vld [vmem:[#allocation23 + $0x3c] sm:$0xf]
        %v1164 = vld [vmem:[%s15] sm:$0x1]
        %v1165 = vld [vmem:[#allocation25] sm:$0xff]
        %v1166 = vld [vmem:[#allocation25 + $0x8] sm:$0xff]
        %v1167 = vld [vmem:[#allocation25 + $0x10] sm:$0xff]
        %v1168 = vld [vmem:[#allocation25 + $0x18] sm:$0xff]
        %v1169 = vld [vmem:[#allocation25 + $0x20] sm:$0xff]
        %v1170 = vld [vmem:[#allocation25 + $0x28] sm:$0xff]
        %v1171 = vld [vmem:[#allocation25 + $0x30] sm:$0xff]
        %v1172 = vld [vmem:[#allocation25 + $0x38] sm:$0xff]
        %v1173 = vld [vmem:[#allocation25 + $0x40] sm:$0xff]
        %v1174 = vld [vmem:[#allocation25 + $0x48] sm:$0xff]
        %v1175 = vld [vmem:[#allocation25 + $0x50] sm:$0xff]
        %v1176 = vld [vmem:[#allocation25 + $0x58] sm:$0xff]
        %v1177 = vld [vmem:[#allocation25 + $0x60] sm:$0xff]
        %v1178 = vld [vmem:[#allocation25 + $0x68] sm:$0xff]
        %v1179 = vld [vmem:[#allocation25 + $0x70] sm:$0xff]
        %v1180 = vld [vmem:[#allocation25 + $0x78] sm:$0xff]
        %v1181 = vld [vmem:[#allocation25 + $0x80] sm:$0xff]
        %v1182 = vld [vmem:[#allocation25 + $0x88] sm:$0xff]
        %v1183 = vld [vmem:[#allocation25 + $0x90] sm:$0xff]
        %v1184 = vld [vmem:[#allocation25 + $0x98] sm:$0xff]
        %v1185 = vld [vmem:[#allocation25 + $0xa0] sm:$0xff]
        %v1186 = vld [vmem:[#allocation25 + $0xa8] sm:$0xff]
        %v1187 = vld [vmem:[#allocation25 + $0xb0] sm:$0xff]
        %v1188 = vld [vmem:[#allocation25 + $0xb8] sm:$0xff]
        %v1189 = vld [vmem:[#allocation25 + $0xc0] sm:$0xff]
        %v1190 = vld [vmem:[#allocation25 + $0xc8] sm:$0xff]
        %v1191 = vld [vmem:[#allocation25 + $0xd0] sm:$0xff]
        %v1192 = vld [vmem:[#allocation25 + $0xd8] sm:$0xff]
        %v1193 = vld [vmem:[#allocation25 + $0xe0] sm:$0xff]
        %v1194 = vld [vmem:[#allocation25 + $0xe8] sm:$0xff]
        %v1195 = vld [vmem:[#allocation25 + $0xf0] sm:$0xff]
        %v1196 = vld [vmem:[#allocation25 + $0xf8] sm:$0xff]
        %v1197 = vld [vmem:[%s19] sm:$0xf]
        %v1198 = vld [vmem:[#allocation26] sm:$0xff]
        %v1199 = vld [vmem:[#allocation26 + $0x8] sm:$0xff]
        %v1200 = vld [vmem:[#allocation26 + $0x10] sm:$0xff]
        %v1201 = vld [vmem:[#allocation26 + $0x18] sm:$0xff]
        %v1202 = vld [vmem:[#allocation26 + $0x20] sm:$0xff]
        %v1203 = vld [vmem:[#allocation26 + $0x28] sm:$0xff]
        %v1204 = vld [vmem:[#allocation26 + $0x30] sm:$0xff]
        %v1205 = vld [vmem:[#allocation26 + $0x38] sm:$0xff]
        %v1206 = vld [vmem:[#allocation26 + $0x40] sm:$0xff]
        %v1207 = vld [vmem:[#allocation26 + $0x48] sm:$0xff]
        %v1208 = vld [vmem:[#allocation26 + $0x50] sm:$0xff]
        %v1209 = vld [vmem:[#allocation26 + $0x58] sm:$0xff]
        %v1210 = vld [vmem:[#allocation26 + $0x60] sm:$0xff]
        %v1211 = vld [vmem:[#allocation26 + $0x68] sm:$0xff]
        %v1212 = vld [vmem:[#allocation26 + $0x70] sm:$0xff]
        %v1213 = vld [vmem:[#allocation26 + $0x78] sm:$0xff]
        %v1214 = vld [vmem:[#allocation26 + $0x80] sm:$0xff]
        %v1215 = vld [vmem:[#allocation26 + $0x88] sm:$0xff]
        %v1216 = vld [vmem:[#allocation26 + $0x90] sm:$0xff]
        %v1217 = vld [vmem:[#allocation26 + $0x98] sm:$0xff]
        %v1218 = vld [vmem:[#allocation26 + $0xa0] sm:$0xff]
        %v1219 = vld [vmem:[#allocation26 + $0xa8] sm:$0xff]
        %v1220 = vld [vmem:[#allocation26 + $0xb0] sm:$0xff]
        %v1221 = vld [vmem:[#allocation26 + $0xb8] sm:$0xff]
        %v1222 = vld [vmem:[#allocation26 + $0xc0] sm:$0xff]
        %v1223 = vld [vmem:[#allocation26 + $0xc8] sm:$0xff]
        %v1224 = vld [vmem:[#allocation26 + $0xd0] sm:$0xff]
        %v1225 = vld [vmem:[#allocation26 + $0xd8] sm:$0xff]
        %v1226 = vld [vmem:[#allocation26 + $0xe0] sm:$0xff]
        %v1227 = vld [vmem:[#allocation26 + $0xe8] sm:$0xff]
        %v1228 = vld [vmem:[#allocation26 + $0xf0] sm:$0xff]
        %v1229 = vld [vmem:[#allocation26 + $0xf8] sm:$0xff]
        %v1230 = vld [vmem:[%s21] sm:$0xf]
        %v1231 = vld [vmem:[#allocation28] sm:$0xf]
        %v1232 = vld [vmem:[#allocation28 + $0x4] sm:$0xf]
        %v1233 = vld [vmem:[#allocation28 + $0x8] sm:$0xf]
        %v1234 = vld [vmem:[#allocation28 + $0xc] sm:$0xf]
        %v1235 = vld [vmem:[#allocation28 + $0x10] sm:$0xf]
        %v1236 = vld [vmem:[#allocation28 + $0x14] sm:$0xf]
        %v1237 = vld [vmem:[#allocation28 + $0x18] sm:$0xf]
        %v1238 = vld [vmem:[#allocation28 + $0x1c] sm:$0xf]
        %v1239 = vld [vmem:[#allocation28 + $0x20] sm:$0xf]
        %v1240 = vld [vmem:[#allocation28 + $0x24] sm:$0xf]
        %v1241 = vld [vmem:[#allocation28 + $0x28] sm:$0xf]
        %v1242 = vld [vmem:[#allocation28 + $0x2c] sm:$0xf]
        %v1243 = vld [vmem:[#allocation28 + $0x30] sm:$0xf]
        %v1244 = vld [vmem:[#allocation28 + $0x34] sm:$0xf]
        %v1245 = vld [vmem:[#allocation28 + $0x38] sm:$0xf]
        %v1246 = vld [vmem:[#allocation28 + $0x3c] sm:$0xf]
        %v1247 = vld [vmem:[#allocation28 + $0x40] sm:$0xf]
        %v1248 = vld [vmem:[#allocation28 + $0x44] sm:$0xf]
        %v1249 = vld [vmem:[#allocation28 + $0x48] sm:$0xf]
        %v1250 = vld [vmem:[#allocation28 + $0x4c] sm:$0xf]
        %v1251 = vld [vmem:[#allocation28 + $0x50] sm:$0xf]
        %v1252 = vld [vmem:[#allocation28 + $0x54] sm:$0xf]
        %v1253 = vld [vmem:[#allocation28 + $0x58] sm:$0xf]
        %v1254 = vld [vmem:[#allocation28 + $0x5c] sm:$0xf]
        %v1255 = vld [vmem:[#allocation28 + $0x60] sm:$0xf]
        %v1256 = vld [vmem:[#allocation28 + $0x64] sm:$0xf]
        %v1257 = vld [vmem:[#allocation28 + $0x68] sm:$0xf]
        %v1258 = vld [vmem:[#allocation28 + $0x6c] sm:$0xf]
        %v1259 = vld [vmem:[#allocation28 + $0x70] sm:$0xf]
        %v1260 = vld [vmem:[#allocation28 + $0x74] sm:$0xf]
        %v1261 = vld [vmem:[#allocation28 + $0x78] sm:$0xf]
        %v1262 = vld [vmem:[#allocation28 + $0x7c] sm:$0xf]
        %v1263 = vld [vmem:[#allocation28 + $0x80] sm:$0xf]
        %v1264 = vld [vmem:[#allocation28 + $0x84] sm:$0xf]
        %v1265 = vld [vmem:[#allocation28 + $0x88] sm:$0xf]
        %v1266 = vld [vmem:[#allocation28 + $0x8c] sm:$0xf]
        %v1267 = vld [vmem:[#allocation28 + $0x90] sm:$0xf]
        %v1268 = vld [vmem:[#allocation28 + $0x94] sm:$0xf]
        %v1269 = vld [vmem:[#allocation28 + $0x98] sm:$0xf]
        %v1270 = vld [vmem:[#allocation28 + $0x9c] sm:$0xf]
        %v1271 = vld [vmem:[#allocation28 + $0xa0] sm:$0xf]
        %v1272 = vld [vmem:[#allocation28 + $0xa4] sm:$0xf]
        %v1273 = vld [vmem:[#allocation28 + $0xa8] sm:$0xf]
        %v1274 = vld [vmem:[#allocation28 + $0xac] sm:$0xf]
        %v1275 = vld [vmem:[#allocation28 + $0xb0] sm:$0xf]
        %v1276 = vld [vmem:[#allocation28 + $0xb4] sm:$0xf]
        %v1277 = vld [vmem:[#allocation28 + $0xb8] sm:$0xf]
        %v1278 = vld [vmem:[#allocation28 + $0xbc] sm:$0xf]
        %v1279 = vld [vmem:[#allocation28 + $0xc0] sm:$0xf]
        %v1280 = vld [vmem:[#allocation28 + $0xc4] sm:$0xf]
        %v1281 = vld [vmem:[#allocation28 + $0xc8] sm:$0xf]
        %v1282 = vld [vmem:[#allocation28 + $0xcc] sm:$0xf]
        %v1283 = vld [vmem:[#allocation28 + $0xd0] sm:$0xf]
        %v1284 = vld [vmem:[#allocation28 + $0xd4] sm:$0xf]
        %v1285 = vld [vmem:[#allocation28 + $0xd8] sm:$0xf]
        %v1286 = vld [vmem:[#allocation28 + $0xdc] sm:$0xf]
        %v1287 = vld [vmem:[#allocation28 + $0xe0] sm:$0xf]
        %v1288 = vld [vmem:[#allocation28 + $0xe4] sm:$0xf]
        %v1289 = vld [vmem:[#allocation28 + $0xe8] sm:$0xf]
        %v1290 = vld [vmem:[#allocation28 + $0xec] sm:$0xf]
        %v1291 = vld [vmem:[#allocation28 + $0xf0] sm:$0xf]
        %v1292 = vld [vmem:[#allocation28 + $0xf4] sm:$0xf]
        %v1293 = vld [vmem:[#allocation28 + $0xf8] sm:$0xf]
        %v1294 = vld [vmem:[#allocation28 + $0xfc] sm:$0xf]
        %v1295 = vld [vmem:[%s23] sm:$0x1]
        %1296 = vadd.xlane.f32.xlu0 %v1040
        %v1297 = vpop.xlane.xlu0 %1296
        %1298 = vadd.xlane.f32.xlu0 %v1041
        %v1299 = vpop.xlane.xlu0 %1298
        %v1300 = vrcp.pop 128.0
        %v1301 = vmul.f32 128.0, %v1300
        %v1302 = vsub.f32 1.0, %v1301
        %v1303 = vmul.f32 %v1300, %v1302
        %v1304 = vadd.f32 %v1300, %v1303
        %vm1305 = vweird.f32 %v1300
        %v1306 = vsel %vm1305, %v1300, %v1304
        %v1307 = vmul.f32 %v1297, %v1306
        %v1308 = vmul.f32 %v1299, %v1306
        %v1309 = vsub.f32 %v1040, %v1307
        %v1310 = vsub.f32 %v1041, %v1308
        %v1311 = vmul.f32 %v1309, %v1309
        %v1312 = vmul.f32 %v1310, %v1310
        %1313 = vadd.xlane.f32.xlu0 %v1311
        %v1314 = vpop.xlane.xlu0 %1313
        %1315 = vadd.xlane.f32.xlu0 %v1312
        %v1316 = vpop.xlane.xlu0 %1315
        %v1317 = vmul.f32 %v1314, %v1306
        %v1318 = vmul.f32 %v1316, %v1306
        %v1319 = vadd.f32 %v1317, 1e-05
        %v1320 = vadd.f32 %v1318, 1e-05
        %v1321 = vrsqrt.pop %v1319
        %v1322 = vmul.f32 %v1321, %v1319
        %v1323 = vmul.f32 %v1322, %v1321
        %v1324 = vmul.f32 0.5, %v1323
        %v1325 = vsub.f32 1.5, %v1324
        %v1326 = vmul.f32 %v1321, %v1325
        %vm1327 = vweird.f32 %v1319
        %vm1328 = vweird.f32 %v1321
        %vm1329 = vmor %vm1327, %vm1328
        %v1330 = vsel %vm1329, %v1321, %v1326
        %v1331 = vrsqrt.pop %v1320
        %v1332 = vmul.f32 %v1331, %v1320
        %v1333 = vmul.f32 %v1332, %v1331
        %v1334 = vmul.f32 0.5, %v1333
        %v1335 = vsub.f32 1.5, %v1334
        %v1336 = vmul.f32 %v1331, %v1335
        %vm1337 = vweird.f32 %v1320
        %vm1338 = vweird.f32 %v1331
        %vm1339 = vmor %vm1337, %vm1338
        %v1340 = vsel %vm1339, %v1331, %v1336
        %v1341 = vmul.f32 %v1309, %v1330
        %v1342 = vmul.f32 %v1310, %v1340
        %v1344 = vperm.slane %v1045, 0
        %v1346 = vmul.f32 %v1341, %v1344
        %v1347 = vmul.f32 %v1342, %v1344
        %v1349 = vperm.slane %v1046, 0
        %v1351 = vadd.f32 %v1346, %v1349
        %v1352 = vadd.f32 %v1347, %v1349
        %v1353 = vpack.c.bf16 %v1352, %v1351
        %v1370 = vunpack.c.l.b16 %v1051
        %v1371 = vunpack.c.l.b16 %v1052
        %v1372 = vunpack.c.l.b16 %v1053
        %v1373 = vunpack.c.l.b16 %v1054
        %v1374 = vunpack.c.l.b16 %v1055
        %v1375 = vunpack.c.l.b16 %v1056
        %v1376 = vunpack.c.l.b16 %v1057
        %v1377 = vunpack.c.l.b16 %v1058
        %v1378 = vunpack.c.l.b16 %v1059
        %v1379 = vunpack.c.l.b16 %v1060
        %v1380 = vunpack.c.l.b16 %v1061
        %v1381 = vunpack.c.l.b16 %v1062
        %v1382 = vunpack.c.l.b16 %v1063
        %v1383 = vunpack.c.l.b16 %v1064
        %v1384 = vunpack.c.l.b16 %v1065
        %v1385 = vunpack.c.l.b16 %v1066
        %v1386 = vpack.c.b16 %v1371, %v1370
        %v1387 = vpack.c.b16 %v1373, %v1372
        %v1388 = vpack.c.b16 %v1375, %v1374
        %v1389 = vpack.c.b16 %v1377, %v1376
        %v1390 = vpack.c.b16 %v1379, %v1378
        %v1391 = vpack.c.b16 %v1381, %v1380
        %v1392 = vpack.c.b16 %v1383, %v1382
        %v1393 = vpack.c.b16 %v1385, %v1384
        %1402 = vmatpush.bf16.msra.mxu0 %v1393
        %1403 = vmatpush.bf16.msra.mxu0 %v1392
        %1404 = vmatpush.bf16.msra.mxu0 %v1391
        %1405 = vmatpush.bf16.msra.mxu0 %v1390
        %1406 = vmatpush.bf16.msra.mxu0 %v1389
        %1407 = vmatpush.bf16.msra.mxu0 %v1388
        %1408 = vmatpush.bf16.msra.mxu0 %v1387
        %1409 = vmatpush.bf16.msra.mxu0 %v1386
        %1410 = vmatmul.bf16.gmra.mxu0 %v1353
        %v1411 = vpop.f32.mrf.mxu0
        %v1412 = vadd.f32 0.0, %v1411
        %v1413 = vpop.f32.mrf.mxu0
        %v1414 = vadd.f32 0.0, %v1413
        %1415 = vdwg.mxu0
        %v1416 = vmul.f32 %v1412, 0.17677669
        %v1417 = vmul.f32 %v1414, 0.17677669
        %v1434 = vunpack.c.l.b16 %v1067
        %v1435 = vunpack.c.l.b16 %v1068
        %v1436 = vunpack.c.l.b16 %v1069
        %v1437 = vunpack.c.l.b16 %v1070
        %v1438 = vunpack.c.l.b16 %v1071
        %v1439 = vunpack.c.l.b16 %v1072
        %v1440 = vunpack.c.l.b16 %v1073
        %v1441 = vunpack.c.l.b16 %v1074
        %v1442 = vunpack.c.l.b16 %v1075
        %v1443 = vunpack.c.l.b16 %v1076
        %v1444 = vunpack.c.l.b16 %v1077
        %v1445 = vunpack.c.l.b16 %v1078
        %v1446 = vunpack.c.l.b16 %v1079
        %v1447 = vunpack.c.l.b16 %v1080
        %v1448 = vunpack.c.l.b16 %v1081
        %v1449 = vunpack.c.l.b16 %v1082
        %v1450 = vpack.c.b16 %v1435, %v1434
        %v1451 = vpack.c.b16 %v1437, %v1436
        %v1452 = vpack.c.b16 %v1439, %v1438
        %v1453 = vpack.c.b16 %v1441, %v1440
        %v1454 = vpack.c.b16 %v1443, %v1442
        %v1455 = vpack.c.b16 %v1445, %v1444
        %v1456 = vpack.c.b16 %v1447, %v1446
        %v1457 = vpack.c.b16 %v1449, %v1448
        %1466 = vmatpush.bf16.msra.mxu0 %v1457
        %1467 = vmatpush.bf16.msra.mxu0 %v1456
        %1468 = vmatpush.bf16.msra.mxu0 %v1455
        %1469 = vmatpush.bf16.msra.mxu0 %v1454
        %1470 = vmatpush.bf16.msra.mxu0 %v1453
        %1471 = vmatpush.bf16.msra.mxu0 %v1452
        %1472 = vmatpush.bf16.msra.mxu0 %v1451
        %1473 = vmatpush.bf16.msra.mxu0 %v1450
        %1474 = vmatmul.bf16.gmra.mxu0 %v1353
        %v1475 = vpop.f32.mrf.mxu0
        %v1476 = vadd.f32 0.0, %v1475
        %v1477 = vpop.f32.mrf.mxu0
        %v1478 = vadd.f32 0.0, %v1477
        %1479 = vdwg.mxu0
        %v1496 = vunpack.c.l.b16 %v1083
        %v1497 = vunpack.c.l.b16 %v1084
        %v1498 = vunpack.c.l.b16 %v1085
        %v1499 = vunpack.c.l.b16 %v1086
        %v1500 = vunpack.c.l.b16 %v1087
        %v1501 = vunpack.c.l.b16 %v1088
        %v1502 = vunpack.c.l.b16 %v1089
        %v1503 = vunpack.c.l.b16 %v1090
        %v1504 = vunpack.c.l.b16 %v1091
        %v1505 = vunpack.c.l.b16 %v1092
        %v1506 = vunpack.c.l.b16 %v1093
        %v1507 = vunpack.c.l.b16 %v1094
        %v1508 = vunpack.c.l.b16 %v1095
        %v1509 = vunpack.c.l.b16 %v1096
        %v1510 = vunpack.c.l.b16 %v1097
        %v1511 = vunpack.c.l.b16 %v1098
        %v1512 = vpack.c.b16 %v1497, %v1496
        %v1513 = vpack.c.b16 %v1499, %v1498
        %v1514 = vpack.c.b16 %v1501, %v1500
        %v1515 = vpack.c.b16 %v1503, %v1502
        %v1516 = vpack.c.b16 %v1505, %v1504
        %v1517 = vpack.c.b16 %v1507, %v1506
        %v1518 = vpack.c.b16 %v1509, %v1508
        %v1519 = vpack.c.b16 %v1511, %v1510
        %1528 = vmatpush.bf16.msra.mxu0 %v1519
        %1529 = vmatpush.bf16.msra.mxu0 %v1518
        %1530 = vmatpush.bf16.msra.mxu0 %v1517
        %1531 = vmatpush.bf16.msra.mxu0 %v1516
        %1532 = vmatpush.bf16.msra.mxu0 %v1515
        %1533 = vmatpush.bf16.msra.mxu0 %v1514
        %1534 = vmatpush.bf16.msra.mxu0 %v1513
        %1535 = vmatpush.bf16.msra.mxu0 %v1512
        %1536 = vmatmul.bf16.gmra.mxu0 %v1353
        %v1537 = vpop.f32.mrf.mxu0
        %v1538 = vadd.f32 0.0, %v1537
        %v1539 = vpop.f32.mrf.mxu0
        %v1540 = vadd.f32 0.0, %v1539
        %1541 = vdwg.mxu0
        %1544 = vrot.lane.b32.xlu0 %v1416, 96
        %v1545 = vpop.permute.xlu0 %1544
        %1546 = vrot.lane.b32.xlu0 %v1417, 96
        %v1547 = vpop.permute.xlu0 %1546
        %1550 = vrot.lane.b32.xlu0 %v1416, 64
        %v1551 = vpop.permute.xlu0 %1550
        %1552 = vrot.lane.b32.xlu0 %v1417, 64
        %v1553 = vpop.permute.xlu0 %1552
        %1556 = vrot.lane.b32.xlu0 %v1416, 32
        %v1557 = vpop.permute.xlu0 %1556
        %1558 = vrot.lane.b32.xlu0 %v1417, 32
        %v1559 = vpop.permute.xlu0 %1558
        %v1562 = vrot.slane %v1551, 4
        %vm1563 = vcmask 1047556
        %v1564 = vsel %vm1563, %v1562, %v1416
        %v1565 = vrot.slane %v1416, 4
        %v1566 = vsel %vm1563, %v1551, %v1565
        %v1568 = vunpack.c.l.s4 1983009808
        %v1569 = vunpack.c.0.s8 %v1568
        %v1570 = vperm.slane %v1564, %v1569
        %v1572 = vunpack.c.l.s4 1983009808
        %v1573 = vunpack.c.0.s8 %v1572
        %v1574 = vperm.slane %v1566, %v1573
        %v1575 = vrot.slane %v1557, 4
        %v1576 = vsel %vm1563, %v1575, %v1545
        %v1577 = vrot.slane %v1545, 4
        %v1578 = vsel %vm1563, %v1557, %v1577
        %v1580 = vunpack.c.l.s4 1983009808
        %v1581 = vunpack.c.0.s8 %v1580
        %v1582 = vperm.slane %v1576, %v1581
        %v1584 = vunpack.c.l.s4 1983009808
        %v1585 = vunpack.c.0.s8 %v1584
        %v1586 = vperm.slane %v1578, %v1585
        %v1587 = vrot.slane %v1582, 4
        %v1588 = vsel %vm1563, %v1587, %v1570
        %v1589 = vrot.slane %v1570, 4
        %v1590 = vsel %vm1563, %v1582, %v1589
        %v1592 = vunpack.c.l.s4 1934713408
        %v1593 = vunpack.c.0.s8 %v1592
        %v1594 = vperm.slane %v1588, %v1593
        %v1596 = vunpack.c.l.s4 1934713408
        %v1597 = vunpack.c.0.s8 %v1596
        %v1598 = vperm.slane %v1590, %v1597
        %v1599 = vrot.slane %v1586, 4
        %v1600 = vsel %vm1563, %v1599, %v1574
        %v1601 = vrot.slane %v1574, 4
        %v1602 = vsel %vm1563, %v1586, %v1601
        %v1604 = vunpack.c.l.s4 1934713408
        %v1605 = vunpack.c.0.s8 %v1604
        %v1606 = vperm.slane %v1600, %v1605
        %v1608 = vunpack.c.l.s4 1934713408
        %v1609 = vunpack.c.0.s8 %v1608
        %v1610 = vperm.slane %v1602, %v1609
        %v1611 = vrot.slane %v1594, 4
        %v1612 = vsel %vm1563, 0.0, %v1611
        %v1613 = vrot.slane %v1598, 4
        %v1614 = vsel %vm1563, 0.0, %v1613
        %v1615 = vrot.slane %v1606, 4
        %v1616 = vsel %vm1563, 0.0, %v1615
        %v1617 = vrot.slane %v1610, 4
        %v1618 = vsel %vm1563, 0.0, %v1617
        %v1619 = vrot.slane %v1553, 4
        %v1620 = vsel %vm1563, %v1619, %v1417
        %v1621 = vrot.slane %v1417, 4
        %v1622 = vsel %vm1563, %v1553, %v1621
        %v1624 = vunpack.c.l.s4 1983009808
        %v1625 = vunpack.c.0.s8 %v1624
        %v1626 = vperm.slane %v1620, %v1625
        %v1628 = vunpack.c.l.s4 1983009808
        %v1629 = vunpack.c.0.s8 %v1628
        %v1630 = vperm.slane %v1622, %v1629
        %v1631 = vrot.slane %v1559, 4
        %v1632 = vsel %vm1563, %v1631, %v1547
        %v1633 = vrot.slane %v1547, 4
        %v1634 = vsel %vm1563, %v1559, %v1633
        %v1636 = vunpack.c.l.s4 1983009808
        %v1637 = vunpack.c.0.s8 %v1636
        %v1638 = vperm.slane %v1632, %v1637
        %v1640 = vunpack.c.l.s4 1983009808
        %v1641 = vunpack.c.0.s8 %v1640
        %v1642 = vperm.slane %v1634, %v1641
        %v1643 = vrot.slane %v1638, 4
        %v1644 = vsel %vm1563, %v1643, %v1626
        %v1645 = vrot.slane %v1626, 4
        %v1646 = vsel %vm1563, %v1638, %v1645
        %v1648 = vunpack.c.l.s4 1934713408
        %v1649 = vunpack.c.0.s8 %v1648
        %v1650 = vperm.slane %v1644, %v1649
        %v1652 = vunpack.c.l.s4 1934713408
        %v1653 = vunpack.c.0.s8 %v1652
        %v1654 = vperm.slane %v1646, %v1653
        %v1655 = vrot.slane %v1642, 4
        %v1656 = vsel %vm1563, %v1655, %v1630
        %v1657 = vrot.slane %v1630, 4
        %v1658 = vsel %vm1563, %v1642, %v1657
        %v1660 = vunpack.c.l.s4 1934713408
        %v1661 = vunpack.c.0.s8 %v1660
        %v1662 = vperm.slane %v1656, %v1661
        %v1664 = vunpack.c.l.s4 1934713408
        %v1665 = vunpack.c.0.s8 %v1664
        %v1666 = vperm.slane %v1658, %v1665
        %v1667 = vrot.slane %v1650, 4
        %v1668 = vsel %vm1563, 0.0, %v1667
        %v1669 = vrot.slane %v1654, 4
        %v1670 = vsel %vm1563, 0.0, %v1669
        %v1671 = vrot.slane %v1662, 4
        %v1672 = vsel %vm1563, 0.0, %v1671
        %v1673 = vrot.slane %v1666, 4
        %v1674 = vsel %vm1563, 0.0, %v1673
        %v1675 = vsel %vm1563, %v1613, %v1594
        %v1677 = vunpack.c.l.s4 1983009808
        %v1678 = vunpack.c.0.s8 %v1677
        %v1679 = vperm.slane %v1675, %v1678
        %v1680 = vrot.slane %v1614, 4
        %v1681 = vsel %vm1563, %v1680, %v1612
        %v1683 = vunpack.c.l.s4 1983009808
        %v1684 = vunpack.c.0.s8 %v1683
        %v1685 = vperm.slane %v1681, %v1684
        %v1686 = vsel %vm1563, %v1617, %v1606
        %v1688 = vunpack.c.l.s4 1983009808
        %v1689 = vunpack.c.0.s8 %v1688
        %v1690 = vperm.slane %v1686, %v1689
        %v1691 = vrot.slane %v1618, 4
        %v1692 = vsel %vm1563, %v1691, %v1616
        %v1694 = vunpack.c.l.s4 1983009808
        %v1695 = vunpack.c.0.s8 %v1694
        %v1696 = vperm.slane %v1692, %v1695
        %v1697 = vrot.slane %v1685, 4
        %v1698 = vsel %vm1563, %v1697, %v1679
        %v1699 = vrot.slane %v1679, 4
        %v1700 = vsel %vm1563, %v1685, %v1699
        %v1702 = vunpack.c.l.s4 1934713408
        %v1703 = vunpack.c.0.s8 %v1702
        %v1704 = vperm.slane %v1698, %v1703
        %v1706 = vunpack.c.l.s4 1934713408
        %v1707 = vunpack.c.0.s8 %v1706
        %v1708 = vperm.slane %v1700, %v1707
        %v1709 = vrot.slane %v1696, 4
        %v1710 = vsel %vm1563, %v1709, %v1690
        %v1711 = vrot.slane %v1690, 4
        %v1712 = vsel %vm1563, %v1696, %v1711
        %v1714 = vunpack.c.l.s4 1934713408
        %v1715 = vunpack.c.0.s8 %v1714
        %v1716 = vperm.slane %v1710, %v1715
        %v1718 = vunpack.c.l.s4 1934713408
        %v1719 = vunpack.c.0.s8 %v1718
        %v1720 = vperm.slane %v1712, %v1719
        %v1721 = vrot.slane %v1716, 4
        %v1722 = vsel %vm1563, %v1721, %v1704
        %v1723 = vrot.slane %v1704, 4
        %v1724 = vsel %vm1563, %v1716, %v1723
        %v1725 = vrot.slane %v1720, 4
        %v1726 = vsel %vm1563, %v1725, %v1708
        %v1727 = vrot.slane %v1708, 4
        %v1728 = vsel %vm1563, %v1720, %v1727
        %v1729 = vsel %vm1563, %v1669, %v1650
        %v1731 = vunpack.c.l.s4 1983009808
        %v1732 = vunpack.c.0.s8 %v1731
        %v1733 = vperm.slane %v1729, %v1732
        %v1734 = vrot.slane %v1670, 4
        %v1735 = vsel %vm1563, %v1734, %v1668
        %v1737 = vunpack.c.l.s4 1983009808
        %v1738 = vunpack.c.0.s8 %v1737
        %v1739 = vperm.slane %v1735, %v1738
        %v1740 = vsel %vm1563, %v1673, %v1662
        %v1742 = vunpack.c.l.s4 1983009808
        %v1743 = vunpack.c.0.s8 %v1742
        %v1744 = vperm.slane %v1740, %v1743
        %v1745 = vrot.slane %v1674, 4
        %v1746 = vsel %vm1563, %v1745, %v1672
        %v1748 = vunpack.c.l.s4 1983009808
        %v1749 = vunpack.c.0.s8 %v1748
        %v1750 = vperm.slane %v1746, %v1749
        %v1751 = vrot.slane %v1739, 4
        %v1752 = vsel %vm1563, %v1751, %v1733
        %v1753 = vrot.slane %v1733, 4
        %v1754 = vsel %vm1563, %v1739, %v1753
        %v1756 = vunpack.c.l.s4 1934713408
        %v1757 = vunpack.c.0.s8 %v1756
        %v1758 = vperm.slane %v1752, %v1757
        %v1760 = vunpack.c.l.s4 1934713408
        %v1761 = vunpack.c.0.s8 %v1760
        %v1762 = vperm.slane %v1754, %v1761
        %v1763 = vrot.slane %v1750, 4
        %v1764 = vsel %vm1563, %v1763, %v1744
        %v1765 = vrot.slane %v1744, 4
        %v1766 = vsel %vm1563, %v1750, %v1765
        %v1768 = vunpack.c.l.s4 1934713408
        %v1769 = vunpack.c.0.s8 %v1768
        %v1770 = vperm.slane %v1764, %v1769
        %v1772 = vunpack.c.l.s4 1934713408
        %v1773 = vunpack.c.0.s8 %v1772
        %v1774 = vperm.slane %v1766, %v1773
        %v1775 = vrot.slane %v1770, 4
        %v1776 = vsel %vm1563, %v1775, %v1758
        %v1777 = vrot.slane %v1758, 4
        %v1778 = vsel %vm1563, %v1770, %v1777
        %v1779 = vrot.slane %v1774, 4
        %v1780 = vsel %vm1563, %v1779, %v1762
        %v1781 = vrot.slane %v1762, 4
        %v1782 = vsel %vm1563, %v1774, %v1781
        %v1783 = vpack.c.bf16 %v1722, %v1722
        %v1784 = vpack.c.bf16 %v1776, %v1776
        %v1785 = vpack.c.bf16 %v1724, %v1724
        %v1786 = vpack.c.bf16 %v1778, %v1778
        %v1787 = vpack.c.bf16 %v1726, %v1726
        %v1788 = vpack.c.bf16 %v1780, %v1780
        %v1789 = vpack.c.bf16 %v1728, %v1728
        %v1790 = vpack.c.bf16 %v1782, %v1782
        %1793 = vrot.lane.b32.xlu0 %v1476, 96
        %v1794 = vpop.permute.xlu0 %1793
        %1795 = vrot.lane.b32.xlu0 %v1478, 96
        %v1796 = vpop.permute.xlu0 %1795
        %1799 = vrot.lane.b32.xlu0 %v1476, 64
        %v1800 = vpop.permute.xlu0 %1799
        %1801 = vrot.lane.b32.xlu0 %v1478, 64
        %v1802 = vpop.permute.xlu0 %1801
        %1805 = vrot.lane.b32.xlu0 %v1476, 32
        %v1806 = vpop.permute.xlu0 %1805
        %1807 = vrot.lane.b32.xlu0 %v1478, 32
        %v1808 = vpop.permute.xlu0 %1807
        %v1811 = vrot.slane %v1800, 4
        %v1812 = vsel %vm1563, %v1811, %v1476
        %v1813 = vrot.slane %v1476, 4
        %v1814 = vsel %vm1563, %v1800, %v1813
        %v1816 = vunpack.c.l.s4 1983009808
        %v1817 = vunpack.c.0.s8 %v1816
        %v1818 = vperm.slane %v1812, %v1817
        %v1820 = vunpack.c.l.s4 1983009808
        %v1821 = vunpack.c.0.s8 %v1820
        %v1822 = vperm.slane %v1814, %v1821
        %v1823 = vrot.slane %v1806, 4
        %v1824 = vsel %vm1563, %v1823, %v1794
        %v1825 = vrot.slane %v1794, 4
        %v1826 = vsel %vm1563, %v1806, %v1825
        %v1828 = vunpack.c.l.s4 1983009808
        %v1829 = vunpack.c.0.s8 %v1828
        %v1830 = vperm.slane %v1824, %v1829
        %v1832 = vunpack.c.l.s4 1983009808
        %v1833 = vunpack.c.0.s8 %v1832
        %v1834 = vperm.slane %v1826, %v1833
        %v1835 = vrot.slane %v1830, 4
        %v1836 = vsel %vm1563, %v1835, %v1818
        %v1837 = vrot.slane %v1818, 4
        %v1838 = vsel %vm1563, %v1830, %v1837
        %v1840 = vunpack.c.l.s4 1934713408
        %v1841 = vunpack.c.0.s8 %v1840
        %v1842 = vperm.slane %v1836, %v1841
        %v1844 = vunpack.c.l.s4 1934713408
        %v1845 = vunpack.c.0.s8 %v1844
        %v1846 = vperm.slane %v1838, %v1845
        %v1847 = vrot.slane %v1834, 4
        %v1848 = vsel %vm1563, %v1847, %v1822
        %v1849 = vrot.slane %v1822, 4
        %v1850 = vsel %vm1563, %v1834, %v1849
        %v1852 = vunpack.c.l.s4 1934713408
        %v1853 = vunpack.c.0.s8 %v1852
        %v1854 = vperm.slane %v1848, %v1853
        %v1856 = vunpack.c.l.s4 1934713408
        %v1857 = vunpack.c.0.s8 %v1856
        %v1858 = vperm.slane %v1850, %v1857
        %v1859 = vrot.slane %v1842, 4
        %v1860 = vsel %vm1563, 0.0, %v1859
        %v1861 = vrot.slane %v1846, 4
        %v1862 = vsel %vm1563, 0.0, %v1861
        %v1863 = vrot.slane %v1854, 4
        %v1864 = vsel %vm1563, 0.0, %v1863
        %v1865 = vrot.slane %v1858, 4
        %v1866 = vsel %vm1563, 0.0, %v1865
        %v1867 = vrot.slane %v1802, 4
        %v1868 = vsel %vm1563, %v1867, %v1478
        %v1869 = vrot.slane %v1478, 4
        %v1870 = vsel %vm1563, %v1802, %v1869
        %v1872 = vunpack.c.l.s4 1983009808
        %v1873 = vunpack.c.0.s8 %v1872
        %v1874 = vperm.slane %v1868, %v1873
        %v1876 = vunpack.c.l.s4 1983009808
        %v1877 = vunpack.c.0.s8 %v1876
        %v1878 = vperm.slane %v1870, %v1877
        %v1879 = vrot.slane %v1808, 4
        %v1880 = vsel %vm1563, %v1879, %v1796
        %v1881 = vrot.slane %v1796, 4
        %v1882 = vsel %vm1563, %v1808, %v1881
        %v1884 = vunpack.c.l.s4 1983009808
        %v1885 = vunpack.c.0.s8 %v1884
        %v1886 = vperm.slane %v1880, %v1885
        %v1888 = vunpack.c.l.s4 1983009808
        %v1889 = vunpack.c.0.s8 %v1888
        %v1890 = vperm.slane %v1882, %v1889
        %v1891 = vrot.slane %v1886, 4
        %v1892 = vsel %vm1563, %v1891, %v1874
        %v1893 = vrot.slane %v1874, 4
        %v1894 = vsel %vm1563, %v1886, %v1893
        %v1896 = vunpack.c.l.s4 1934713408
        %v1897 = vunpack.c.0.s8 %v1896
        %v1898 = vperm.slane %v1892, %v1897
        %v1900 = vunpack.c.l.s4 1934713408
        %v1901 = vunpack.c.0.s8 %v1900
        %v1902 = vperm.slane %v1894, %v1901
        %v1903 = vrot.slane %v1890, 4
        %v1904 = vsel %vm1563, %v1903, %v1878
        %v1905 = vrot.slane %v1878, 4
        %v1906 = vsel %vm1563, %v1890, %v1905
        %v1908 = vunpack.c.l.s4 1934713408
        %v1909 = vunpack.c.0.s8 %v1908
        %v1910 = vperm.slane %v1904, %v1909
        %v1912 = vunpack.c.l.s4 1934713408
        %v1913 = vunpack.c.0.s8 %v1912
        %v1914 = vperm.slane %v1906, %v1913
        %v1915 = vrot.slane %v1898, 4
        %v1916 = vsel %vm1563, 0.0, %v1915
        %v1917 = vrot.slane %v1902, 4
        %v1918 = vsel %vm1563, 0.0, %v1917
        %v1919 = vrot.slane %v1910, 4
        %v1920 = vsel %vm1563, 0.0, %v1919
        %v1921 = vrot.slane %v1914, 4
        %v1922 = vsel %vm1563, 0.0, %v1921
        %v1923 = vsel %vm1563, %v1861, %v1842
        %v1925 = vunpack.c.l.s4 1983009808
        %v1926 = vunpack.c.0.s8 %v1925
        %v1927 = vperm.slane %v1923, %v1926
        %v1928 = vrot.slane %v1862, 4
        %v1929 = vsel %vm1563, %v1928, %v1860
        %v1931 = vunpack.c.l.s4 1983009808
        %v1932 = vunpack.c.0.s8 %v1931
        %v1933 = vperm.slane %v1929, %v1932
        %v1934 = vsel %vm1563, %v1865, %v1854
        %v1936 = vunpack.c.l.s4 1983009808
        %v1937 = vunpack.c.0.s8 %v1936
        %v1938 = vperm.slane %v1934, %v1937
        %v1939 = vrot.slane %v1866, 4
        %v1940 = vsel %vm1563, %v1939, %v1864
        %v1942 = vunpack.c.l.s4 1983009808
        %v1943 = vunpack.c.0.s8 %v1942
        %v1944 = vperm.slane %v1940, %v1943
        %v1945 = vrot.slane %v1933, 4
        %v1946 = vsel %vm1563, %v1945, %v1927
        %v1947 = vrot.slane %v1927, 4
        %v1948 = vsel %vm1563, %v1933, %v1947
        %v1950 = vunpack.c.l.s4 1934713408
        %v1951 = vunpack.c.0.s8 %v1950
        %v1952 = vperm.slane %v1946, %v1951
        %v1954 = vunpack.c.l.s4 1934713408
        %v1955 = vunpack.c.0.s8 %v1954
        %v1956 = vperm.slane %v1948, %v1955
        %v1957 = vrot.slane %v1944, 4
        %v1958 = vsel %vm1563, %v1957, %v1938
        %v1959 = vrot.slane %v1938, 4
        %v1960 = vsel %vm1563, %v1944, %v1959
        %v1962 = vunpack.c.l.s4 1934713408
        %v1963 = vunpack.c.0.s8 %v1962
        %v1964 = vperm.slane %v1958, %v1963
        %v1966 = vunpack.c.l.s4 1934713408
        %v1967 = vunpack.c.0.s8 %v1966
        %v1968 = vperm.slane %v1960, %v1967
        %v1969 = vrot.slane %v1964, 4
        %v1970 = vsel %vm1563, %v1969, %v1952
        %v1971 = vrot.slane %v1952, 4
        %v1972 = vsel %vm1563, %v1964, %v1971
        %v1973 = vrot.slane %v1968, 4
        %v1974 = vsel %vm1563, %v1973, %v1956
        %v1975 = vrot.slane %v1956, 4
        %v1976 = vsel %vm1563, %v1968, %v1975
        %v1977 = vsel %vm1563, %v1917, %v1898
        %v1979 = vunpack.c.l.s4 1983009808
        %v1980 = vunpack.c.0.s8 %v1979
        %v1981 = vperm.slane %v1977, %v1980
        %v1982 = vrot.slane %v1918, 4
        %v1983 = vsel %vm1563, %v1982, %v1916
        %v1985 = vunpack.c.l.s4 1983009808
        %v1986 = vunpack.c.0.s8 %v1985
        %v1987 = vperm.slane %v1983, %v1986
        %v1988 = vsel %vm1563, %v1921, %v1910
        %v1990 = vunpack.c.l.s4 1983009808
        %v1991 = vunpack.c.0.s8 %v1990
        %v1992 = vperm.slane %v1988, %v1991
        %v1993 = vrot.slane %v1922, 4
        %v1994 = vsel %vm1563, %v1993, %v1920
        %v1996 = vunpack.c.l.s4 1983009808
        %v1997 = vunpack.c.0.s8 %v1996
        %v1998 = vperm.slane %v1994, %v1997
        %v1999 = vrot.slane %v1987, 4
        %v2000 = vsel %vm1563, %v1999, %v1981
        %v2001 = vrot.slane %v1981, 4
        %v2002 = vsel %vm1563, %v1987, %v2001
        %v2004 = vunpack.c.l.s4 1934713408
        %v2005 = vunpack.c.0.s8 %v2004
        %v2006 = vperm.slane %v2000, %v2005
        %v2008 = vunpack.c.l.s4 1934713408
        %v2009 = vunpack.c.0.s8 %v2008
        %v2010 = vperm.slane %v2002, %v2009
        %v2011 = vrot.slane %v1998, 4
        %v2012 = vsel %vm1563, %v2011, %v1992
        %v2013 = vrot.slane %v1992, 4
        %v2014 = vsel %vm1563, %v1998, %v2013
        %v2016 = vunpack.c.l.s4 1934713408
        %v2017 = vunpack.c.0.s8 %v2016
        %v2018 = vperm.slane %v2012, %v2017
        %v2020 = vunpack.c.l.s4 1934713408
        %v2021 = vunpack.c.0.s8 %v2020
        %v2022 = vperm.slane %v2014, %v2021
        %v2023 = vrot.slane %v2018, 4
        %v2024 = vsel %vm1563, %v2023, %v2006
        %v2025 = vrot.slane %v2006, 4
        %v2026 = vsel %vm1563, %v2018, %v2025
        %v2027 = vrot.slane %v2022, 4
        %v2028 = vsel %vm1563, %v2027, %v2010
        %v2029 = vrot.slane %v2010, 4
        %v2030 = vsel %vm1563, %v2022, %v2029
        %v2031 = vpack.c.bf16 %v1970, %v1970
        %v2032 = vpack.c.bf16 %v2024, %v2024
        %v2033 = vpack.c.bf16 %v1972, %v1972
        %v2034 = vpack.c.bf16 %v2026, %v2026
        %v2035 = vpack.c.bf16 %v1974, %v1974
        %v2036 = vpack.c.bf16 %v2028, %v2028
        %v2037 = vpack.c.bf16 %v1976, %v1976
        %v2038 = vpack.c.bf16 %v2030, %v2030
        %2041 = vrot.lane.b32.xlu0 %v1538, 96
        %v2042 = vpop.permute.xlu0 %2041
        %2043 = vrot.lane.b32.xlu0 %v1540, 96
        %v2044 = vpop.permute.xlu0 %2043
        %2047 = vrot.lane.b32.xlu0 %v1538, 64
        %v2048 = vpop.permute.xlu0 %2047
        %2049 = vrot.lane.b32.xlu0 %v1540, 64
        %v2050 = vpop.permute.xlu0 %2049
        %2053 = vrot.lane.b32.xlu0 %v1538, 32
        %v2054 = vpop.permute.xlu0 %2053
        %2055 = vrot.lane.b32.xlu0 %v1540, 32
        %v2056 = vpop.permute.xlu0 %2055
        %v2059 = vrot.slane %v2048, 4
        %v2060 = vsel %vm1563, %v2059, %v1538
        %v2061 = vrot.slane %v1538, 4
        %v2062 = vsel %vm1563, %v2048, %v2061
        %v2064 = vunpack.c.l.s4 1983009808
        %v2065 = vunpack.c.0.s8 %v2064
        %v2066 = vperm.slane %v2060, %v2065
        %v2068 = vunpack.c.l.s4 1983009808
        %v2069 = vunpack.c.0.s8 %v2068
        %v2070 = vperm.slane %v2062, %v2069
        %v2071 = vrot.slane %v2054, 4
        %v2072 = vsel %vm1563, %v2071, %v2042
        %v2073 = vrot.slane %v2042, 4
        %v2074 = vsel %vm1563, %v2054, %v2073
        %v2076 = vunpack.c.l.s4 1983009808
        %v2077 = vunpack.c.0.s8 %v2076
        %v2078 = vperm.slane %v2072, %v2077
        %v2080 = vunpack.c.l.s4 1983009808
        %v2081 = vunpack.c.0.s8 %v2080
        %v2082 = vperm.slane %v2074, %v2081
        %v2083 = vrot.slane %v2078, 4
        %v2084 = vsel %vm1563, %v2083, %v2066
        %v2085 = vrot.slane %v2066, 4
        %v2086 = vsel %vm1563, %v2078, %v2085
        %v2088 = vunpack.c.l.s4 1934713408
        %v2089 = vunpack.c.0.s8 %v2088
        %v2090 = vperm.slane %v2084, %v2089
        %v2092 = vunpack.c.l.s4 1934713408
        %v2093 = vunpack.c.0.s8 %v2092
        %v2094 = vperm.slane %v2086, %v2093
        %v2095 = vrot.slane %v2082, 4
        %v2096 = vsel %vm1563, %v2095, %v2070
        %v2097 = vrot.slane %v2070, 4
        %v2098 = vsel %vm1563, %v2082, %v2097
        %v2100 = vunpack.c.l.s4 1934713408
        %v2101 = vunpack.c.0.s8 %v2100
        %v2102 = vperm.slane %v2096, %v2101
        %v2104 = vunpack.c.l.s4 1934713408
        %v2105 = vunpack.c.0.s8 %v2104
        %v2106 = vperm.slane %v2098, %v2105
        %v2107 = vrot.slane %v2090, 4
        %v2108 = vsel %vm1563, 0.0, %v2107
        %v2109 = vrot.slane %v2094, 4
        %v2110 = vsel %vm1563, 0.0, %v2109
        %v2111 = vrot.slane %v2102, 4
        %v2112 = vsel %vm1563, 0.0, %v2111
        %v2113 = vrot.slane %v2106, 4
        %v2114 = vsel %vm1563, 0.0, %v2113
        %v2115 = vrot.slane %v2050, 4
        %v2116 = vsel %vm1563, %v2115, %v1540
        %v2117 = vrot.slane %v1540, 4
        %v2118 = vsel %vm1563, %v2050, %v2117
        %v2120 = vunpack.c.l.s4 1983009808
        %v2121 = vunpack.c.0.s8 %v2120
        %v2122 = vperm.slane %v2116, %v2121
        %v2124 = vunpack.c.l.s4 1983009808
        %v2125 = vunpack.c.0.s8 %v2124
        %v2126 = vperm.slane %v2118, %v2125
        %v2127 = vrot.slane %v2056, 4
        %v2128 = vsel %vm1563, %v2127, %v2044
        %v2129 = vrot.slane %v2044, 4
        %v2130 = vsel %vm1563, %v2056, %v2129
        %v2132 = vunpack.c.l.s4 1983009808
        %v2133 = vunpack.c.0.s8 %v2132
        %v2134 = vperm.slane %v2128, %v2133
        %v2136 = vunpack.c.l.s4 1983009808
        %v2137 = vunpack.c.0.s8 %v2136
        %v2138 = vperm.slane %v2130, %v2137
        %v2139 = vrot.slane %v2134, 4
        %v2140 = vsel %vm1563, %v2139, %v2122
        %v2141 = vrot.slane %v2122, 4
        %v2142 = vsel %vm1563, %v2134, %v2141
        %v2144 = vunpack.c.l.s4 1934713408
        %v2145 = vunpack.c.0.s8 %v2144
        %v2146 = vperm.slane %v2140, %v2145
        %v2148 = vunpack.c.l.s4 1934713408
        %v2149 = vunpack.c.0.s8 %v2148
        %v2150 = vperm.slane %v2142, %v2149
        %v2151 = vrot.slane %v2138, 4
        %v2152 = vsel %vm1563, %v2151, %v2126
        %v2153 = vrot.slane %v2126, 4
        %v2154 = vsel %vm1563, %v2138, %v2153
        %v2156 = vunpack.c.l.s4 1934713408
        %v2157 = vunpack.c.0.s8 %v2156
        %v2158 = vperm.slane %v2152, %v2157
        %v2160 = vunpack.c.l.s4 1934713408
        %v2161 = vunpack.c.0.s8 %v2160
        %v2162 = vperm.slane %v2154, %v2161
        %v2163 = vrot.slane %v2146, 4
        %v2164 = vsel %vm1563, 0.0, %v2163
        %v2165 = vrot.slane %v2150, 4
        %v2166 = vsel %vm1563, 0.0, %v2165
        %v2167 = vrot.slane %v2158, 4
        %v2168 = vsel %vm1563, 0.0, %v2167
        %v2169 = vrot.slane %v2162, 4
        %v2170 = vsel %vm1563, 0.0, %v2169
        %v2171 = vsel %vm1563, %v2109, %v2090
        %v2173 = vunpack.c.l.s4 1983009808
        %v2174 = vunpack.c.0.s8 %v2173
        %v2175 = vperm.slane %v2171, %v2174
        %v2176 = vrot.slane %v2110, 4
        %v2177 = vsel %vm1563, %v2176, %v2108
        %v2179 = vunpack.c.l.s4 1983009808
        %v2180 = vunpack.c.0.s8 %v2179
        %v2181 = vperm.slane %v2177, %v2180
        %v2182 = vsel %vm1563, %v2113, %v2102
        %v2184 = vunpack.c.l.s4 1983009808
        %v2185 = vunpack.c.0.s8 %v2184
        %v2186 = vperm.slane %v2182, %v2185
        %v2187 = vrot.slane %v2114, 4
        %v2188 = vsel %vm1563, %v2187, %v2112
        %v2190 = vunpack.c.l.s4 1983009808
        %v2191 = vunpack.c.0.s8 %v2190
        %v2192 = vperm.slane %v2188, %v2191
        %v2193 = vrot.slane %v2181, 4
        %v2194 = vsel %vm1563, %v2193, %v2175
        %v2195 = vrot.slane %v2175, 4
        %v2196 = vsel %vm1563, %v2181, %v2195
        %v2198 = vunpack.c.l.s4 1934713408
        %v2199 = vunpack.c.0.s8 %v2198
        %v2200 = vperm.slane %v2194, %v2199
        %v2202 = vunpack.c.l.s4 1934713408
        %v2203 = vunpack.c.0.s8 %v2202
        %v2204 = vperm.slane %v2196, %v2203
        %v2205 = vrot.slane %v2192, 4
        %v2206 = vsel %vm1563, %v2205, %v2186
        %v2207 = vrot.slane %v2186, 4
        %v2208 = vsel %vm1563, %v2192, %v2207
        %v2210 = vunpack.c.l.s4 1934713408
        %v2211 = vunpack.c.0.s8 %v2210
        %v2212 = vperm.slane %v2206, %v2211
        %v2214 = vunpack.c.l.s4 1934713408
        %v2215 = vunpack.c.0.s8 %v2214
        %v2216 = vperm.slane %v2208, %v2215
        %v2217 = vrot.slane %v2212, 4
        %v2218 = vsel %vm1563, %v2217, %v2200
        %v2219 = vrot.slane %v2200, 4
        %v2220 = vsel %vm1563, %v2212, %v2219
        %v2221 = vrot.slane %v2216, 4
        %v2222 = vsel %vm1563, %v2221, %v2204
        %v2223 = vrot.slane %v2204, 4
        %v2224 = vsel %vm1563, %v2216, %v2223
        %v2225 = vsel %vm1563, %v2165, %v2146
        %v2227 = vunpack.c.l.s4 1983009808
        %v2228 = vunpack.c.0.s8 %v2227
        %v2229 = vperm.slane %v2225, %v2228
        %v2230 = vrot.slane %v2166, 4
        %v2231 = vsel %vm1563, %v2230, %v2164
        %v2233 = vunpack.c.l.s4 1983009808
        %v2234 = vunpack.c.0.s8 %v2233
        %v2235 = vperm.slane %v2231, %v2234
        %v2236 = vsel %vm1563, %v2169, %v2158
        %v2238 = vunpack.c.l.s4 1983009808
        %v2239 = vunpack.c.0.s8 %v2238
        %v2240 = vperm.slane %v2236, %v2239
        %v2241 = vrot.slane %v2170, 4
        %v2242 = vsel %vm1563, %v2241, %v2168
        %v2244 = vunpack.c.l.s4 1983009808
        %v2245 = vunpack.c.0.s8 %v2244
        %v2246 = vperm.slane %v2242, %v2245
        %v2247 = vrot.slane %v2235, 4
        %v2248 = vsel %vm1563, %v2247, %v2229
        %v2249 = vrot.slane %v2229, 4
        %v2250 = vsel %vm1563, %v2235, %v2249
        %v2252 = vunpack.c.l.s4 1934713408
        %v2253 = vunpack.c.0.s8 %v2252
        %v2254 = vperm.slane %v2248, %v2253
        %v2256 = vunpack.c.l.s4 1934713408
        %v2257 = vunpack.c.0.s8 %v2256
        %v2258 = vperm.slane %v2250, %v2257
        %v2259 = vrot.slane %v2246, 4
        %v2260 = vsel %vm1563, %v2259, %v2240
        %v2261 = vrot.slane %v2240, 4
        %v2262 = vsel %vm1563, %v2246, %v2261
        %v2264 = vunpack.c.l.s4 1934713408
        %v2265 = vunpack.c.0.s8 %v2264
        %v2266 = vperm.slane %v2260, %v2265
        %v2268 = vunpack.c.l.s4 1934713408
        %v2269 = vunpack.c.0.s8 %v2268
        %v2270 = vperm.slane %v2262, %v2269
        %v2271 = vrot.slane %v2266, 4
        %v2272 = vsel %vm1563, %v2271, %v2254
        %v2273 = vrot.slane %v2254, 4
        %v2274 = vsel %vm1563, %v2266, %v2273
        %v2275 = vrot.slane %v2270, 4
        %v2276 = vsel %vm1563, %v2275, %v2258
        %v2277 = vrot.slane %v2258, 4
        %v2278 = vsel %vm1563, %v2270, %v2277
        %v2279 = vpack.c.bf16 %v2218, %v2218
        %v2280 = vpack.c.bf16 %v2272, %v2272
        %v2281 = vpack.c.bf16 %v2220, %v2220
        %v2282 = vpack.c.bf16 %v2274, %v2274
        %v2283 = vpack.c.bf16 %v2222, %v2222
        %v2284 = vpack.c.bf16 %v2276, %v2276
        %v2285 = vpack.c.bf16 %v2224, %v2224
        %v2286 = vpack.c.bf16 %v2278, %v2278
        %v2289 = vunpack.c.l.b16 %v1783
        %v2290 = vunpack.c.l.b16 %v1784
        %v2291 = vpack.c.b16 %v2290, %v2289
        %v2294 = vunpack.c.l.b16 %v2031
        %v2295 = vunpack.c.l.b16 %v2032
        %v2296 = vpack.c.b16 %v2295, %v2294
        %vm2297 = vcmask 261120
        %v2299 = vsel %vm2297, %v2291, 0
        %v2302 = vsel %vm2297, %v2296, 0
        %2304 = vmatpush.bf16.xpose.msra.mxu0 0
        %2305 = vmatpush.bf16.xpose.msra.mxu0 0
        %2306 = vmatpush.bf16.xpose.msra.mxu0 0
        %2307 = vmatpush.bf16.xpose.msra.mxu0 0
        %2308 = vmatpush.bf16.xpose.msra.mxu0 0
        %2309 = vmatpush.bf16.xpose.msra.mxu0 0
        %2310 = vmatpush.bf16.xpose.msra.mxu0 0
        %2311 = vmatpush.bf16.xpose.msra.mxu0 %v2302
        %2312 = vmatmul.bf16.gmra.mxu0 %v2299
        %v2313 = vpop.f32.mrf.mxu0
        %v2314 = vadd.f32 0.0, %v2313
        %v2315 = vpop.f32.mrf.mxu0
        %v2316 = vadd.f32 0.0, %v2315
        %2317 = vdwg.mxu0
        %v2320 = vunpack.c.l.b16 %v1785
        %v2321 = vunpack.c.l.b16 %v1786
        %v2322 = vpack.c.b16 %v2321, %v2320
        %v2325 = vunpack.c.l.b16 %v2033
        %v2326 = vunpack.c.l.b16 %v2034
        %v2327 = vpack.c.b16 %v2326, %v2325
        %v2329 = vsel %vm2297, %v2322, 0
        %v2332 = vsel %vm2297, %v2327, 0
        %2334 = vmatpush.bf16.xpose.msra.mxu0 0
        %2335 = vmatpush.bf16.xpose.msra.mxu0 0
        %2336 = vmatpush.bf16.xpose.msra.mxu0 0
        %2337 = vmatpush.bf16.xpose.msra.mxu0 0
        %2338 = vmatpush.bf16.xpose.msra.mxu0 0
        %2339 = vmatpush.bf16.xpose.msra.mxu0 0
        %2340 = vmatpush.bf16.xpose.msra.mxu0 0
        %2341 = vmatpush.bf16.xpose.msra.mxu0 %v2332
        %2342 = vmatmul.bf16.gmra.mxu0 %v2329
        %v2343 = vpop.f32.mrf.mxu0
        %v2344 = vadd.f32 0.0, %v2343
        %v2345 = vpop.f32.mrf.mxu0
        %v2346 = vadd.f32 0.0, %v2345
        %2347 = vdwg.mxu0
        %v2350 = vunpack.c.l.b16 %v1787
        %v2351 = vunpack.c.l.b16 %v1788
        %v2352 = vpack.c.b16 %v2351, %v2350
        %v2355 = vunpack.c.l.b16 %v2035
        %v2356 = vunpack.c.l.b16 %v2036
        %v2357 = vpack.c.b16 %v2356, %v2355
        %v2359 = vsel %vm2297, %v2352, 0
        %v2362 = vsel %vm2297, %v2357, 0
        %2364 = vmatpush.bf16.xpose.msra.mxu0 0
        %2365 = vmatpush.bf16.xpose.msra.mxu0 0
        %2366 = vmatpush.bf16.xpose.msra.mxu0 0
        %2367 = vmatpush.bf16.xpose.msra.mxu0 0
        %2368 = vmatpush.bf16.xpose.msra.mxu0 0
        %2369 = vmatpush.bf16.xpose.msra.mxu0 0
        %2370 = vmatpush.bf16.xpose.msra.mxu0 0
        %2371 = vmatpush.bf16.xpose.msra.mxu0 %v2362
        %2372 = vmatmul.bf16.gmra.mxu0 %v2359
        %v2373 = vpop.f32.mrf.mxu0
        %v2374 = vadd.f32 0.0, %v2373
        %v2375 = vpop.f32.mrf.mxu0
        %v2376 = vadd.f32 0.0, %v2375
        %2377 = vdwg.mxu0
        %v2380 = vunpack.c.l.b16 %v1789
        %v2381 = vunpack.c.l.b16 %v1790
        %v2382 = vpack.c.b16 %v2381, %v2380
        %v2385 = vunpack.c.l.b16 %v2037
        %v2386 = vunpack.c.l.b16 %v2038
        %v2387 = vpack.c.b16 %v2386, %v2385
        %v2389 = vsel %vm2297, %v2382, 0
        %v2392 = vsel %vm2297, %v2387, 0
        %2394 = vmatpush.bf16.xpose.msra.mxu0 0
        %2395 = vmatpush.bf16.xpose.msra.mxu0 0
        %2396 = vmatpush.bf16.xpose.msra.mxu0 0
        %2397 = vmatpush.bf16.xpose.msra.mxu0 0
        %2398 = vmatpush.bf16.xpose.msra.mxu0 0
        %2399 = vmatpush.bf16.xpose.msra.mxu0 0
        %2400 = vmatpush.bf16.xpose.msra.mxu0 0
        %2401 = vmatpush.bf16.xpose.msra.mxu0 %v2392
        %2402 = vmatmul.bf16.gmra.mxu0 %v2389
        %v2403 = vpop.f32.mrf.mxu0
        %v2404 = vadd.f32 0.0, %v2403
        %v2405 = vpop.f32.mrf.mxu0
        %v2406 = vadd.f32 0.0, %v2405
        %2407 = vdwg.mxu0
        %vm2408 = vcmask 130048
        %v2409 = vsel %vm2408, %v2314, -inf
        %2410 = vmax.xlane.f32.xlu0 %v2409
        %v2411 = vpop.xlane.xlu0 %2410
        %v2412 = vsel %vm2408, %v2316, -inf
        %2413 = vmax.xlane.f32.xlu0 %v2412
        %v2414 = vpop.xlane.xlu0 %2413
        %v2415 = vsel %vm2408, %v2344, -inf
        %2416 = vmax.xlane.f32.xlu0 %v2415
        %v2417 = vpop.xlane.xlu0 %2416
        %v2418 = vsel %vm2408, %v2346, -inf
        %2419 = vmax.xlane.f32.xlu0 %v2418
        %v2420 = vpop.xlane.xlu0 %2419
        %v2421 = vsel %vm2408, %v2374, -inf
        %2422 = vmax.xlane.f32.xlu0 %v2421
        %v2423 = vpop.xlane.xlu0 %2422
        %v2424 = vsel %vm2408, %v2376, -inf
        %2425 = vmax.xlane.f32.xlu0 %v2424
        %v2426 = vpop.xlane.xlu0 %2425
        %v2427 = vsel %vm2408, %v2404, -inf
        %2428 = vmax.xlane.f32.xlu0 %v2427
        %v2429 = vpop.xlane.xlu0 %2428
        %v2430 = vsel %vm2408, %v2406, -inf
        %2431 = vmax.xlane.f32.xlu0 %v2430
        %v2432 = vpop.xlane.xlu0 %2431
        %v2433 = vsub.f32 %v2314, %v2411
        %v2434 = vsub.f32 %v2316, %v2414
        %v2435 = vsub.f32 %v2344, %v2417
        %v2436 = vsub.f32 %v2346, %v2420
        %v2437 = vsub.f32 %v2374, %v2423
        %v2438 = vsub.f32 %v2376, %v2426
        %v2439 = vsub.f32 %v2404, %v2429
        %v2440 = vsub.f32 %v2406, %v2432
        %v2441 = vmul.f32 %v2433, 1.442695
        %v2442 = vpow.pop %v2441
        %v2443 = vmul.f32 %v2434, 1.442695
        %v2444 = vpow.pop %v2443
        %v2445 = vmul.f32 %v2435, 1.442695
        %v2446 = vpow.pop %v2445
        %v2447 = vmul.f32 %v2436, 1.442695
        %v2448 = vpow.pop %v2447
        %v2449 = vmul.f32 %v2437, 1.442695
        %v2450 = vpow.pop %v2449
        %v2451 = vmul.f32 %v2438, 1.442695
        %v2452 = vpow.pop %v2451
        %v2453 = vmul.f32 %v2439, 1.442695
        %v2454 = vpow.pop %v2453
        %v2455 = vmul.f32 %v2440, 1.442695
        %v2456 = vpow.pop %v2455
        %v2457 = vsel %vm2408, %v2442, 0.0
        %2458 = vadd.xlane.f32.xlu0 %v2457
        %v2459 = vpop.xlane.xlu0 %2458
        %v2460 = vsel %vm2408, %v2444, 0.0
        %2461 = vadd.xlane.f32.xlu0 %v2460
        %v2462 = vpop.xlane.xlu0 %2461
        %v2463 = vsel %vm2408, %v2446, 0.0
        %2464 = vadd.xlane.f32.xlu0 %v2463
        %v2465 = vpop.xlane.xlu0 %2464
        %v2466 = vsel %vm2408, %v2448, 0.0
        %2467 = vadd.xlane.f32.xlu0 %v2466
        %v2468 = vpop.xlane.xlu0 %2467
        %v2469 = vsel %vm2408, %v2450, 0.0
        %2470 = vadd.xlane.f32.xlu0 %v2469
        %v2471 = vpop.xlane.xlu0 %2470
        %v2472 = vsel %vm2408, %v2452, 0.0
        %2473 = vadd.xlane.f32.xlu0 %v2472
        %v2474 = vpop.xlane.xlu0 %2473
        %v2475 = vsel %vm2408, %v2454, 0.0
        %2476 = vadd.xlane.f32.xlu0 %v2475
        %v2477 = vpop.xlane.xlu0 %2476
        %v2478 = vsel %vm2408, %v2456, 0.0
        %2479 = vadd.xlane.f32.xlu0 %v2478
        %v2480 = vpop.xlane.xlu0 %2479
        %v2481 = vrcp.pop %v2459
        %v2482 = vrcp.pop %v2462
        %v2483 = vrcp.pop %v2465
        %v2484 = vrcp.pop %v2468
        %v2485 = vrcp.pop %v2471
        %v2486 = vrcp.pop %v2474
        %v2487 = vrcp.pop %v2477
        %v2488 = vrcp.pop %v2480
        %v2489 = vmul.f32 %v2442, %v2481
        %v2490 = vmul.f32 %v2444, %v2482
        %v2491 = vmul.f32 %v2446, %v2483
        %v2492 = vmul.f32 %v2448, %v2484
        %v2493 = vmul.f32 %v2450, %v2485
        %v2494 = vmul.f32 %v2452, %v2486
        %v2495 = vmul.f32 %v2454, %v2487
        %v2496 = vmul.f32 %v2456, %v2488
        %v2497 = vpack.c.bf16 %v2489, %v2489
        %v2498 = vpack.c.bf16 %v2490, %v2490
        %v2499 = vpack.c.bf16 %v2491, %v2491
        %v2500 = vpack.c.bf16 %v2492, %v2492
        %v2501 = vpack.c.bf16 %v2493, %v2493
        %v2502 = vpack.c.bf16 %v2494, %v2494
        %v2503 = vpack.c.bf16 %v2495, %v2495
        %v2504 = vpack.c.bf16 %v2496, %v2496
        %v2507 = vunpack.c.l.b16 %v2497
        %v2508 = vunpack.c.l.b16 %v2498
        %v2509 = vpack.c.b16 %v2508, %v2507
        %v2512 = vunpack.c.l.b16 %v2279
        %v2513 = vunpack.c.l.b16 %v2280
        %v2514 = vpack.c.b16 %v2513, %v2512
        %v2517 = vsel %vm2408, %v2509, 0
        %2519 = vmatpush.bf16.msra.mxu0 0
        %2520 = vmatpush.bf16.msra.mxu0 0
        %2521 = vmatpush.bf16.msra.mxu0 0
        %2522 = vmatpush.bf16.msra.mxu0 0
        %2523 = vmatpush.bf16.msra.mxu0 0
        %2524 = vmatpush.bf16.msra.mxu0 0
        %2525 = vmatpush.bf16.msra.mxu0 0
        %2526 = vmatpush.bf16.msra.mxu0 %v2514
        %2527 = vmatmul.bf16.gmra.mxu0 %v2517
        %v2528 = vpop.f32.mrf.mxu0
        %v2529 = vadd.f32 0.0, %v2528
        %v2530 = vpop.f32.mrf.mxu0
        %v2531 = vadd.f32 0.0, %v2530
        %2532 = vdwg.mxu0
        %v2535 = vunpack.c.l.b16 %v2499
        %v2536 = vunpack.c.l.b16 %v2500
        %v2537 = vpack.c.b16 %v2536, %v2535
        %v2540 = vunpack.c.l.b16 %v2281
        %v2541 = vunpack.c.l.b16 %v2282
        %v2542 = vpack.c.b16 %v2541, %v2540
        %v2545 = vsel %vm2408, %v2537, 0
        %2547 = vmatpush.bf16.msra.mxu0 0
        %2548 = vmatpush.bf16.msra.mxu0 0
        %2549 = vmatpush.bf16.msra.mxu0 0
        %2550 = vmatpush.bf16.msra.mxu0 0
        %2551 = vmatpush.bf16.msra.mxu0 0
        %2552 = vmatpush.bf16.msra.mxu0 0
        %2553 = vmatpush.bf16.msra.mxu0 0
        %2554 = vmatpush.bf16.msra.mxu0 %v2542
        %2555 = vmatmul.bf16.gmra.mxu0 %v2545
        %v2556 = vpop.f32.mrf.mxu0
        %v2557 = vadd.f32 0.0, %v2556
        %v2558 = vpop.f32.mrf.mxu0
        %v2559 = vadd.f32 0.0, %v2558
        %2560 = vdwg.mxu0
        %v2563 = vunpack.c.l.b16 %v2501
        %v2564 = vunpack.c.l.b16 %v2502
        %v2565 = vpack.c.b16 %v2564, %v2563
        %v2568 = vunpack.c.l.b16 %v2283
        %v2569 = vunpack.c.l.b16 %v2284
        %v2570 = vpack.c.b16 %v2569, %v2568
        %v2573 = vsel %vm2408, %v2565, 0
        %2575 = vmatpush.bf16.msra.mxu0 0
        %2576 = vmatpush.bf16.msra.mxu0 0
        %2577 = vmatpush.bf16.msra.mxu0 0
        %2578 = vmatpush.bf16.msra.mxu0 0
        %2579 = vmatpush.bf16.msra.mxu0 0
        %2580 = vmatpush.bf16.msra.mxu0 0
        %2581 = vmatpush.bf16.msra.mxu0 0
        %2582 = vmatpush.bf16.msra.mxu0 %v2570
        %2583 = vmatmul.bf16.gmra.mxu0 %v2573
        %v2584 = vpop.f32.mrf.mxu0
        %v2585 = vadd.f32 0.0, %v2584
        %v2586 = vpop.f32.mrf.mxu0
        %v2587 = vadd.f32 0.0, %v2586
        %2588 = vdwg.mxu0
        %v2591 = vunpack.c.l.b16 %v2503
        %v2592 = vunpack.c.l.b16 %v2504
        %v2593 = vpack.c.b16 %v2592, %v2591
        %v2596 = vunpack.c.l.b16 %v2285
        %v2597 = vunpack.c.l.b16 %v2286
        %v2598 = vpack.c.b16 %v2597, %v2596
        %v2601 = vsel %vm2408, %v2593, 0
        %2603 = vmatpush.bf16.msra.mxu0 0
        %2604 = vmatpush.bf16.msra.mxu0 0
        %2605 = vmatpush.bf16.msra.mxu0 0
        %2606 = vmatpush.bf16.msra.mxu0 0
        %2607 = vmatpush.bf16.msra.mxu0 0
        %2608 = vmatpush.bf16.msra.mxu0 0
        %2609 = vmatpush.bf16.msra.mxu0 0
        %2610 = vmatpush.bf16.msra.mxu0 %v2598
        %2611 = vmatmul.bf16.gmra.mxu0 %v2601
        %v2612 = vpop.f32.mrf.mxu0
        %v2613 = vadd.f32 0.0, %v2612
        %v2614 = vpop.f32.mrf.mxu0
        %v2615 = vadd.f32 0.0, %v2614
        %2616 = vdwg.mxu0
        %v2617 = vrot.slane %v2585, 4
        %v2618 = vsel %vm1563, %v2617, %v2529
        %v2619 = vrot.slane %v2529, 4
        %v2620 = vsel %vm1563, %v2585, %v2619
        %v2622 = vunpack.c.l.s4 1983009808
        %v2623 = vunpack.c.0.s8 %v2622
        %v2624 = vperm.slane %v2618, %v2623
        %v2626 = vunpack.c.l.s4 1983009808
        %v2627 = vunpack.c.0.s8 %v2626
        %v2628 = vperm.slane %v2620, %v2627
        %v2629 = vrot.slane %v2613, 4
        %v2630 = vsel %vm1563, %v2629, %v2557
        %v2631 = vrot.slane %v2557, 4
        %v2632 = vsel %vm1563, %v2613, %v2631
        %v2634 = vunpack.c.l.s4 1983009808
        %v2635 = vunpack.c.0.s8 %v2634
        %v2636 = vperm.slane %v2630, %v2635
        %v2638 = vunpack.c.l.s4 1983009808
        %v2639 = vunpack.c.0.s8 %v2638
        %v2640 = vperm.slane %v2632, %v2639
        %v2641 = vrot.slane %v2636, 4
        %v2642 = vsel %vm1563, %v2641, %v2624
        %v2643 = vrot.slane %v2624, 4
        %v2644 = vsel %vm1563, %v2636, %v2643
        %v2646 = vunpack.c.l.s4 1934713408
        %v2647 = vunpack.c.0.s8 %v2646
        %v2648 = vperm.slane %v2642, %v2647
        %v2650 = vunpack.c.l.s4 1934713408
        %v2651 = vunpack.c.0.s8 %v2650
        %v2652 = vperm.slane %v2644, %v2651
        %v2653 = vrot.slane %v2640, 4
        %v2654 = vsel %vm1563, %v2653, %v2628
        %v2655 = vrot.slane %v2628, 4
        %v2656 = vsel %vm1563, %v2640, %v2655
        %v2658 = vunpack.c.l.s4 1934713408
        %v2659 = vunpack.c.0.s8 %v2658
        %v2660 = vperm.slane %v2654, %v2659
        %v2662 = vunpack.c.l.s4 1934713408
        %v2663 = vunpack.c.0.s8 %v2662
        %v2664 = vperm.slane %v2656, %v2663
        %v2665 = vrot.slane %v2648, 4
        %v2666 = vsel %vm1563, 0.0, %v2665
        %v2667 = vrot.slane %v2652, 4
        %v2668 = vsel %vm1563, 0.0, %v2667
        %v2669 = vrot.slane %v2660, 4
        %v2670 = vsel %vm1563, 0.0, %v2669
        %v2671 = vrot.slane %v2664, 4
        %v2672 = vsel %vm1563, 0.0, %v2671
        %v2673 = vrot.slane %v2587, 4
        %v2674 = vsel %vm1563, %v2673, %v2531
        %v2675 = vrot.slane %v2531, 4
        %v2676 = vsel %vm1563, %v2587, %v2675
        %v2678 = vunpack.c.l.s4 1983009808
        %v2679 = vunpack.c.0.s8 %v2678
        %v2680 = vperm.slane %v2674, %v2679
        %v2682 = vunpack.c.l.s4 1983009808
        %v2683 = vunpack.c.0.s8 %v2682
        %v2684 = vperm.slane %v2676, %v2683
        %v2685 = vrot.slane %v2615, 4
        %v2686 = vsel %vm1563, %v2685, %v2559
        %v2687 = vrot.slane %v2559, 4
        %v2688 = vsel %vm1563, %v2615, %v2687
        %v2690 = vunpack.c.l.s4 1983009808
        %v2691 = vunpack.c.0.s8 %v2690
        %v2692 = vperm.slane %v2686, %v2691
        %v2694 = vunpack.c.l.s4 1983009808
        %v2695 = vunpack.c.0.s8 %v2694
        %v2696 = vperm.slane %v2688, %v2695
        %v2697 = vrot.slane %v2692, 4
        %v2698 = vsel %vm1563, %v2697, %v2680
        %v2699 = vrot.slane %v2680, 4
        %v2700 = vsel %vm1563, %v2692, %v2699
        %v2702 = vunpack.c.l.s4 1934713408
        %v2703 = vunpack.c.0.s8 %v2702
        %v2704 = vperm.slane %v2698, %v2703
        %v2706 = vunpack.c.l.s4 1934713408
        %v2707 = vunpack.c.0.s8 %v2706
        %v2708 = vperm.slane %v2700, %v2707
        %v2709 = vrot.slane %v2696, 4
        %v2710 = vsel %vm1563, %v2709, %v2684
        %v2711 = vrot.slane %v2684, 4
        %v2712 = vsel %vm1563, %v2696, %v2711
        %v2714 = vunpack.c.l.s4 1934713408
        %v2715 = vunpack.c.0.s8 %v2714
        %v2716 = vperm.slane %v2710, %v2715
        %v2718 = vunpack.c.l.s4 1934713408
        %v2719 = vunpack.c.0.s8 %v2718
        %v2720 = vperm.slane %v2712, %v2719
        %v2721 = vrot.slane %v2704, 4
        %v2722 = vsel %vm1563, 0.0, %v2721
        %v2723 = vrot.slane %v2708, 4
        %v2724 = vsel %vm1563, 0.0, %v2723
        %v2725 = vrot.slane %v2716, 4
        %v2726 = vsel %vm1563, 0.0, %v2725
        %v2727 = vrot.slane %v2720, 4
        %v2728 = vsel %vm1563, 0.0, %v2727
        %v2729 = vsel %vm1563, %v2667, %v2648
        %v2731 = vunpack.c.l.s4 1983009808
        %v2732 = vunpack.c.0.s8 %v2731
        %v2733 = vperm.slane %v2729, %v2732
        %v2734 = vrot.slane %v2668, 4
        %v2735 = vsel %vm1563, %v2734, %v2666
        %v2737 = vunpack.c.l.s4 1983009808
        %v2738 = vunpack.c.0.s8 %v2737
        %v2739 = vperm.slane %v2735, %v2738
        %v2740 = vsel %vm1563, %v2671, %v2660
        %v2742 = vunpack.c.l.s4 1983009808
        %v2743 = vunpack.c.0.s8 %v2742
        %v2744 = vperm.slane %v2740, %v2743
        %v2745 = vrot.slane %v2672, 4
        %v2746 = vsel %vm1563, %v2745, %v2670
        %v2748 = vunpack.c.l.s4 1983009808
        %v2749 = vunpack.c.0.s8 %v2748
        %v2750 = vperm.slane %v2746, %v2749
        %v2751 = vrot.slane %v2739, 4
        %v2752 = vsel %vm1563, %v2751, %v2733
        %v2753 = vrot.slane %v2733, 4
        %v2754 = vsel %vm1563, %v2739, %v2753
        %v2756 = vunpack.c.l.s4 1934713408
        %v2757 = vunpack.c.0.s8 %v2756
        %v2758 = vperm.slane %v2752, %v2757
        %v2760 = vunpack.c.l.s4 1934713408
        %v2761 = vunpack.c.0.s8 %v2760
        %v2762 = vperm.slane %v2754, %v2761
        %v2763 = vrot.slane %v2750, 4
        %v2764 = vsel %vm1563, %v2763, %v2744
        %v2765 = vrot.slane %v2744, 4
        %v2766 = vsel %vm1563, %v2750, %v2765
        %v2768 = vunpack.c.l.s4 1934713408
        %v2769 = vunpack.c.0.s8 %v2768
        %v2770 = vperm.slane %v2764, %v2769
        %v2772 = vunpack.c.l.s4 1934713408
        %v2773 = vunpack.c.0.s8 %v2772
        %v2774 = vperm.slane %v2766, %v2773
        %v2775 = vrot.slane %v2770, 4
        %v2776 = vsel %vm1563, %v2775, %v2758
        %v2777 = vrot.slane %v2758, 4
        %v2778 = vsel %vm1563, %v2770, %v2777
        %v2779 = vrot.slane %v2774, 4
        %v2780 = vsel %vm1563, %v2779, %v2762
        %v2781 = vrot.slane %v2762, 4
        %v2782 = vsel %vm1563, %v2774, %v2781
        %v2783 = vsel %vm1563, %v2723, %v2704
        %v2785 = vunpack.c.l.s4 1983009808
        %v2786 = vunpack.c.0.s8 %v2785
        %v2787 = vperm.slane %v2783, %v2786
        %v2788 = vrot.slane %v2724, 4
        %v2789 = vsel %vm1563, %v2788, %v2722
        %v2791 = vunpack.c.l.s4 1983009808
        %v2792 = vunpack.c.0.s8 %v2791
        %v2793 = vperm.slane %v2789, %v2792
        %v2794 = vsel %vm1563, %v2727, %v2716
        %v2796 = vunpack.c.l.s4 1983009808
        %v2797 = vunpack.c.0.s8 %v2796
        %v2798 = vperm.slane %v2794, %v2797
        %v2799 = vrot.slane %v2728, 4
        %v2800 = vsel %vm1563, %v2799, %v2726
        %v2802 = vunpack.c.l.s4 1983009808
        %v2803 = vunpack.c.0.s8 %v2802
        %v2804 = vperm.slane %v2800, %v2803
        %v2805 = vrot.slane %v2793, 4
        %v2806 = vsel %vm1563, %v2805, %v2787
        %v2807 = vrot.slane %v2787, 4
        %v2808 = vsel %vm1563, %v2793, %v2807
        %v2810 = vunpack.c.l.s4 1934713408
        %v2811 = vunpack.c.0.s8 %v2810
        %v2812 = vperm.slane %v2806, %v2811
        %v2814 = vunpack.c.l.s4 1934713408
        %v2815 = vunpack.c.0.s8 %v2814
        %v2816 = vperm.slane %v2808, %v2815
        %v2817 = vrot.slane %v2804, 4
        %v2818 = vsel %vm1563, %v2817, %v2798
        %v2819 = vrot.slane %v2798, 4
        %v2820 = vsel %vm1563, %v2804, %v2819
        %v2822 = vunpack.c.l.s4 1934713408
        %v2823 = vunpack.c.0.s8 %v2822
        %v2824 = vperm.slane %v2818, %v2823
        %v2826 = vunpack.c.l.s4 1934713408
        %v2827 = vunpack.c.0.s8 %v2826
        %v2828 = vperm.slane %v2820, %v2827
        %v2829 = vrot.slane %v2824, 4
        %v2830 = vsel %vm1563, %v2829, %v2812
        %v2831 = vrot.slane %v2812, 4
        %v2832 = vsel %vm1563, %v2824, %v2831
        %v2833 = vrot.slane %v2828, 4
        %v2834 = vsel %vm1563, %v2833, %v2816
        %v2835 = vrot.slane %v2816, 4
        %v2836 = vsel %vm1563, %v2828, %v2835
        %2839 = vrot.lane.b32.xlu0 %v2778, 32
        %v2840 = vpop.permute.xlu0 %2839
        %2841 = vrot.lane.b32.xlu0 %v2832, 32
        %v2842 = vpop.permute.xlu0 %2841
        %2847 = vrot.lane.b32.xlu0 %v2780, 64
        %v2848 = vpop.permute.xlu0 %2847
        %2849 = vrot.lane.b32.xlu0 %v2834, 64
        %v2850 = vpop.permute.xlu0 %2849
        %2855 = vrot.lane.b32.xlu0 %v2782, 96
        %v2856 = vpop.permute.xlu0 %2855
        %2857 = vrot.lane.b32.xlu0 %v2836, 96
        %v2858 = vpop.permute.xlu0 %2857
        %v2861 = vsel %vm2297, %v2776, %v2840
        %v2862 = vsel %vm2297, %v2830, %v2842
        %vm2863 = vcmask 523264
        %v2864 = vsel %vm2863, %v2861, %v2848
        %v2865 = vsel %vm2863, %v2862, %v2850
        %vm2866 = vcmask 785408
        %v2867 = vsel %vm2866, %v2864, %v2856
        %v2868 = vsel %vm2866, %v2865, %v2858
        %v2869 = vpack.c.bf16 %v2868, %v2867
        %v2871 = vperm.slane %v1115, 0
        %v2889 = vunpack.c.l.b16 %v1099
        %v2890 = vunpack.c.l.b16 %v1100
        %v2891 = vunpack.c.l.b16 %v1101
        %v2892 = vunpack.c.l.b16 %v1102
        %v2893 = vunpack.c.l.b16 %v1103
        %v2894 = vunpack.c.l.b16 %v1104
        %v2895 = vunpack.c.l.b16 %v1105
        %v2896 = vunpack.c.l.b16 %v1106
        %v2897 = vunpack.c.l.b16 %v1107
        %v2898 = vunpack.c.l.b16 %v1108
        %v2899 = vunpack.c.l.b16 %v1109
        %v2900 = vunpack.c.l.b16 %v1110
        %v2901 = vunpack.c.l.b16 %v1111
        %v2902 = vunpack.c.l.b16 %v1112
        %v2903 = vunpack.c.l.b16 %v1113
        %v2904 = vunpack.c.l.b16 %v1114
        %v2905 = vpack.c.b16 %v2890, %v2889
        %v2906 = vpack.c.b16 %v2892, %v2891
        %v2907 = vpack.c.b16 %v2894, %v2893
        %v2908 = vpack.c.b16 %v2896, %v2895
        %v2909 = vpack.c.b16 %v2898, %v2897
        %v2910 = vpack.c.b16 %v2900, %v2899
        %v2911 = vpack.c.b16 %v2902, %v2901
        %v2912 = vpack.c.b16 %v2904, %v2903
        %2921 = vmatpush.bf16.msra.mxu0 %v2912
        %2922 = vmatpush.bf16.msra.mxu0 %v2911
        %2923 = vmatpush.bf16.msra.mxu0 %v2910
        %2924 = vmatpush.bf16.msra.mxu0 %v2909
        %2925 = vmatpush.bf16.msra.mxu0 %v2908
        %2926 = vmatpush.bf16.msra.mxu0 %v2907
        %2927 = vmatpush.bf16.msra.mxu0 %v2906
        %2928 = vmatpush.bf16.msra.mxu0 %v2905
        %2929 = vmatmul.bf16.gmra.mxu0 %v2869
        %v2930 = vpop.f32.mrf.mxu0
        %v2931 = vadd.f32 %v2871, %v2930
        %v2932 = vpop.f32.mrf.mxu0
        %v2933 = vadd.f32 %v2871, %v2932
        %2934 = vdwg.mxu0
        %v2935 = vadd.f32 %v2931, %v1040
        %v2936 = vadd.f32 %v2933, %v1041
        %2937 = vadd.xlane.f32.xlu0 %v2935
        %v2938 = vpop.xlane.xlu0 %2937
        %2939 = vadd.xlane.f32.xlu0 %v2936
        %v2940 = vpop.xlane.xlu0 %2939
        %v2941 = vmul.f32 %v2938, %v1306
        %v2942 = vmul.f32 %v2940, %v1306
        %v2943 = vsub.f32 %v2935, %v2941
        %v2944 = vsub.f32 %v2936, %v2942
        %v2945 = vmul.f32 %v2943, %v2943
        %v2946 = vmul.f32 %v2944, %v2944
        %2947 = vadd.xlane.f32.xlu0 %v2945
        %v2948 = vpop.xlane.xlu0 %2947
        %2949 = vadd.xlane.f32.xlu0 %v2946
        %v2950 = vpop.xlane.xlu0 %2949
        %v2951 = vmul.f32 %v2948, %v1306
        %v2952 = vmul.f32 %v2950, %v1306
        %v2953 = vadd.f32 %v2951, 1e-05
        %v2954 = vadd.f32 %v2952, 1e-05
        %v2955 = vrsqrt.pop %v2953
        %v2956 = vmul.f32 %v2955, %v2953
        %v2957 = vmul.f32 %v2956, %v2955
        %v2958 = vmul.f32 0.5, %v2957
        %v2959 = vsub.f32 1.5, %v2958
        %v2960 = vmul.f32 %v2955, %v2959
        %vm2961 = vweird.f32 %v2953
        %vm2962 = vweird.f32 %v2955
        %vm2963 = vmor %vm2961, %vm2962
        %v2964 = vsel %vm2963, %v2955, %v2960
        %v2965 = vrsqrt.pop %v2954
        %v2966 = vmul.f32 %v2965, %v2954
        %v2967 = vmul.f32 %v2966, %v2965
        %v2968 = vmul.f32 0.5, %v2967
        %v2969 = vsub.f32 1.5, %v2968
        %v2970 = vmul.f32 %v2965, %v2969
        %vm2971 = vweird.f32 %v2954
        %vm2972 = vweird.f32 %v2965
        %vm2973 = vmor %vm2971, %vm2972
        %v2974 = vsel %vm2973, %v2965, %v2970
        %v2975 = vmul.f32 %v2943, %v2964
        %v2976 = vmul.f32 %v2944, %v2974
        %v2978 = vperm.slane %v1047, 0
        %v2980 = vmul.f32 %v2975, %v2978
        %v2981 = vmul.f32 %v2976, %v2978
        %v2983 = vperm.slane %v1048, 0
        %v2985 = vadd.f32 %v2980, %v2983
        %v2986 = vadd.f32 %v2981, %v2983
        %v2987 = vpack.c.bf16 %v2986, %v2985
        %v3004 = vunpack.c.l.b16 %v1116
        %v3005 = vunpack.c.l.b16 %v1117
        %v3006 = vunpack.c.l.b16 %v1118
        %v3007 = vunpack.c.l.b16 %v1119
        %v3008 = vunpack.c.l.b16 %v1120
        %v3009 = vunpack.c.l.b16 %v1121
        %v3010 = vunpack.c.l.b16 %v1122
        %v3011 = vunpack.c.l.b16 %v1123
        %v3012 = vunpack.c.l.b16 %v1124
        %v3013 = vunpack.c.l.b16 %v1125
        %v3014 = vunpack.c.l.b16 %v1126
        %v3015 = vunpack.c.l.b16 %v1127
        %v3016 = vunpack.c.l.b16 %v1128
        %v3017 = vunpack.c.l.b16 %v1129
        %v3018 = vunpack.c.l.b16 %v1130
        %v3019 = vunpack.c.l.b16 %v1131
        %v3020 = vpack.c.b16 %v3005, %v3004
        %v3021 = vpack.c.b16 %v3007, %v3006
        %v3022 = vpack.c.b16 %v3009, %v3008
        %v3023 = vpack.c.b16 %v3011, %v3010
        %v3024 = vpack.c.b16 %v3013, %v3012
        %v3025 = vpack.c.b16 %v3015, %v3014
        %v3026 = vpack.c.b16 %v3017, %v3016
        %v3027 = vpack.c.b16 %v3019, %v3018
        %3036 = vmatpush.bf16.msra.mxu0 %v3027
        %3037 = vmatpush.bf16.msra.mxu0 %v3026
        %3038 = vmatpush.bf16.msra.mxu0 %v3025
        %3039 = vmatpush.bf16.msra.mxu0 %v3024
        %3040 = vmatpush.bf16.msra.mxu0 %v3023
        %3041 = vmatpush.bf16.msra.mxu0 %v3022
        %3042 = vmatpush.bf16.msra.mxu0 %v3021
        %3043 = vmatpush.bf16.msra.mxu0 %v3020
        %3044 = vmatmul.bf16.gmra.mxu0 %v2987
        %v3045 = vpop.f32.mrf.mxu0
        %v3046 = vadd.f32 0.0, %v3045
        %v3047 = vpop.f32.mrf.mxu0
        %v3048 = vadd.f32 0.0, %v3047
        %3049 = vdwg.mxu0
        %v3050 = vmul.f32 %v3046, 0.17677669
        %v3051 = vmul.f32 %v3048, 0.17677669
        %v3060 = vunpack.c.l.b16 %v1132
        %v3061 = vunpack.c.l.b16 %v1133
        %v3062 = vunpack.c.l.b16 %v1134
        %v3063 = vunpack.c.l.b16 %v1135
        %v3064 = vunpack.c.l.b16 %v1136
        %v3065 = vunpack.c.l.b16 %v1137
        %v3066 = vunpack.c.l.b16 %v1138
        %v3067 = vunpack.c.l.b16 %v1139
        %v3068 = vpack.c.b16 %v3061, %v3060
        %v3069 = vpack.c.b16 %v3063, %v3062
        %v3070 = vpack.c.b16 %v3065, %v3064
        %v3071 = vpack.c.b16 %v3067, %v3066
        %v3077 = vsel %vm2863, %v1044, 0
        %3079 = vmatpush.bf16.msra.mxu0 0
        %3080 = vmatpush.bf16.msra.mxu0 0
        %3081 = vmatpush.bf16.msra.mxu0 0
        %3082 = vmatpush.bf16.msra.mxu0 0
        %3083 = vmatpush.bf16.msra.mxu0 %v3071
        %3084 = vmatpush.bf16.msra.mxu0 %v3070
        %3085 = vmatpush.bf16.msra.mxu0 %v3069
        %3086 = vmatpush.bf16.msra.mxu0 %v3068
        %3087 = vmatmul.bf16.gmra.mxu0 %v3077
        %v3088 = vpop.f32.mrf.mxu0
        %v3089 = vadd.f32 0.0, %v3088
        %v3090 = vpop.f32.mrf.mxu0
        %v3091 = vadd.f32 0.0, %v3090
        %3092 = vdwg.mxu0
        %v3101 = vunpack.c.l.b16 %v1140
        %v3102 = vunpack.c.l.b16 %v1141
        %v3103 = vunpack.c.l.b16 %v1142
        %v3104 = vunpack.c.l.b16 %v1143
        %v3105 = vunpack.c.l.b16 %v1144
        %v3106 = vunpack.c.l.b16 %v1145
        %v3107 = vunpack.c.l.b16 %v1146
        %v3108 = vunpack.c.l.b16 %v1147
        %v3109 = vpack.c.b16 %v3102, %v3101
        %v3110 = vpack.c.b16 %v3104, %v3103
        %v3111 = vpack.c.b16 %v3106, %v3105
        %v3112 = vpack.c.b16 %v3108, %v3107
        %3117 = vmatpush.bf16.msra.mxu0 0
        %3118 = vmatpush.bf16.msra.mxu0 0
        %3119 = vmatpush.bf16.msra.mxu0 0
        %3120 = vmatpush.bf16.msra.mxu0 0
        %3121 = vmatpush.bf16.msra.mxu0 %v3112
        %3122 = vmatpush.bf16.msra.mxu0 %v3111
        %3123 = vmatpush.bf16.msra.mxu0 %v3110
        %3124 = vmatpush.bf16.msra.mxu0 %v3109
        %3125 = vmatmul.bf16.gmra.mxu0 %v3077
        %v3126 = vpop.f32.mrf.mxu0
        %v3127 = vadd.f32 0.0, %v3126
        %v3128 = vpop.f32.mrf.mxu0
        %v3129 = vadd.f32 0.0, %v3128
        %3130 = vdwg.mxu0
        %3133 = vrot.lane.b32.xlu0 %v3050, 96
        %v3134 = vpop.permute.xlu0 %3133
        %3135 = vrot.lane.b32.xlu0 %v3051, 96
        %v3136 = vpop.permute.xlu0 %3135
        %3139 = vrot.lane.b32.xlu0 %v3050, 64
        %v3140 = vpop.permute.xlu0 %3139
        %3141 = vrot.lane.b32.xlu0 %v3051, 64
        %v3142 = vpop.permute.xlu0 %3141
        %3145 = vrot.lane.b32.xlu0 %v3050, 32
        %v3146 = vpop.permute.xlu0 %3145
        %3147 = vrot.lane.b32.xlu0 %v3051, 32
        %v3148 = vpop.permute.xlu0 %3147
        %v3151 = vrot.slane %v3140, 4
        %v3152 = vsel %vm1563, %v3151, %v3050
        %v3153 = vrot.slane %v3050, 4
        %v3154 = vsel %vm1563, %v3140, %v3153
        %v3156 = vunpack.c.l.s4 1983009808
        %v3157 = vunpack.c.0.s8 %v3156
        %v3158 = vperm.slane %v3152, %v3157
        %v3160 = vunpack.c.l.s4 1983009808
        %v3161 = vunpack.c.0.s8 %v3160
        %v3162 = vperm.slane %v3154, %v3161
        %v3163 = vrot.slane %v3146, 4
        %v3164 = vsel %vm1563, %v3163, %v3134
        %v3165 = vrot.slane %v3134, 4
        %v3166 = vsel %vm1563, %v3146, %v3165
        %v3168 = vunpack.c.l.s4 1983009808
        %v3169 = vunpack.c.0.s8 %v3168
        %v3170 = vperm.slane %v3164, %v3169
        %v3172 = vunpack.c.l.s4 1983009808
        %v3173 = vunpack.c.0.s8 %v3172
        %v3174 = vperm.slane %v3166, %v3173
        %v3175 = vrot.slane %v3170, 4
        %v3176 = vsel %vm1563, %v3175, %v3158
        %v3177 = vrot.slane %v3158, 4
        %v3178 = vsel %vm1563, %v3170, %v3177
        %v3180 = vunpack.c.l.s4 1934713408
        %v3181 = vunpack.c.0.s8 %v3180
        %v3182 = vperm.slane %v3176, %v3181
        %v3184 = vunpack.c.l.s4 1934713408
        %v3185 = vunpack.c.0.s8 %v3184
        %v3186 = vperm.slane %v3178, %v3185
        %v3187 = vrot.slane %v3174, 4
        %v3188 = vsel %vm1563, %v3187, %v3162
        %v3189 = vrot.slane %v3162, 4
        %v3190 = vsel %vm1563, %v3174, %v3189
        %v3192 = vunpack.c.l.s4 1934713408
        %v3193 = vunpack.c.0.s8 %v3192
        %v3194 = vperm.slane %v3188, %v3193
        %v3196 = vunpack.c.l.s4 1934713408
        %v3197 = vunpack.c.0.s8 %v3196
        %v3198 = vperm.slane %v3190, %v3197
        %v3199 = vrot.slane %v3182, 4
        %v3200 = vsel %vm1563, 0.0, %v3199
        %v3201 = vrot.slane %v3186, 4
        %v3202 = vsel %vm1563, 0.0, %v3201
        %v3203 = vrot.slane %v3194, 4
        %v3204 = vsel %vm1563, 0.0, %v3203
        %v3205 = vrot.slane %v3198, 4
        %v3206 = vsel %vm1563, 0.0, %v3205
        %v3207 = vrot.slane %v3142, 4
        %v3208 = vsel %vm1563, %v3207, %v3051
        %v3209 = vrot.slane %v3051, 4
        %v3210 = vsel %vm1563, %v3142, %v3209
        %v3212 = vunpack.c.l.s4 1983009808
        %v3213 = vunpack.c.0.s8 %v3212
        %v3214 = vperm.slane %v3208, %v3213
        %v3216 = vunpack.c.l.s4 1983009808
        %v3217 = vunpack.c.0.s8 %v3216
        %v3218 = vperm.slane %v3210, %v3217
        %v3219 = vrot.slane %v3148, 4
        %v3220 = vsel %vm1563, %v3219, %v3136
        %v3221 = vrot.slane %v3136, 4
        %v3222 = vsel %vm1563, %v3148, %v3221
        %v3224 = vunpack.c.l.s4 1983009808
        %v3225 = vunpack.c.0.s8 %v3224
        %v3226 = vperm.slane %v3220, %v3225
        %v3228 = vunpack.c.l.s4 1983009808
        %v3229 = vunpack.c.0.s8 %v3228
        %v3230 = vperm.slane %v3222, %v3229
        %v3231 = vrot.slane %v3226, 4
        %v3232 = vsel %vm1563, %v3231, %v3214
        %v3233 = vrot.slane %v3214, 4
        %v3234 = vsel %vm1563, %v3226, %v3233
        %v3236 = vunpack.c.l.s4 1934713408
        %v3237 = vunpack.c.0.s8 %v3236
        %v3238 = vperm.slane %v3232, %v3237
        %v3240 = vunpack.c.l.s4 1934713408
        %v3241 = vunpack.c.0.s8 %v3240
        %v3242 = vperm.slane %v3234, %v3241
        %v3243 = vrot.slane %v3230, 4
        %v3244 = vsel %vm1563, %v3243, %v3218
        %v3245 = vrot.slane %v3218, 4
        %v3246 = vsel %vm1563, %v3230, %v3245
        %v3248 = vunpack.c.l.s4 1934713408
        %v3249 = vunpack.c.0.s8 %v3248
        %v3250 = vperm.slane %v3244, %v3249
        %v3252 = vunpack.c.l.s4 1934713408
        %v3253 = vunpack.c.0.s8 %v3252
        %v3254 = vperm.slane %v3246, %v3253
        %v3255 = vrot.slane %v3238, 4
        %v3256 = vsel %vm1563, 0.0, %v3255
        %v3257 = vrot.slane %v3242, 4
        %v3258 = vsel %vm1563, 0.0, %v3257
        %v3259 = vrot.slane %v3250, 4
        %v3260 = vsel %vm1563, 0.0, %v3259
        %v3261 = vrot.slane %v3254, 4
        %v3262 = vsel %vm1563, 0.0, %v3261
        %v3263 = vsel %vm1563, %v3201, %v3182
        %v3265 = vunpack.c.l.s4 1983009808
        %v3266 = vunpack.c.0.s8 %v3265
        %v3267 = vperm.slane %v3263, %v3266
        %v3268 = vrot.slane %v3202, 4
        %v3269 = vsel %vm1563, %v3268, %v3200
        %v3271 = vunpack.c.l.s4 1983009808
        %v3272 = vunpack.c.0.s8 %v3271
        %v3273 = vperm.slane %v3269, %v3272
        %v3274 = vsel %vm1563, %v3205, %v3194
        %v3276 = vunpack.c.l.s4 1983009808
        %v3277 = vunpack.c.0.s8 %v3276
        %v3278 = vperm.slane %v3274, %v3277
        %v3279 = vrot.slane %v3206, 4
        %v3280 = vsel %vm1563, %v3279, %v3204
        %v3282 = vunpack.c.l.s4 1983009808
        %v3283 = vunpack.c.0.s8 %v3282
        %v3284 = vperm.slane %v3280, %v3283
        %v3285 = vrot.slane %v3273, 4
        %v3286 = vsel %vm1563, %v3285, %v3267
        %v3287 = vrot.slane %v3267, 4
        %v3288 = vsel %vm1563, %v3273, %v3287
        %v3290 = vunpack.c.l.s4 1934713408
        %v3291 = vunpack.c.0.s8 %v3290
        %v3292 = vperm.slane %v3286, %v3291
        %v3294 = vunpack.c.l.s4 1934713408
        %v3295 = vunpack.c.0.s8 %v3294
        %v3296 = vperm.slane %v3288, %v3295
        %v3297 = vrot.slane %v3284, 4
        %v3298 = vsel %vm1563, %v3297, %v3278
        %v3299 = vrot.slane %v3278, 4
        %v3300 = vsel %vm1563, %v3284, %v3299
        %v3302 = vunpack.c.l.s4 1934713408
        %v3303 = vunpack.c.0.s8 %v3302
        %v3304 = vperm.slane %v3298, %v3303
        %v3306 = vunpack.c.l.s4 1934713408
        %v3307 = vunpack.c.0.s8 %v3306
        %v3308 = vperm.slane %v3300, %v3307
        %v3309 = vrot.slane %v3304, 4
        %v3310 = vsel %vm1563, %v3309, %v3292
        %v3311 = vrot.slane %v3292, 4
        %v3312 = vsel %vm1563, %v3304, %v3311
        %v3313 = vrot.slane %v3308, 4
        %v3314 = vsel %vm1563, %v3313, %v3296
        %v3315 = vrot.slane %v3296, 4
        %v3316 = vsel %vm1563, %v3308, %v3315
        %v3317 = vsel %vm1563, %v3257, %v3238
        %v3319 = vunpack.c.l.s4 1983009808
        %v3320 = vunpack.c.0.s8 %v3319
        %v3321 = vperm.slane %v3317, %v3320
        %v3322 = vrot.slane %v3258, 4
        %v3323 = vsel %vm1563, %v3322, %v3256
        %v3325 = vunpack.c.l.s4 1983009808
        %v3326 = vunpack.c.0.s8 %v3325
        %v3327 = vperm.slane %v3323, %v3326
        %v3328 = vsel %vm1563, %v3261, %v3250
        %v3330 = vunpack.c.l.s4 1983009808
        %v3331 = vunpack.c.0.s8 %v3330
        %v3332 = vperm.slane %v3328, %v3331
        %v3333 = vrot.slane %v3262, 4
        %v3334 = vsel %vm1563, %v3333, %v3260
        %v3336 = vunpack.c.l.s4 1983009808
        %v3337 = vunpack.c.0.s8 %v3336
        %v3338 = vperm.slane %v3334, %v3337
        %v3339 = vrot.slane %v3327, 4
        %v3340 = vsel %vm1563, %v3339, %v3321
        %v3341 = vrot.slane %v3321, 4
        %v3342 = vsel %vm1563, %v3327, %v3341
        %v3344 = vunpack.c.l.s4 1934713408
        %v3345 = vunpack.c.0.s8 %v3344
        %v3346 = vperm.slane %v3340, %v3345
        %v3348 = vunpack.c.l.s4 1934713408
        %v3349 = vunpack.c.0.s8 %v3348
        %v3350 = vperm.slane %v3342, %v3349
        %v3351 = vrot.slane %v3338, 4
        %v3352 = vsel %vm1563, %v3351, %v3332
        %v3353 = vrot.slane %v3332, 4
        %v3354 = vsel %vm1563, %v3338, %v3353
        %v3356 = vunpack.c.l.s4 1934713408
        %v3357 = vunpack.c.0.s8 %v3356
        %v3358 = vperm.slane %v3352, %v3357
        %v3360 = vunpack.c.l.s4 1934713408
        %v3361 = vunpack.c.0.s8 %v3360
        %v3362 = vperm.slane %v3354, %v3361
        %v3363 = vrot.slane %v3358, 4
        %v3364 = vsel %vm1563, %v3363, %v3346
        %v3365 = vrot.slane %v3346, 4
        %v3366 = vsel %vm1563, %v3358, %v3365
        %v3367 = vrot.slane %v3362, 4
        %v3368 = vsel %vm1563, %v3367, %v3350
        %v3369 = vrot.slane %v3350, 4
        %v3370 = vsel %vm1563, %v3362, %v3369
        %v3371 = vpack.c.bf16 %v3310, %v3310
        %v3372 = vpack.c.bf16 %v3364, %v3364
        %v3373 = vpack.c.bf16 %v3312, %v3312
        %v3374 = vpack.c.bf16 %v3366, %v3366
        %v3375 = vpack.c.bf16 %v3314, %v3314
        %v3376 = vpack.c.bf16 %v3368, %v3368
        %v3377 = vpack.c.bf16 %v3316, %v3316
        %v3378 = vpack.c.bf16 %v3370, %v3370
        %3381 = vrot.lane.b32.xlu0 %v3089, 96
        %v3382 = vpop.permute.xlu0 %3381
        %3383 = vrot.lane.b32.xlu0 %v3091, 96
        %v3384 = vpop.permute.xlu0 %3383
        %3387 = vrot.lane.b32.xlu0 %v3089, 64
        %v3388 = vpop.permute.xlu0 %3387
        %3389 = vrot.lane.b32.xlu0 %v3091, 64
        %v3390 = vpop.permute.xlu0 %3389
        %3393 = vrot.lane.b32.xlu0 %v3089, 32
        %v3394 = vpop.permute.xlu0 %3393
        %3395 = vrot.lane.b32.xlu0 %v3091, 32
        %v3396 = vpop.permute.xlu0 %3395
        %v3399 = vrot.slane %v3388, 4
        %v3400 = vsel %vm1563, %v3399, %v3089
        %v3401 = vrot.slane %v3089, 4
        %v3402 = vsel %vm1563, %v3388, %v3401
        %v3404 = vunpack.c.l.s4 1983009808
        %v3405 = vunpack.c.0.s8 %v3404
        %v3406 = vperm.slane %v3400, %v3405
        %v3408 = vunpack.c.l.s4 1983009808
        %v3409 = vunpack.c.0.s8 %v3408
        %v3410 = vperm.slane %v3402, %v3409
        %v3411 = vrot.slane %v3394, 4
        %v3412 = vsel %vm1563, %v3411, %v3382
        %v3413 = vrot.slane %v3382, 4
        %v3414 = vsel %vm1563, %v3394, %v3413
        %v3416 = vunpack.c.l.s4 1983009808
        %v3417 = vunpack.c.0.s8 %v3416
        %v3418 = vperm.slane %v3412, %v3417
        %v3420 = vunpack.c.l.s4 1983009808
        %v3421 = vunpack.c.0.s8 %v3420
        %v3422 = vperm.slane %v3414, %v3421
        %v3423 = vrot.slane %v3418, 4
        %v3424 = vsel %vm1563, %v3423, %v3406
        %v3425 = vrot.slane %v3406, 4
        %v3426 = vsel %vm1563, %v3418, %v3425
        %v3428 = vunpack.c.l.s4 1934713408
        %v3429 = vunpack.c.0.s8 %v3428
        %v3430 = vperm.slane %v3424, %v3429
        %v3432 = vunpack.c.l.s4 1934713408
        %v3433 = vunpack.c.0.s8 %v3432
        %v3434 = vperm.slane %v3426, %v3433
        %v3435 = vrot.slane %v3422, 4
        %v3436 = vsel %vm1563, %v3435, %v3410
        %v3437 = vrot.slane %v3410, 4
        %v3438 = vsel %vm1563, %v3422, %v3437
        %v3440 = vunpack.c.l.s4 1934713408
        %v3441 = vunpack.c.0.s8 %v3440
        %v3442 = vperm.slane %v3436, %v3441
        %v3444 = vunpack.c.l.s4 1934713408
        %v3445 = vunpack.c.0.s8 %v3444
        %v3446 = vperm.slane %v3438, %v3445
        %v3447 = vrot.slane %v3430, 4
        %v3448 = vsel %vm1563, 0.0, %v3447
        %v3449 = vrot.slane %v3434, 4
        %v3450 = vsel %vm1563, 0.0, %v3449
        %v3451 = vrot.slane %v3442, 4
        %v3452 = vsel %vm1563, 0.0, %v3451
        %v3453 = vrot.slane %v3446, 4
        %v3454 = vsel %vm1563, 0.0, %v3453
        %v3455 = vrot.slane %v3390, 4
        %v3456 = vsel %vm1563, %v3455, %v3091
        %v3457 = vrot.slane %v3091, 4
        %v3458 = vsel %vm1563, %v3390, %v3457
        %v3460 = vunpack.c.l.s4 1983009808
        %v3461 = vunpack.c.0.s8 %v3460
        %v3462 = vperm.slane %v3456, %v3461
        %v3464 = vunpack.c.l.s4 1983009808
        %v3465 = vunpack.c.0.s8 %v3464
        %v3466 = vperm.slane %v3458, %v3465
        %v3467 = vrot.slane %v3396, 4
        %v3468 = vsel %vm1563, %v3467, %v3384
        %v3469 = vrot.slane %v3384, 4
        %v3470 = vsel %vm1563, %v3396, %v3469
        %v3472 = vunpack.c.l.s4 1983009808
        %v3473 = vunpack.c.0.s8 %v3472
        %v3474 = vperm.slane %v3468, %v3473
        %v3476 = vunpack.c.l.s4 1983009808
        %v3477 = vunpack.c.0.s8 %v3476
        %v3478 = vperm.slane %v3470, %v3477
        %v3479 = vrot.slane %v3474, 4
        %v3480 = vsel %vm1563, %v3479, %v3462
        %v3481 = vrot.slane %v3462, 4
        %v3482 = vsel %vm1563, %v3474, %v3481
        %v3484 = vunpack.c.l.s4 1934713408
        %v3485 = vunpack.c.0.s8 %v3484
        %v3486 = vperm.slane %v3480, %v3485
        %v3488 = vunpack.c.l.s4 1934713408
        %v3489 = vunpack.c.0.s8 %v3488
        %v3490 = vperm.slane %v3482, %v3489
        %v3491 = vrot.slane %v3478, 4
        %v3492 = vsel %vm1563, %v3491, %v3466
        %v3493 = vrot.slane %v3466, 4
        %v3494 = vsel %vm1563, %v3478, %v3493
        %v3496 = vunpack.c.l.s4 1934713408
        %v3497 = vunpack.c.0.s8 %v3496
        %v3498 = vperm.slane %v3492, %v3497
        %v3500 = vunpack.c.l.s4 1934713408
        %v3501 = vunpack.c.0.s8 %v3500
        %v3502 = vperm.slane %v3494, %v3501
        %v3503 = vrot.slane %v3486, 4
        %v3504 = vsel %vm1563, 0.0, %v3503
        %v3505 = vrot.slane %v3490, 4
        %v3506 = vsel %vm1563, 0.0, %v3505
        %v3507 = vrot.slane %v3498, 4
        %v3508 = vsel %vm1563, 0.0, %v3507
        %v3509 = vrot.slane %v3502, 4
        %v3510 = vsel %vm1563, 0.0, %v3509
        %v3511 = vsel %vm1563, %v3449, %v3430
        %v3513 = vunpack.c.l.s4 1983009808
        %v3514 = vunpack.c.0.s8 %v3513
        %v3515 = vperm.slane %v3511, %v3514
        %v3516 = vrot.slane %v3450, 4
        %v3517 = vsel %vm1563, %v3516, %v3448
        %v3519 = vunpack.c.l.s4 1983009808
        %v3520 = vunpack.c.0.s8 %v3519
        %v3521 = vperm.slane %v3517, %v3520
        %v3522 = vsel %vm1563, %v3453, %v3442
        %v3524 = vunpack.c.l.s4 1983009808
        %v3525 = vunpack.c.0.s8 %v3524
        %v3526 = vperm.slane %v3522, %v3525
        %v3527 = vrot.slane %v3454, 4
        %v3528 = vsel %vm1563, %v3527, %v3452
        %v3530 = vunpack.c.l.s4 1983009808
        %v3531 = vunpack.c.0.s8 %v3530
        %v3532 = vperm.slane %v3528, %v3531
        %v3533 = vrot.slane %v3521, 4
        %v3534 = vsel %vm1563, %v3533, %v3515
        %v3535 = vrot.slane %v3515, 4
        %v3536 = vsel %vm1563, %v3521, %v3535
        %v3538 = vunpack.c.l.s4 1934713408
        %v3539 = vunpack.c.0.s8 %v3538
        %v3540 = vperm.slane %v3534, %v3539
        %v3542 = vunpack.c.l.s4 1934713408
        %v3543 = vunpack.c.0.s8 %v3542
        %v3544 = vperm.slane %v3536, %v3543
        %v3545 = vrot.slane %v3532, 4
        %v3546 = vsel %vm1563, %v3545, %v3526
        %v3547 = vrot.slane %v3526, 4
        %v3548 = vsel %vm1563, %v3532, %v3547
        %v3550 = vunpack.c.l.s4 1934713408
        %v3551 = vunpack.c.0.s8 %v3550
        %v3552 = vperm.slane %v3546, %v3551
        %v3554 = vunpack.c.l.s4 1934713408
        %v3555 = vunpack.c.0.s8 %v3554
        %v3556 = vperm.slane %v3548, %v3555
        %v3557 = vrot.slane %v3552, 4
        %v3558 = vsel %vm1563, %v3557, %v3540
        %v3559 = vrot.slane %v3540, 4
        %v3560 = vsel %vm1563, %v3552, %v3559
        %v3561 = vrot.slane %v3556, 4
        %v3562 = vsel %vm1563, %v3561, %v3544
        %v3563 = vrot.slane %v3544, 4
        %v3564 = vsel %vm1563, %v3556, %v3563
        %v3565 = vsel %vm1563, %v3505, %v3486
        %v3567 = vunpack.c.l.s4 1983009808
        %v3568 = vunpack.c.0.s8 %v3567
        %v3569 = vperm.slane %v3565, %v3568
        %v3570 = vrot.slane %v3506, 4
        %v3571 = vsel %vm1563, %v3570, %v3504
        %v3573 = vunpack.c.l.s4 1983009808
        %v3574 = vunpack.c.0.s8 %v3573
        %v3575 = vperm.slane %v3571, %v3574
        %v3576 = vsel %vm1563, %v3509, %v3498
        %v3578 = vunpack.c.l.s4 1983009808
        %v3579 = vunpack.c.0.s8 %v3578
        %v3580 = vperm.slane %v3576, %v3579
        %v3581 = vrot.slane %v3510, 4
        %v3582 = vsel %vm1563, %v3581, %v3508
        %v3584 = vunpack.c.l.s4 1983009808
        %v3585 = vunpack.c.0.s8 %v3584
        %v3586 = vperm.slane %v3582, %v3585
        %v3587 = vrot.slane %v3575, 4
        %v3588 = vsel %vm1563, %v3587, %v3569
        %v3589 = vrot.slane %v3569, 4
        %v3590 = vsel %vm1563, %v3575, %v3589
        %v3592 = vunpack.c.l.s4 1934713408
        %v3593 = vunpack.c.0.s8 %v3592
        %v3594 = vperm.slane %v3588, %v3593
        %v3596 = vunpack.c.l.s4 1934713408
        %v3597 = vunpack.c.0.s8 %v3596
        %v3598 = vperm.slane %v3590, %v3597
        %v3599 = vrot.slane %v3586, 4
        %v3600 = vsel %vm1563, %v3599, %v3580
        %v3601 = vrot.slane %v3580, 4
        %v3602 = vsel %vm1563, %v3586, %v3601
        %v3604 = vunpack.c.l.s4 1934713408
        %v3605 = vunpack.c.0.s8 %v3604
        %v3606 = vperm.slane %v3600, %v3605
        %v3608 = vunpack.c.l.s4 1934713408
        %v3609 = vunpack.c.0.s8 %v3608
        %v3610 = vperm.slane %v3602, %v3609
        %v3611 = vrot.slane %v3606, 4
        %v3612 = vsel %vm1563, %v3611, %v3594
        %v3613 = vrot.slane %v3594, 4
        %v3614 = vsel %vm1563, %v3606, %v3613
        %v3615 = vrot.slane %v3610, 4
        %v3616 = vsel %vm1563, %v3615, %v3598
        %v3617 = vrot.slane %v3598, 4
        %v3618 = vsel %vm1563, %v3610, %v3617
        %v3619 = vpack.c.bf16 %v3558, %v3558
        %v3620 = vpack.c.bf16 %v3612, %v3612
        %v3621 = vpack.c.bf16 %v3560, %v3560
        %v3622 = vpack.c.bf16 %v3614, %v3614
        %v3623 = vpack.c.bf16 %v3562, %v3562
        %v3624 = vpack.c.bf16 %v3616, %v3616
        %v3625 = vpack.c.bf16 %v3564, %v3564
        %v3626 = vpack.c.bf16 %v3618, %v3618
        %3629 = vrot.lane.b32.xlu0 %v3127, 96
        %v3630 = vpop.permute.xlu0 %3629
        %3631 = vrot.lane.b32.xlu0 %v3129, 96
        %v3632 = vpop.permute.xlu0 %3631
        %3635 = vrot.lane.b32.xlu0 %v3127, 64
        %v3636 = vpop.permute.xlu0 %3635
        %3637 = vrot.lane.b32.xlu0 %v3129, 64
        %v3638 = vpop.permute.xlu0 %3637
        %3641 = vrot.lane.b32.xlu0 %v3127, 32
        %v3642 = vpop.permute.xlu0 %3641
        %3643 = vrot.lane.b32.xlu0 %v3129, 32
        %v3644 = vpop.permute.xlu0 %3643
        %v3647 = vrot.slane %v3636, 4
        %v3648 = vsel %vm1563, %v3647, %v3127
        %v3649 = vrot.slane %v3127, 4
        %v3650 = vsel %vm1563, %v3636, %v3649
        %v3652 = vunpack.c.l.s4 1983009808
        %v3653 = vunpack.c.0.s8 %v3652
        %v3654 = vperm.slane %v3648, %v3653
        %v3656 = vunpack.c.l.s4 1983009808
        %v3657 = vunpack.c.0.s8 %v3656
        %v3658 = vperm.slane %v3650, %v3657
        %v3659 = vrot.slane %v3642, 4
        %v3660 = vsel %vm1563, %v3659, %v3630
        %v3661 = vrot.slane %v3630, 4
        %v3662 = vsel %vm1563, %v3642, %v3661
        %v3664 = vunpack.c.l.s4 1983009808
        %v3665 = vunpack.c.0.s8 %v3664
        %v3666 = vperm.slane %v3660, %v3665
        %v3668 = vunpack.c.l.s4 1983009808
        %v3669 = vunpack.c.0.s8 %v3668
        %v3670 = vperm.slane %v3662, %v3669
        %v3671 = vrot.slane %v3666, 4
        %v3672 = vsel %vm1563, %v3671, %v3654
        %v3673 = vrot.slane %v3654, 4
        %v3674 = vsel %vm1563, %v3666, %v3673
        %v3676 = vunpack.c.l.s4 1934713408
        %v3677 = vunpack.c.0.s8 %v3676
        %v3678 = vperm.slane %v3672, %v3677
        %v3680 = vunpack.c.l.s4 1934713408
        %v3681 = vunpack.c.0.s8 %v3680
        %v3682 = vperm.slane %v3674, %v3681
        %v3683 = vrot.slane %v3670, 4
        %v3684 = vsel %vm1563, %v3683, %v3658
        %v3685 = vrot.slane %v3658, 4
        %v3686 = vsel %vm1563, %v3670, %v3685
        %v3688 = vunpack.c.l.s4 1934713408
        %v3689 = vunpack.c.0.s8 %v3688
        %v3690 = vperm.slane %v3684, %v3689
        %v3692 = vunpack.c.l.s4 1934713408
        %v3693 = vunpack.c.0.s8 %v3692
        %v3694 = vperm.slane %v3686, %v3693
        %v3695 = vrot.slane %v3678, 4
        %v3696 = vsel %vm1563, 0.0, %v3695
        %v3697 = vrot.slane %v3682, 4
        %v3698 = vsel %vm1563, 0.0, %v3697
        %v3699 = vrot.slane %v3690, 4
        %v3700 = vsel %vm1563, 0.0, %v3699
        %v3701 = vrot.slane %v3694, 4
        %v3702 = vsel %vm1563, 0.0, %v3701
        %v3703 = vrot.slane %v3638, 4
        %v3704 = vsel %vm1563, %v3703, %v3129
        %v3705 = vrot.slane %v3129, 4
        %v3706 = vsel %vm1563, %v3638, %v3705
        %v3708 = vunpack.c.l.s4 1983009808
        %v3709 = vunpack.c.0.s8 %v3708
        %v3710 = vperm.slane %v3704, %v3709
        %v3712 = vunpack.c.l.s4 1983009808
        %v3713 = vunpack.c.0.s8 %v3712
        %v3714 = vperm.slane %v3706, %v3713
        %v3715 = vrot.slane %v3644, 4
        %v3716 = vsel %vm1563, %v3715, %v3632
        %v3717 = vrot.slane %v3632, 4
        %v3718 = vsel %vm1563, %v3644, %v3717
        %v3720 = vunpack.c.l.s4 1983009808
        %v3721 = vunpack.c.0.s8 %v3720
        %v3722 = vperm.slane %v3716, %v3721
        %v3724 = vunpack.c.l.s4 1983009808
        %v3725 = vunpack.c.0.s8 %v3724
        %v3726 = vperm.slane %v3718, %v3725
        %v3727 = vrot.slane %v3722, 4
        %v3728 = vsel %vm1563, %v3727, %v3710
        %v3729 = vrot.slane %v3710, 4
        %v3730 = vsel %vm1563, %v3722, %v3729
        %v3732 = vunpack.c.l.s4 1934713408
        %v3733 = vunpack.c.0.s8 %v3732
        %v3734 = vperm.slane %v3728, %v3733
        %v3736 = vunpack.c.l.s4 1934713408
        %v3737 = vunpack.c.0.s8 %v3736
        %v3738 = vperm.slane %v3730, %v3737
        %v3739 = vrot.slane %v3726, 4
        %v3740 = vsel %vm1563, %v3739, %v3714
        %v3741 = vrot.slane %v3714, 4
        %v3742 = vsel %vm1563, %v3726, %v3741
        %v3744 = vunpack.c.l.s4 1934713408
        %v3745 = vunpack.c.0.s8 %v3744
        %v3746 = vperm.slane %v3740, %v3745
        %v3748 = vunpack.c.l.s4 1934713408
        %v3749 = vunpack.c.0.s8 %v3748
        %v3750 = vperm.slane %v3742, %v3749
        %v3751 = vrot.slane %v3734, 4
        %v3752 = vsel %vm1563, 0.0, %v3751
        %v3753 = vrot.slane %v3738, 4
        %v3754 = vsel %vm1563, 0.0, %v3753
        %v3755 = vrot.slane %v3746, 4
        %v3756 = vsel %vm1563, 0.0, %v3755
        %v3757 = vrot.slane %v3750, 4
        %v3758 = vsel %vm1563, 0.0, %v3757
        %v3759 = vsel %vm1563, %v3697, %v3678
        %v3761 = vunpack.c.l.s4 1983009808
        %v3762 = vunpack.c.0.s8 %v3761
        %v3763 = vperm.slane %v3759, %v3762
        %v3764 = vrot.slane %v3698, 4
        %v3765 = vsel %vm1563, %v3764, %v3696
        %v3767 = vunpack.c.l.s4 1983009808
        %v3768 = vunpack.c.0.s8 %v3767
        %v3769 = vperm.slane %v3765, %v3768
        %v3770 = vsel %vm1563, %v3701, %v3690
        %v3772 = vunpack.c.l.s4 1983009808
        %v3773 = vunpack.c.0.s8 %v3772
        %v3774 = vperm.slane %v3770, %v3773
        %v3775 = vrot.slane %v3702, 4
        %v3776 = vsel %vm1563, %v3775, %v3700
        %v3778 = vunpack.c.l.s4 1983009808
        %v3779 = vunpack.c.0.s8 %v3778
        %v3780 = vperm.slane %v3776, %v3779
        %v3781 = vrot.slane %v3769, 4
        %v3782 = vsel %vm1563, %v3781, %v3763
        %v3783 = vrot.slane %v3763, 4
        %v3784 = vsel %vm1563, %v3769, %v3783
        %v3786 = vunpack.c.l.s4 1934713408
        %v3787 = vunpack.c.0.s8 %v3786
        %v3788 = vperm.slane %v3782, %v3787
        %v3790 = vunpack.c.l.s4 1934713408
        %v3791 = vunpack.c.0.s8 %v3790
        %v3792 = vperm.slane %v3784, %v3791
        %v3793 = vrot.slane %v3780, 4
        %v3794 = vsel %vm1563, %v3793, %v3774
        %v3795 = vrot.slane %v3774, 4
        %v3796 = vsel %vm1563, %v3780, %v3795
        %v3798 = vunpack.c.l.s4 1934713408
        %v3799 = vunpack.c.0.s8 %v3798
        %v3800 = vperm.slane %v3794, %v3799
        %v3802 = vunpack.c.l.s4 1934713408
        %v3803 = vunpack.c.0.s8 %v3802
        %v3804 = vperm.slane %v3796, %v3803
        %v3805 = vrot.slane %v3800, 4
        %v3806 = vsel %vm1563, %v3805, %v3788
        %v3807 = vrot.slane %v3788, 4
        %v3808 = vsel %vm1563, %v3800, %v3807
        %v3809 = vrot.slane %v3804, 4
        %v3810 = vsel %vm1563, %v3809, %v3792
        %v3811 = vrot.slane %v3792, 4
        %v3812 = vsel %vm1563, %v3804, %v3811
        %v3813 = vsel %vm1563, %v3753, %v3734
        %v3815 = vunpack.c.l.s4 1983009808
        %v3816 = vunpack.c.0.s8 %v3815
        %v3817 = vperm.slane %v3813, %v3816
        %v3818 = vrot.slane %v3754, 4
        %v3819 = vsel %vm1563, %v3818, %v3752
        %v3821 = vunpack.c.l.s4 1983009808
        %v3822 = vunpack.c.0.s8 %v3821
        %v3823 = vperm.slane %v3819, %v3822
        %v3824 = vsel %vm1563, %v3757, %v3746
        %v3826 = vunpack.c.l.s4 1983009808
        %v3827 = vunpack.c.0.s8 %v3826
        %v3828 = vperm.slane %v3824, %v3827
        %v3829 = vrot.slane %v3758, 4
        %v3830 = vsel %vm1563, %v3829, %v3756
        %v3832 = vunpack.c.l.s4 1983009808
        %v3833 = vunpack.c.0.s8 %v3832
        %v3834 = vperm.slane %v3830, %v3833
        %v3835 = vrot.slane %v3823, 4
        %v3836 = vsel %vm1563, %v3835, %v3817
        %v3837 = vrot.slane %v3817, 4
        %v3838 = vsel %vm1563, %v3823, %v3837
        %v3840 = vunpack.c.l.s4 1934713408
        %v3841 = vunpack.c.0.s8 %v3840
        %v3842 = vperm.slane %v3836, %v3841
        %v3844 = vunpack.c.l.s4 1934713408
        %v3845 = vunpack.c.0.s8 %v3844
        %v3846 = vperm.slane %v3838, %v3845
        %v3847 = vrot.slane %v3834, 4
        %v3848 = vsel %vm1563, %v3847, %v3828
        %v3849 = vrot.slane %v3828, 4
        %v3850 = vsel %vm1563, %v3834, %v3849
        %v3852 = vunpack.c.l.s4 1934713408
        %v3853 = vunpack.c.0.s8 %v3852
        %v3854 = vperm.slane %v3848, %v3853
        %v3856 = vunpack.c.l.s4 1934713408
        %v3857 = vunpack.c.0.s8 %v3856
        %v3858 = vperm.slane %v3850, %v3857
        %v3859 = vrot.slane %v3854, 4
        %v3860 = vsel %vm1563, %v3859, %v3842
        %v3861 = vrot.slane %v3842, 4
        %v3862 = vsel %vm1563, %v3854, %v3861
        %v3863 = vrot.slane %v3858, 4
        %v3864 = vsel %vm1563, %v3863, %v3846
        %v3865 = vrot.slane %v3846, 4
        %v3866 = vsel %vm1563, %v3858, %v3865
        %v3867 = vpack.c.bf16 %v3806, %v3806
        %v3868 = vpack.c.bf16 %v3860, %v3860
        %v3869 = vpack.c.bf16 %v3808, %v3808
        %v3870 = vpack.c.bf16 %v3862, %v3862
        %v3871 = vpack.c.bf16 %v3810, %v3810
        %v3872 = vpack.c.bf16 %v3864, %v3864
        %v3873 = vpack.c.bf16 %v3812, %v3812
        %v3874 = vpack.c.bf16 %v3866, %v3866
        %v3877 = vunpack.c.l.b16 %v3371
        %v3878 = vunpack.c.l.b16 %v3372
        %v3879 = vpack.c.b16 %v3878, %v3877
        %v3882 = vunpack.c.l.b16 %v3619
        %v3883 = vunpack.c.l.b16 %v3620
        %v3884 = vpack.c.b16 %v3883, %v3882
        %v3886 = vsel %vm2297, %v3879, 0
        %v3889 = vsel %vm2297, %v3884, 0
        %3891 = vmatpush.bf16.xpose.msra.mxu0 0
        %3892 = vmatpush.bf16.xpose.msra.mxu0 0
        %3893 = vmatpush.bf16.xpose.msra.mxu0 0
        %3894 = vmatpush.bf16.xpose.msra.mxu0 0
        %3895 = vmatpush.bf16.xpose.msra.mxu0 0
        %3896 = vmatpush.bf16.xpose.msra.mxu0 0
        %3897 = vmatpush.bf16.xpose.msra.mxu0 0
        %3898 = vmatpush.bf16.xpose.msra.mxu0 %v3889
        %3899 = vmatmul.bf16.gmra.mxu0 %v3886
        %v3900 = vpop.f32.mrf.mxu0
        %v3901 = vadd.f32 0.0, %v3900
        %v3902 = vpop.f32.mrf.mxu0
        %v3903 = vadd.f32 0.0, %v3902
        %3904 = vdwg.mxu0
        %v3907 = vunpack.c.l.b16 %v3373
        %v3908 = vunpack.c.l.b16 %v3374
        %v3909 = vpack.c.b16 %v3908, %v3907
        %v3912 = vunpack.c.l.b16 %v3621
        %v3913 = vunpack.c.l.b16 %v3622
        %v3914 = vpack.c.b16 %v3913, %v3912
        %v3916 = vsel %vm2297, %v3909, 0
        %v3919 = vsel %vm2297, %v3914, 0
        %3921 = vmatpush.bf16.xpose.msra.mxu0 0
        %3922 = vmatpush.bf16.xpose.msra.mxu0 0
        %3923 = vmatpush.bf16.xpose.msra.mxu0 0
        %3924 = vmatpush.bf16.xpose.msra.mxu0 0
        %3925 = vmatpush.bf16.xpose.msra.mxu0 0
        %3926 = vmatpush.bf16.xpose.msra.mxu0 0
        %3927 = vmatpush.bf16.xpose.msra.mxu0 0
        %3928 = vmatpush.bf16.xpose.msra.mxu0 %v3919
        %3929 = vmatmul.bf16.gmra.mxu0 %v3916
        %v3930 = vpop.f32.mrf.mxu0
        %v3931 = vadd.f32 0.0, %v3930
        %v3932 = vpop.f32.mrf.mxu0
        %v3933 = vadd.f32 0.0, %v3932
        %3934 = vdwg.mxu0
        %v3937 = vunpack.c.l.b16 %v3375
        %v3938 = vunpack.c.l.b16 %v3376
        %v3939 = vpack.c.b16 %v3938, %v3937
        %v3942 = vunpack.c.l.b16 %v3623
        %v3943 = vunpack.c.l.b16 %v3624
        %v3944 = vpack.c.b16 %v3943, %v3942
        %v3946 = vsel %vm2297, %v3939, 0
        %v3949 = vsel %vm2297, %v3944, 0
        %3951 = vmatpush.bf16.xpose.msra.mxu0 0
        %3952 = vmatpush.bf16.xpose.msra.mxu0 0
        %3953 = vmatpush.bf16.xpose.msra.mxu0 0
        %3954 = vmatpush.bf16.xpose.msra.mxu0 0
        %3955 = vmatpush.bf16.xpose.msra.mxu0 0
        %3956 = vmatpush.bf16.xpose.msra.mxu0 0
        %3957 = vmatpush.bf16.xpose.msra.mxu0 0
        %3958 = vmatpush.bf16.xpose.msra.mxu0 %v3949
        %3959 = vmatmul.bf16.gmra.mxu0 %v3946
        %v3960 = vpop.f32.mrf.mxu0
        %v3961 = vadd.f32 0.0, %v3960
        %v3962 = vpop.f32.mrf.mxu0
        %v3963 = vadd.f32 0.0, %v3962
        %3964 = vdwg.mxu0
        %v3967 = vunpack.c.l.b16 %v3377
        %v3968 = vunpack.c.l.b16 %v3378
        %v3969 = vpack.c.b16 %v3968, %v3967
        %v3972 = vunpack.c.l.b16 %v3625
        %v3973 = vunpack.c.l.b16 %v3626
        %v3974 = vpack.c.b16 %v3973, %v3972
        %v3976 = vsel %vm2297, %v3969, 0
        %v3979 = vsel %vm2297, %v3974, 0
        %3981 = vmatpush.bf16.xpose.msra.mxu0 0
        %3982 = vmatpush.bf16.xpose.msra.mxu0 0
        %3983 = vmatpush.bf16.xpose.msra.mxu0 0
        %3984 = vmatpush.bf16.xpose.msra.mxu0 0
        %3985 = vmatpush.bf16.xpose.msra.mxu0 0
        %3986 = vmatpush.bf16.xpose.msra.mxu0 0
        %3987 = vmatpush.bf16.xpose.msra.mxu0 0
        %3988 = vmatpush.bf16.xpose.msra.mxu0 %v3979
        %3989 = vmatmul.bf16.gmra.mxu0 %v3976
        %v3990 = vpop.f32.mrf.mxu0
        %v3991 = vadd.f32 0.0, %v3990
        %v3992 = vpop.f32.mrf.mxu0
        %v3993 = vadd.f32 0.0, %v3992
        %3994 = vdwg.mxu0
        %v3995 = vsel %vm2408, %v3901, -inf
        %3996 = vmax.xlane.f32.xlu0 %v3995
        %v3997 = vpop.xlane.xlu0 %3996
        %v3998 = vsel %vm2408, %v3903, -inf
        %3999 = vmax.xlane.f32.xlu0 %v3998
        %v4000 = vpop.xlane.xlu0 %3999
        %v4001 = vsel %vm2408, %v3931, -inf
        %4002 = vmax.xlane.f32.xlu0 %v4001
        %v4003 = vpop.xlane.xlu0 %4002
        %v4004 = vsel %vm2408, %v3933, -inf
        %4005 = vmax.xlane.f32.xlu0 %v4004
        %v4006 = vpop.xlane.xlu0 %4005
        %v4007 = vsel %vm2408, %v3961, -inf
        %4008 = vmax.xlane.f32.xlu0 %v4007
        %v4009 = vpop.xlane.xlu0 %4008
        %v4010 = vsel %vm2408, %v3963, -inf
        %4011 = vmax.xlane.f32.xlu0 %v4010
        %v4012 = vpop.xlane.xlu0 %4011
        %v4013 = vsel %vm2408, %v3991, -inf
        %4014 = vmax.xlane.f32.xlu0 %v4013
        %v4015 = vpop.xlane.xlu0 %4014
        %v4016 = vsel %vm2408, %v3993, -inf
        %4017 = vmax.xlane.f32.xlu0 %v4016
        %v4018 = vpop.xlane.xlu0 %4017
        %v4019 = vsub.f32 %v3901, %v3997
        %v4020 = vsub.f32 %v3903, %v4000
        %v4021 = vsub.f32 %v3931, %v4003
        %v4022 = vsub.f32 %v3933, %v4006
        %v4023 = vsub.f32 %v3961, %v4009
        %v4024 = vsub.f32 %v3963, %v4012
        %v4025 = vsub.f32 %v3991, %v4015
        %v4026 = vsub.f32 %v3993, %v4018
        %v4027 = vmul.f32 %v4019, 1.442695
        %v4028 = vpow.pop %v4027
        %v4029 = vmul.f32 %v4020, 1.442695
        %v4030 = vpow.pop %v4029
        %v4031 = vmul.f32 %v4021, 1.442695
        %v4032 = vpow.pop %v4031
        %v4033 = vmul.f32 %v4022, 1.442695
        %v4034 = vpow.pop %v4033
        %v4035 = vmul.f32 %v4023, 1.442695
        %v4036 = vpow.pop %v4035
        %v4037 = vmul.f32 %v4024, 1.442695
        %v4038 = vpow.pop %v4037
        %v4039 = vmul.f32 %v4025, 1.442695
        %v4040 = vpow.pop %v4039
        %v4041 = vmul.f32 %v4026, 1.442695
        %v4042 = vpow.pop %v4041
        %v4043 = vsel %vm2408, %v4028, 0.0
        %4044 = vadd.xlane.f32.xlu0 %v4043
        %v4045 = vpop.xlane.xlu0 %4044
        %v4046 = vsel %vm2408, %v4030, 0.0
        %4047 = vadd.xlane.f32.xlu0 %v4046
        %v4048 = vpop.xlane.xlu0 %4047
        %v4049 = vsel %vm2408, %v4032, 0.0
        %4050 = vadd.xlane.f32.xlu0 %v4049
        %v4051 = vpop.xlane.xlu0 %4050
        %v4052 = vsel %vm2408, %v4034, 0.0
        %4053 = vadd.xlane.f32.xlu0 %v4052
        %v4054 = vpop.xlane.xlu0 %4053
        %v4055 = vsel %vm2408, %v4036, 0.0
        %4056 = vadd.xlane.f32.xlu0 %v4055
        %v4057 = vpop.xlane.xlu0 %4056
        %v4058 = vsel %vm2408, %v4038, 0.0
        %4059 = vadd.xlane.f32.xlu0 %v4058
        %v4060 = vpop.xlane.xlu0 %4059
        %v4061 = vsel %vm2408, %v4040, 0.0
        %4062 = vadd.xlane.f32.xlu0 %v4061
        %v4063 = vpop.xlane.xlu0 %4062
        %v4064 = vsel %vm2408, %v4042, 0.0
        %4065 = vadd.xlane.f32.xlu0 %v4064
        %v4066 = vpop.xlane.xlu0 %4065
        %v4067 = vrcp.pop %v4045
        %v4068 = vrcp.pop %v4048
        %v4069 = vrcp.pop %v4051
        %v4070 = vrcp.pop %v4054
        %v4071 = vrcp.pop %v4057
        %v4072 = vrcp.pop %v4060
        %v4073 = vrcp.pop %v4063
        %v4074 = vrcp.pop %v4066
        %v4075 = vmul.f32 %v4028, %v4067
        %v4076 = vmul.f32 %v4030, %v4068
        %v4077 = vmul.f32 %v4032, %v4069
        %v4078 = vmul.f32 %v4034, %v4070
        %v4079 = vmul.f32 %v4036, %v4071
        %v4080 = vmul.f32 %v4038, %v4072
        %v4081 = vmul.f32 %v4040, %v4073
        %v4082 = vmul.f32 %v4042, %v4074
        %v4083 = vpack.c.bf16 %v4075, %v4075
        %v4084 = vpack.c.bf16 %v4076, %v4076
        %v4085 = vpack.c.bf16 %v4077, %v4077
        %v4086 = vpack.c.bf16 %v4078, %v4078
        %v4087 = vpack.c.bf16 %v4079, %v4079
        %v4088 = vpack.c.bf16 %v4080, %v4080
        %v4089 = vpack.c.bf16 %v4081, %v4081
        %v4090 = vpack.c.bf16 %v4082, %v4082
        %v4093 = vunpack.c.l.b16 %v4083
        %v4094 = vunpack.c.l.b16 %v4084
        %v4095 = vpack.c.b16 %v4094, %v4093
        %v4098 = vunpack.c.l.b16 %v3867
        %v4099 = vunpack.c.l.b16 %v3868
        %v4100 = vpack.c.b16 %v4099, %v4098
        %v4103 = vsel %vm2408, %v4095, 0
        %4105 = vmatpush.bf16.msra.mxu0 0
        %4106 = vmatpush.bf16.msra.mxu0 0
        %4107 = vmatpush.bf16.msra.mxu0 0
        %4108 = vmatpush.bf16.msra.mxu0 0
        %4109 = vmatpush.bf16.msra.mxu0 0
        %4110 = vmatpush.bf16.msra.mxu0 0
        %4111 = vmatpush.bf16.msra.mxu0 0
        %4112 = vmatpush.bf16.msra.mxu0 %v4100
        %4113 = vmatmul.bf16.gmra.mxu0 %v4103
        %v4114 = vpop.f32.mrf.mxu0
        %v4115 = vadd.f32 0.0, %v4114
        %v4116 = vpop.f32.mrf.mxu0
        %v4117 = vadd.f32 0.0, %v4116
        %4118 = vdwg.mxu0
        %v4121 = vunpack.c.l.b16 %v4085
        %v4122 = vunpack.c.l.b16 %v4086
        %v4123 = vpack.c.b16 %v4122, %v4121
        %v4126 = vunpack.c.l.b16 %v3869
        %v4127 = vunpack.c.l.b16 %v3870
        %v4128 = vpack.c.b16 %v4127, %v4126
        %v4131 = vsel %vm2408, %v4123, 0
        %4133 = vmatpush.bf16.msra.mxu0 0
        %4134 = vmatpush.bf16.msra.mxu0 0
        %4135 = vmatpush.bf16.msra.mxu0 0
        %4136 = vmatpush.bf16.msra.mxu0 0
        %4137 = vmatpush.bf16.msra.mxu0 0
        %4138 = vmatpush.bf16.msra.mxu0 0
        %4139 = vmatpush.bf16.msra.mxu0 0
        %4140 = vmatpush.bf16.msra.mxu0 %v4128
        %4141 = vmatmul.bf16.gmra.mxu0 %v4131
        %v4142 = vpop.f32.mrf.mxu0
        %v4143 = vadd.f32 0.0, %v4142
        %v4144 = vpop.f32.mrf.mxu0
        %v4145 = vadd.f32 0.0, %v4144
        %4146 = vdwg.mxu0
        %v4149 = vunpack.c.l.b16 %v4087
        %v4150 = vunpack.c.l.b16 %v4088
        %v4151 = vpack.c.b16 %v4150, %v4149
        %v4154 = vunpack.c.l.b16 %v3871
        %v4155 = vunpack.c.l.b16 %v3872
        %v4156 = vpack.c.b16 %v4155, %v4154
        %v4159 = vsel %vm2408, %v4151, 0
        %4161 = vmatpush.bf16.msra.mxu0 0
        %4162 = vmatpush.bf16.msra.mxu0 0
        %4163 = vmatpush.bf16.msra.mxu0 0
        %4164 = vmatpush.bf16.msra.mxu0 0
        %4165 = vmatpush.bf16.msra.mxu0 0
        %4166 = vmatpush.bf16.msra.mxu0 0
        %4167 = vmatpush.bf16.msra.mxu0 0
        %4168 = vmatpush.bf16.msra.mxu0 %v4156
        %4169 = vmatmul.bf16.gmra.mxu0 %v4159
        %v4170 = vpop.f32.mrf.mxu0
        %v4171 = vadd.f32 0.0, %v4170
        %v4172 = vpop.f32.mrf.mxu0
        %v4173 = vadd.f32 0.0, %v4172
        %4174 = vdwg.mxu0
        %v4177 = vunpack.c.l.b16 %v4089
        %v4178 = vunpack.c.l.b16 %v4090
        %v4179 = vpack.c.b16 %v4178, %v4177
        %v4182 = vunpack.c.l.b16 %v3873
        %v4183 = vunpack.c.l.b16 %v3874
        %v4184 = vpack.c.b16 %v4183, %v4182
        %v4187 = vsel %vm2408, %v4179, 0
        %4189 = vmatpush.bf16.msra.mxu0 0
        %4190 = vmatpush.bf16.msra.mxu0 0
        %4191 = vmatpush.bf16.msra.mxu0 0
        %4192 = vmatpush.bf16.msra.mxu0 0
        %4193 = vmatpush.bf16.msra.mxu0 0
        %4194 = vmatpush.bf16.msra.mxu0 0
        %4195 = vmatpush.bf16.msra.mxu0 0
        %4196 = vmatpush.bf16.msra.mxu0 %v4184
        %4197 = vmatmul.bf16.gmra.mxu0 %v4187
        %v4198 = vpop.f32.mrf.mxu0
        %v4199 = vadd.f32 0.0, %v4198
        %v4200 = vpop.f32.mrf.mxu0
        %v4201 = vadd.f32 0.0, %v4200
        %4202 = vdwg.mxu0
        %v4203 = vrot.slane %v4171, 4
        %v4204 = vsel %vm1563, %v4203, %v4115
        %v4205 = vrot.slane %v4115, 4
        %v4206 = vsel %vm1563, %v4171, %v4205
        %v4208 = vunpack.c.l.s4 1983009808
        %v4209 = vunpack.c.0.s8 %v4208
        %v4210 = vperm.slane %v4204, %v4209
        %v4212 = vunpack.c.l.s4 1983009808
        %v4213 = vunpack.c.0.s8 %v4212
        %v4214 = vperm.slane %v4206, %v4213
        %v4215 = vrot.slane %v4199, 4
        %v4216 = vsel %vm1563, %v4215, %v4143
        %v4217 = vrot.slane %v4143, 4
        %v4218 = vsel %vm1563, %v4199, %v4217
        %v4220 = vunpack.c.l.s4 1983009808
        %v4221 = vunpack.c.0.s8 %v4220
        %v4222 = vperm.slane %v4216, %v4221
        %v4224 = vunpack.c.l.s4 1983009808
        %v4225 = vunpack.c.0.s8 %v4224
        %v4226 = vperm.slane %v4218, %v4225
        %v4227 = vrot.slane %v4222, 4
        %v4228 = vsel %vm1563, %v4227, %v4210
        %v4229 = vrot.slane %v4210, 4
        %v4230 = vsel %vm1563, %v4222, %v4229
        %v4232 = vunpack.c.l.s4 1934713408
        %v4233 = vunpack.c.0.s8 %v4232
        %v4234 = vperm.slane %v4228, %v4233
        %v4236 = vunpack.c.l.s4 1934713408
        %v4237 = vunpack.c.0.s8 %v4236
        %v4238 = vperm.slane %v4230, %v4237
        %v4239 = vrot.slane %v4226, 4
        %v4240 = vsel %vm1563, %v4239, %v4214
        %v4241 = vrot.slane %v4214, 4
        %v4242 = vsel %vm1563, %v4226, %v4241
        %v4244 = vunpack.c.l.s4 1934713408
        %v4245 = vunpack.c.0.s8 %v4244
        %v4246 = vperm.slane %v4240, %v4245
        %v4248 = vunpack.c.l.s4 1934713408
        %v4249 = vunpack.c.0.s8 %v4248
        %v4250 = vperm.slane %v4242, %v4249
        %v4251 = vrot.slane %v4234, 4
        %v4252 = vsel %vm1563, 0.0, %v4251
        %v4253 = vrot.slane %v4238, 4
        %v4254 = vsel %vm1563, 0.0, %v4253
        %v4255 = vrot.slane %v4246, 4
        %v4256 = vsel %vm1563, 0.0, %v4255
        %v4257 = vrot.slane %v4250, 4
        %v4258 = vsel %vm1563, 0.0, %v4257
        %v4259 = vrot.slane %v4173, 4
        %v4260 = vsel %vm1563, %v4259, %v4117
        %v4261 = vrot.slane %v4117, 4
        %v4262 = vsel %vm1563, %v4173, %v4261
        %v4264 = vunpack.c.l.s4 1983009808
        %v4265 = vunpack.c.0.s8 %v4264
        %v4266 = vperm.slane %v4260, %v4265
        %v4268 = vunpack.c.l.s4 1983009808
        %v4269 = vunpack.c.0.s8 %v4268
        %v4270 = vperm.slane %v4262, %v4269
        %v4271 = vrot.slane %v4201, 4
        %v4272 = vsel %vm1563, %v4271, %v4145
        %v4273 = vrot.slane %v4145, 4
        %v4274 = vsel %vm1563, %v4201, %v4273
        %v4276 = vunpack.c.l.s4 1983009808
        %v4277 = vunpack.c.0.s8 %v4276
        %v4278 = vperm.slane %v4272, %v4277
        %v4280 = vunpack.c.l.s4 1983009808
        %v4281 = vunpack.c.0.s8 %v4280
        %v4282 = vperm.slane %v4274, %v4281
        %v4283 = vrot.slane %v4278, 4
        %v4284 = vsel %vm1563, %v4283, %v4266
        %v4285 = vrot.slane %v4266, 4
        %v4286 = vsel %vm1563, %v4278, %v4285
        %v4288 = vunpack.c.l.s4 1934713408
        %v4289 = vunpack.c.0.s8 %v4288
        %v4290 = vperm.slane %v4284, %v4289
        %v4292 = vunpack.c.l.s4 1934713408
        %v4293 = vunpack.c.0.s8 %v4292
        %v4294 = vperm.slane %v4286, %v4293
        %v4295 = vrot.slane %v4282, 4
        %v4296 = vsel %vm1563, %v4295, %v4270
        %v4297 = vrot.slane %v4270, 4
        %v4298 = vsel %vm1563, %v4282, %v4297
        %v4300 = vunpack.c.l.s4 1934713408
        %v4301 = vunpack.c.0.s8 %v4300
        %v4302 = vperm.slane %v4296, %v4301
        %v4304 = vunpack.c.l.s4 1934713408
        %v4305 = vunpack.c.0.s8 %v4304
        %v4306 = vperm.slane %v4298, %v4305
        %v4307 = vrot.slane %v4290, 4
        %v4308 = vsel %vm1563, 0.0, %v4307
        %v4309 = vrot.slane %v4294, 4
        %v4310 = vsel %vm1563, 0.0, %v4309
        %v4311 = vrot.slane %v4302, 4
        %v4312 = vsel %vm1563, 0.0, %v4311
        %v4313 = vrot.slane %v4306, 4
        %v4314 = vsel %vm1563, 0.0, %v4313
        %v4315 = vsel %vm1563, %v4253, %v4234
        %v4317 = vunpack.c.l.s4 1983009808
        %v4318 = vunpack.c.0.s8 %v4317
        %v4319 = vperm.slane %v4315, %v4318
        %v4320 = vrot.slane %v4254, 4
        %v4321 = vsel %vm1563, %v4320, %v4252
        %v4323 = vunpack.c.l.s4 1983009808
        %v4324 = vunpack.c.0.s8 %v4323
        %v4325 = vperm.slane %v4321, %v4324
        %v4326 = vsel %vm1563, %v4257, %v4246
        %v4328 = vunpack.c.l.s4 1983009808
        %v4329 = vunpack.c.0.s8 %v4328
        %v4330 = vperm.slane %v4326, %v4329
        %v4331 = vrot.slane %v4258, 4
        %v4332 = vsel %vm1563, %v4331, %v4256
        %v4334 = vunpack.c.l.s4 1983009808
        %v4335 = vunpack.c.0.s8 %v4334
        %v4336 = vperm.slane %v4332, %v4335
        %v4337 = vrot.slane %v4325, 4
        %v4338 = vsel %vm1563, %v4337, %v4319
        %v4339 = vrot.slane %v4319, 4
        %v4340 = vsel %vm1563, %v4325, %v4339
        %v4342 = vunpack.c.l.s4 1934713408
        %v4343 = vunpack.c.0.s8 %v4342
        %v4344 = vperm.slane %v4338, %v4343
        %v4346 = vunpack.c.l.s4 1934713408
        %v4347 = vunpack.c.0.s8 %v4346
        %v4348 = vperm.slane %v4340, %v4347
        %v4349 = vrot.slane %v4336, 4
        %v4350 = vsel %vm1563, %v4349, %v4330
        %v4351 = vrot.slane %v4330, 4
        %v4352 = vsel %vm1563, %v4336, %v4351
        %v4354 = vunpack.c.l.s4 1934713408
        %v4355 = vunpack.c.0.s8 %v4354
        %v4356 = vperm.slane %v4350, %v4355
        %v4358 = vunpack.c.l.s4 1934713408
        %v4359 = vunpack.c.0.s8 %v4358
        %v4360 = vperm.slane %v4352, %v4359
        %v4361 = vrot.slane %v4356, 4
        %v4362 = vsel %vm1563, %v4361, %v4344
        %v4363 = vrot.slane %v4344, 4
        %v4364 = vsel %vm1563, %v4356, %v4363
        %v4365 = vrot.slane %v4360, 4
        %v4366 = vsel %vm1563, %v4365, %v4348
        %v4367 = vrot.slane %v4348, 4
        %v4368 = vsel %vm1563, %v4360, %v4367
        %v4369 = vsel %vm1563, %v4309, %v4290
        %v4371 = vunpack.c.l.s4 1983009808
        %v4372 = vunpack.c.0.s8 %v4371
        %v4373 = vperm.slane %v4369, %v4372
        %v4374 = vrot.slane %v4310, 4
        %v4375 = vsel %vm1563, %v4374, %v4308
        %v4377 = vunpack.c.l.s4 1983009808
        %v4378 = vunpack.c.0.s8 %v4377
        %v4379 = vperm.slane %v4375, %v4378
        %v4380 = vsel %vm1563, %v4313, %v4302
        %v4382 = vunpack.c.l.s4 1983009808
        %v4383 = vunpack.c.0.s8 %v4382
        %v4384 = vperm.slane %v4380, %v4383
        %v4385 = vrot.slane %v4314, 4
        %v4386 = vsel %vm1563, %v4385, %v4312
        %v4388 = vunpack.c.l.s4 1983009808
        %v4389 = vunpack.c.0.s8 %v4388
        %v4390 = vperm.slane %v4386, %v4389
        %v4391 = vrot.slane %v4379, 4
        %v4392 = vsel %vm1563, %v4391, %v4373
        %v4393 = vrot.slane %v4373, 4
        %v4394 = vsel %vm1563, %v4379, %v4393
        %v4396 = vunpack.c.l.s4 1934713408
        %v4397 = vunpack.c.0.s8 %v4396
        %v4398 = vperm.slane %v4392, %v4397
        %v4400 = vunpack.c.l.s4 1934713408
        %v4401 = vunpack.c.0.s8 %v4400
        %v4402 = vperm.slane %v4394, %v4401
        %v4403 = vrot.slane %v4390, 4
        %v4404 = vsel %vm1563, %v4403, %v4384
        %v4405 = vrot.slane %v4384, 4
        %v4406 = vsel %vm1563, %v4390, %v4405
        %v4408 = vunpack.c.l.s4 1934713408
        %v4409 = vunpack.c.0.s8 %v4408
        %v4410 = vperm.slane %v4404, %v4409
        %v4412 = vunpack.c.l.s4 1934713408
        %v4413 = vunpack.c.0.s8 %v4412
        %v4414 = vperm.slane %v4406, %v4413
        %v4415 = vrot.slane %v4410, 4
        %v4416 = vsel %vm1563, %v4415, %v4398
        %v4417 = vrot.slane %v4398, 4
        %v4418 = vsel %vm1563, %v4410, %v4417
        %v4419 = vrot.slane %v4414, 4
        %v4420 = vsel %vm1563, %v4419, %v4402
        %v4421 = vrot.slane %v4402, 4
        %v4422 = vsel %vm1563, %v4414, %v4421
        %4425 = vrot.lane.b32.xlu0 %v4364, 32
        %v4426 = vpop.permute.xlu0 %4425
        %4427 = vrot.lane.b32.xlu0 %v4418, 32
        %v4428 = vpop.permute.xlu0 %4427
        %4433 = vrot.lane.b32.xlu0 %v4366, 64
        %v4434 = vpop.permute.xlu0 %4433
        %4435 = vrot.lane.b32.xlu0 %v4420, 64
        %v4436 = vpop.permute.xlu0 %4435
        %4441 = vrot.lane.b32.xlu0 %v4368, 96
        %v4442 = vpop.permute.xlu0 %4441
        %4443 = vrot.lane.b32.xlu0 %v4422, 96
        %v4444 = vpop.permute.xlu0 %4443
        %v4447 = vsel %vm2297, %v4362, %v4426
        %v4448 = vsel %vm2297, %v4416, %v4428
        %v4449 = vsel %vm2863, %v4447, %v4434
        %v4450 = vsel %vm2863, %v4448, %v4436
        %v4451 = vsel %vm2866, %v4449, %v4442
        %v4452 = vsel %vm2866, %v4450, %v4444
        %v4453 = vpack.c.bf16 %v4452, %v4451
        %v4455 = vperm.slane %v1164, 0
        %v4473 = vunpack.c.l.b16 %v1148
        %v4474 = vunpack.c.l.b16 %v1149
        %v4475 = vunpack.c.l.b16 %v1150
        %v4476 = vunpack.c.l.b16 %v1151
        %v4477 = vunpack.c.l.b16 %v1152
        %v4478 = vunpack.c.l.b16 %v1153
        %v4479 = vunpack.c.l.b16 %v1154
        %v4480 = vunpack.c.l.b16 %v1155
        %v4481 = vunpack.c.l.b16 %v1156
        %v4482 = vunpack.c.l.b16 %v1157
        %v4483 = vunpack.c.l.b16 %v1158
        %v4484 = vunpack.c.l.b16 %v1159
        %v4485 = vunpack.c.l.b16 %v1160
        %v4486 = vunpack.c.l.b16 %v1161
        %v4487 = vunpack.c.l.b16 %v1162
        %v4488 = vunpack.c.l.b16 %v1163
        %v4489 = vpack.c.b16 %v4474, %v4473
        %v4490 = vpack.c.b16 %v4476, %v4475
        %v4491 = vpack.c.b16 %v4478, %v4477
        %v4492 = vpack.c.b16 %v4480, %v4479
        %v4493 = vpack.c.b16 %v4482, %v4481
        %v4494 = vpack.c.b16 %v4484, %v4483
        %v4495 = vpack.c.b16 %v4486, %v4485
        %v4496 = vpack.c.b16 %v4488, %v4487
        %4505 = vmatpush.bf16.msra.mxu0 %v4496
        %4506 = vmatpush.bf16.msra.mxu0 %v4495
        %4507 = vmatpush.bf16.msra.mxu0 %v4494
        %4508 = vmatpush.bf16.msra.mxu0 %v4493
        %4509 = vmatpush.bf16.msra.mxu0 %v4492
        %4510 = vmatpush.bf16.msra.mxu0 %v4491
        %4511 = vmatpush.bf16.msra.mxu0 %v4490
        %4512 = vmatpush.bf16.msra.mxu0 %v4489
        %4513 = vmatmul.bf16.gmra.mxu0 %v4453
        %v4514 = vpop.f32.mrf.mxu0
        %v4515 = vadd.f32 %v4455, %v4514
        %v4516 = vpop.f32.mrf.mxu0
        %v4517 = vadd.f32 %v4455, %v4516
        %4518 = vdwg.mxu0
        %v4519 = vadd.f32 %v4515, %v2935
        %v4520 = vadd.f32 %v4517, %v2936
        %4521 = vadd.xlane.f32.xlu0 %v4519
        %v4522 = vpop.xlane.xlu0 %4521
        %4523 = vadd.xlane.f32.xlu0 %v4520
        %v4524 = vpop.xlane.xlu0 %4523
        %v4525 = vmul.f32 %v4522, %v1306
        %v4526 = vmul.f32 %v4524, %v1306
        %v4527 = vsub.f32 %v4519, %v4525
        %v4528 = vsub.f32 %v4520, %v4526
        %v4529 = vmul.f32 %v4527, %v4527
        %v4530 = vmul.f32 %v4528, %v4528
        %4531 = vadd.xlane.f32.xlu0 %v4529
        %v4532 = vpop.xlane.xlu0 %4531
        %4533 = vadd.xlane.f32.xlu0 %v4530
        %v4534 = vpop.xlane.xlu0 %4533
        %v4535 = vmul.f32 %v4532, %v1306
        %v4536 = vmul.f32 %v4534, %v1306
        %v4537 = vadd.f32 %v4535, 1e-05
        %v4538 = vadd.f32 %v4536, 1e-05
        %v4539 = vrsqrt.pop %v4537
        %v4540 = vmul.f32 %v4539, %v4537
        %v4541 = vmul.f32 %v4540, %v4539
        %v4542 = vmul.f32 0.5, %v4541
        %v4543 = vsub.f32 1.5, %v4542
        %v4544 = vmul.f32 %v4539, %v4543
        %vm4545 = vweird.f32 %v4537
        %vm4546 = vweird.f32 %v4539
        %vm4547 = vmor %vm4545, %vm4546
        %v4548 = vsel %vm4547, %v4539, %v4544
        %v4549 = vrsqrt.pop %v4538
        %v4550 = vmul.f32 %v4549, %v4538
        %v4551 = vmul.f32 %v4550, %v4549
        %v4552 = vmul.f32 0.5, %v4551
        %v4553 = vsub.f32 1.5, %v4552
        %v4554 = vmul.f32 %v4549, %v4553
        %vm4555 = vweird.f32 %v4538
        %vm4556 = vweird.f32 %v4549
        %vm4557 = vmor %vm4555, %vm4556
        %v4558 = vsel %vm4557, %v4549, %v4554
        %v4559 = vmul.f32 %v4527, %v4548
        %v4560 = vmul.f32 %v4528, %v4558
        %v4562 = vperm.slane %v1049, 0
        %v4564 = vmul.f32 %v4559, %v4562
        %v4565 = vmul.f32 %v4560, %v4562
        %v4567 = vperm.slane %v1050, 0
        %v4569 = vadd.f32 %v4564, %v4567
        %v4570 = vadd.f32 %v4565, %v4567
        %v4571 = vpack.c.bf16 %v4570, %v4569
        %v4573 = vperm.slane %v1197, 0
        %v4574 = vperm.slane %v1197, 1
        %v4575 = vperm.slane %v1197, 2
        %v4576 = vperm.slane %v1197, 3
        %v4613 = vunpack.c.l.b16 %v1165
        %v4614 = vunpack.c.h.b16 %v1165
        %v4615 = vunpack.c.l.b16 %v1166
        %v4616 = vunpack.c.h.b16 %v1166
        %v4617 = vunpack.c.l.b16 %v1167
        %v4618 = vunpack.c.h.b16 %v1167
        %v4619 = vunpack.c.l.b16 %v1168
        %v4620 = vunpack.c.h.b16 %v1168
        %v4621 = vunpack.c.l.b16 %v1169
        %v4622 = vunpack.c.h.b16 %v1169
        %v4623 = vunpack.c.l.b16 %v1170
        %v4624 = vunpack.c.h.b16 %v1170
        %v4625 = vunpack.c.l.b16 %v1171
        %v4626 = vunpack.c.h.b16 %v1171
        %v4627 = vunpack.c.l.b16 %v1172
        %v4628 = vunpack.c.h.b16 %v1172
        %v4629 = vunpack.c.l.b16 %v1173
        %v4630 = vunpack.c.h.b16 %v1173
        %v4631 = vunpack.c.l.b16 %v1174
        %v4632 = vunpack.c.h.b16 %v1174
        %v4633 = vunpack.c.l.b16 %v1175
        %v4634 = vunpack.c.h.b16 %v1175
        %v4635 = vunpack.c.l.b16 %v1176
        %v4636 = vunpack.c.h.b16 %v1176
        %v4637 = vunpack.c.l.b16 %v1177
        %v4638 = vunpack.c.h.b16 %v1177
        %v4639 = vunpack.c.l.b16 %v1178
        %v4640 = vunpack.c.h.b16 %v1178
        %v4641 = vunpack.c.l.b16 %v1179
        %v4642 = vunpack.c.h.b16 %v1179
        %v4643 = vunpack.c.l.b16 %v1180
        %v4644 = vunpack.c.h.b16 %v1180
        %v4645 = vunpack.c.l.b16 %v1181
        %v4646 = vunpack.c.h.b16 %v1181
        %v4647 = vunpack.c.l.b16 %v1182
        %v4648 = vunpack.c.h.b16 %v1182
        %v4649 = vunpack.c.l.b16 %v1183
        %v4650 = vunpack.c.h.b16 %v1183
        %v4651 = vunpack.c.l.b16 %v1184
        %v4652 = vunpack.c.h.b16 %v1184
        %v4653 = vunpack.c.l.b16 %v1185
        %v4654 = vunpack.c.h.b16 %v1185
        %v4655 = vunpack.c.l.b16 %v1186
        %v4656 = vunpack.c.h.b16 %v1186
        %v4657 = vunpack.c.l.b16 %v1187
        %v4658 = vunpack.c.h.b16 %v1187
        %v4659 = vunpack.c.l.b16 %v1188
        %v4660 = vunpack.c.h.b16 %v1188
        %v4661 = vunpack.c.l.b16 %v1189
        %v4662 = vunpack.c.h.b16 %v1189
        %v4663 = vunpack.c.l.b16 %v1190
        %v4664 = vunpack.c.h.b16 %v1190
        %v4665 = vunpack.c.l.b16 %v1191
        %v4666 = vunpack.c.h.b16 %v1191
        %v4667 = vunpack.c.l.b16 %v1192
        %v4668 = vunpack.c.h.b16 %v1192
        %v4669 = vunpack.c.l.b16 %v1193
        %v4670 = vunpack.c.h.b16 %v1193
        %v4671 = vunpack.c.l.b16 %v1194
        %v4672 = vunpack.c.h.b16 %v1194
        %v4673 = vunpack.c.l.b16 %v1195
        %v4674 = vunpack.c.h.b16 %v1195
        %v4675 = vunpack.c.l.b16 %v1196
        %v4676 = vunpack.c.h.b16 %v1196
        %v4677 = vpack.c.b16 %v4617, %v4613
        %v4678 = vpack.c.b16 %v4618, %v4614
        %v4679 = vpack.c.b16 %v4619, %v4615
        %v4680 = vpack.c.b16 %v4620, %v4616
        %v4681 = vpack.c.b16 %v4625, %v4621
        %v4682 = vpack.c.b16 %v4626, %v4622
        %v4683 = vpack.c.b16 %v4627, %v4623
        %v4684 = vpack.c.b16 %v4628, %v4624
        %v4685 = vpack.c.b16 %v4633, %v4629
        %v4686 = vpack.c.b16 %v4634, %v4630
        %v4687 = vpack.c.b16 %v4635, %v4631
        %v4688 = vpack.c.b16 %v4636, %v4632
        %v4689 = vpack.c.b16 %v4641, %v4637
        %v4690 = vpack.c.b16 %v4642, %v4638
        %v4691 = vpack.c.b16 %v4643, %v4639
        %v4692 = vpack.c.b16 %v4644, %v4640
        %v4693 = vpack.c.b16 %v4649, %v4645
        %v4694 = vpack.c.b16 %v4650, %v4646
        %v4695 = vpack.c.b16 %v4651, %v4647
        %v4696 = vpack.c.b16 %v4652, %v4648
        %v4697 = vpack.c.b16 %v4657, %v4653
        %v4698 = vpack.c.b16 %v4658, %v4654
        %v4699 = vpack.c.b16 %v4659, %v4655
        %v4700 = vpack.c.b16 %v4660, %v4656
        %v4701 = vpack.c.b16 %v4665, %v4661
        %v4702 = vpack.c.b16 %v4666, %v4662
        %v4703 = vpack.c.b16 %v4667, %v4663
        %v4704 = vpack.c.b16 %v4668, %v4664
        %v4705 = vpack.c.b16 %v4673, %v4669
        %v4706 = vpack.c.b16 %v4674, %v4670
        %v4707 = vpack.c.b16 %v4675, %v4671
        %v4708 = vpack.c.b16 %v4676, %v4672
        %4741 = vmatpush.bf16.msra.mxu0 %v4705
        %4742 = vmatpush.bf16.msra.mxu0 %v4701
        %4743 = vmatpush.bf16.msra.mxu0 %v4697
        %4744 = vmatpush.bf16.msra.mxu0 %v4693
        %4745 = vmatpush.bf16.msra.mxu0 %v4689
        %4746 = vmatpush.bf16.msra.mxu0 %v4685
        %4747 = vmatpush.bf16.msra.mxu0 %v4681
        %4748 = vmatpush.bf16.msra.mxu0 %v4677
        %4749 = vmatmul.bf16.gmra.mxu0 %v4571
        %v4750 = vpop.f32.mrf.mxu0
        %v4751 = vadd.f32 %v4573, %v4750
        %v4752 = vpop.f32.mrf.mxu0
        %v4753 = vadd.f32 %v4573, %v4752
        %4754 = vdwg.mxu0
        %4755 = vmatpush.bf16.msra.mxu0 %v4706
        %4756 = vmatpush.bf16.msra.mxu0 %v4702
        %4757 = vmatpush.bf16.msra.mxu0 %v4698
        %4758 = vmatpush.bf16.msra.mxu0 %v4694
        %4759 = vmatpush.bf16.msra.mxu0 %v4690
        %4760 = vmatpush.bf16.msra.mxu0 %v4686
        %4761 = vmatpush.bf16.msra.mxu0 %v4682
        %4762 = vmatpush.bf16.msra.mxu0 %v4678
        %4763 = vmatmul.bf16.gmra.mxu0 %v4571
        %v4764 = vpop.f32.mrf.mxu0
        %v4765 = vadd.f32 %v4574, %v4764
        %v4766 = vpop.f32.mrf.mxu0
        %v4767 = vadd.f32 %v4574, %v4766
        %4768 = vdwg.mxu0
        %4769 = vmatpush.bf16.msra.mxu0 %v4707
        %4770 = vmatpush.bf16.msra.mxu0 %v4703
        %4771 = vmatpush.bf16.msra.mxu0 %v4699
        %4772 = vmatpush.bf16.msra.mxu0 %v4695
        %4773 = vmatpush.bf16.msra.mxu0 %v4691
        %4774 = vmatpush.bf16.msra.mxu0 %v4687
        %4775 = vmatpush.bf16.msra.mxu0 %v4683
        %4776 = vmatpush.bf16.msra.mxu0 %v4679
        %4777 = vmatmul.bf16.gmra.mxu0 %v4571
        %v4778 = vpop.f32.mrf.mxu0
        %v4779 = vadd.f32 %v4575, %v4778
        %v4780 = vpop.f32.mrf.mxu0
        %v4781 = vadd.f32 %v4575, %v4780
        %4782 = vdwg.mxu0
        %4783 = vmatpush.bf16.msra.mxu0 %v4708
        %4784 = vmatpush.bf16.msra.mxu0 %v4704
        %4785 = vmatpush.bf16.msra.mxu0 %v4700
        %4786 = vmatpush.bf16.msra.mxu0 %v4696
        %4787 = vmatpush.bf16.msra.mxu0 %v4692
        %4788 = vmatpush.bf16.msra.mxu0 %v4688
        %4789 = vmatpush.bf16.msra.mxu0 %v4684
        %4790 = vmatpush.bf16.msra.mxu0 %v4680
        %4791 = vmatmul.bf16.gmra.mxu0 %v4571
        %v4792 = vpop.f32.mrf.mxu0
        %v4793 = vadd.f32 %v4576, %v4792
        %v4794 = vpop.f32.mrf.mxu0
        %v4795 = vadd.f32 %v4576, %v4794
        %4796 = vdwg.mxu0
        %v4798 = vperm.slane %v1230, 0
        %v4799 = vperm.slane %v1230, 1
        %v4800 = vperm.slane %v1230, 2
        %v4801 = vperm.slane %v1230, 3
        %v4838 = vunpack.c.l.b16 %v1198
        %v4839 = vunpack.c.h.b16 %v1198
        %v4840 = vunpack.c.l.b16 %v1199
        %v4841 = vunpack.c.h.b16 %v1199
        %v4842 = vunpack.c.l.b16 %v1200
        %v4843 = vunpack.c.h.b16 %v1200
        %v4844 = vunpack.c.l.b16 %v1201
        %v4845 = vunpack.c.h.b16 %v1201
        %v4846 = vunpack.c.l.b16 %v1202
        %v4847 = vunpack.c.h.b16 %v1202
        %v4848 = vunpack.c.l.b16 %v1203
        %v4849 = vunpack.c.h.b16 %v1203
        %v4850 = vunpack.c.l.b16 %v1204
        %v4851 = vunpack.c.h.b16 %v1204
        %v4852 = vunpack.c.l.b16 %v1205
        %v4853 = vunpack.c.h.b16 %v1205
        %v4854 = vunpack.c.l.b16 %v1206
        %v4855 = vunpack.c.h.b16 %v1206
        %v4856 = vunpack.c.l.b16 %v1207
        %v4857 = vunpack.c.h.b16 %v1207
        %v4858 = vunpack.c.l.b16 %v1208
        %v4859 = vunpack.c.h.b16 %v1208
        %v4860 = vunpack.c.l.b16 %v1209
        %v4861 = vunpack.c.h.b16 %v1209
        %v4862 = vunpack.c.l.b16 %v1210
        %v4863 = vunpack.c.h.b16 %v1210
        %v4864 = vunpack.c.l.b16 %v1211
        %v4865 = vunpack.c.h.b16 %v1211
        %v4866 = vunpack.c.l.b16 %v1212
        %v4867 = vunpack.c.h.b16 %v1212
        %v4868 = vunpack.c.l.b16 %v1213
        %v4869 = vunpack.c.h.b16 %v1213
        %v4870 = vunpack.c.l.b16 %v1214
        %v4871 = vunpack.c.h.b16 %v1214
        %v4872 = vunpack.c.l.b16 %v1215
        %v4873 = vunpack.c.h.b16 %v1215
        %v4874 = vunpack.c.l.b16 %v1216
        %v4875 = vunpack.c.h.b16 %v1216
        %v4876 = vunpack.c.l.b16 %v1217
        %v4877 = vunpack.c.h.b16 %v1217
        %v4878 = vunpack.c.l.b16 %v1218
        %v4879 = vunpack.c.h.b16 %v1218
        %v4880 = vunpack.c.l.b16 %v1219
        %v4881 = vunpack.c.h.b16 %v1219
        %v4882 = vunpack.c.l.b16 %v1220
        %v4883 = vunpack.c.h.b16 %v1220
        %v4884 = vunpack.c.l.b16 %v1221
        %v4885 = vunpack.c.h.b16 %v1221
        %v4886 = vunpack.c.l.b16 %v1222
        %v4887 = vunpack.c.h.b16 %v1222
        %v4888 = vunpack.c.l.b16 %v1223
        %v4889 = vunpack.c.h.b16 %v1223
        %v4890 = vunpack.c.l.b16 %v1224
        %v4891 = vunpack.c.h.b16 %v1224
        %v4892 = vunpack.c.l.b16 %v1225
        %v4893 = vunpack.c.h.b16 %v1225
        %v4894 = vunpack.c.l.b16 %v1226
        %v4895 = vunpack.c.h.b16 %v1226
        %v4896 = vunpack.c.l.b16 %v1227
        %v4897 = vunpack.c.h.b16 %v1227
        %v4898 = vunpack.c.l.b16 %v1228
        %v4899 = vunpack.c.h.b16 %v1228
        %v4900 = vunpack.c.l.b16 %v1229
        %v4901 = vunpack.c.h.b16 %v1229
        %v4902 = vpack.c.b16 %v4842, %v4838
        %v4903 = vpack.c.b16 %v4843, %v4839
        %v4904 = vpack.c.b16 %v4844, %v4840
        %v4905 = vpack.c.b16 %v4845, %v4841
        %v4906 = vpack.c.b16 %v4850, %v4846
        %v4907 = vpack.c.b16 %v4851, %v4847
        %v4908 = vpack.c.b16 %v4852, %v4848
        %v4909 = vpack.c.b16 %v4853, %v4849
        %v4910 = vpack.c.b16 %v4858, %v4854
        %v4911 = vpack.c.b16 %v4859, %v4855
        %v4912 = vpack.c.b16 %v4860, %v4856
        %v4913 = vpack.c.b16 %v4861, %v4857
        %v4914 = vpack.c.b16 %v4866, %v4862
        %v4915 = vpack.c.b16 %v4867, %v4863
        %v4916 = vpack.c.b16 %v4868, %v4864
        %v4917 = vpack.c.b16 %v4869, %v4865
        %v4918 = vpack.c.b16 %v4874, %v4870
        %v4919 = vpack.c.b16 %v4875, %v4871
        %v4920 = vpack.c.b16 %v4876, %v4872
        %v4921 = vpack.c.b16 %v4877, %v4873
        %v4922 = vpack.c.b16 %v4882, %v4878
        %v4923 = vpack.c.b16 %v4883, %v4879
        %v4924 = vpack.c.b16 %v4884, %v4880
        %v4925 = vpack.c.b16 %v4885, %v4881
        %v4926 = vpack.c.b16 %v4890, %v4886
        %v4927 = vpack.c.b16 %v4891, %v4887
        %v4928 = vpack.c.b16 %v4892, %v4888
        %v4929 = vpack.c.b16 %v4893, %v4889
        %v4930 = vpack.c.b16 %v4898, %v4894
        %v4931 = vpack.c.b16 %v4899, %v4895
        %v4932 = vpack.c.b16 %v4900, %v4896
        %v4933 = vpack.c.b16 %v4901, %v4897
        %4966 = vmatpush.bf16.msra.mxu0 %v4930
        %4967 = vmatpush.bf16.msra.mxu0 %v4926
        %4968 = vmatpush.bf16.msra.mxu0 %v4922
        %4969 = vmatpush.bf16.msra.mxu0 %v4918
        %4970 = vmatpush.bf16.msra.mxu0 %v4914
        %4971 = vmatpush.bf16.msra.mxu0 %v4910
        %4972 = vmatpush.bf16.msra.mxu0 %v4906
        %4973 = vmatpush.bf16.msra.mxu0 %v4902
        %4974 = vmatmul.bf16.gmra.mxu0 %v4571
        %v4975 = vpop.f32.mrf.mxu0
        %v4976 = vadd.f32 %v4798, %v4975
        %v4977 = vpop.f32.mrf.mxu0
        %v4978 = vadd.f32 %v4798, %v4977
        %4979 = vdwg.mxu0
        %4980 = vmatpush.bf16.msra.mxu0 %v4931
        %4981 = vmatpush.bf16.msra.mxu0 %v4927
        %4982 = vmatpush.bf16.msra.mxu0 %v4923
        %4983 = vmatpush.bf16.msra.mxu0 %v4919
        %4984 = vmatpush.bf16.msra.mxu0 %v4915
        %4985 = vmatpush.bf16.msra.mxu0 %v4911
        %4986 = vmatpush.bf16.msra.mxu0 %v4907
        %4987 = vmatpush.bf16.msra.mxu0 %v4903
        %4988 = vmatmul.bf16.gmra.mxu0 %v4571
        %v4989 = vpop.f32.mrf.mxu0
        %v4990 = vadd.f32 %v4799, %v4989
        %v4991 = vpop.f32.mrf.mxu0
        %v4992 = vadd.f32 %v4799, %v4991
        %4993 = vdwg.mxu0
        %4994 = vmatpush.bf16.msra.mxu0 %v4932
        %4995 = vmatpush.bf16.msra.mxu0 %v4928
        %4996 = vmatpush.bf16.msra.mxu0 %v4924
        %4997 = vmatpush.bf16.msra.mxu0 %v4920
        %4998 = vmatpush.bf16.msra.mxu0 %v4916
        %4999 = vmatpush.bf16.msra.mxu0 %v4912
        %5000 = vmatpush.bf16.msra.mxu0 %v4908
        %5001 = vmatpush.bf16.msra.mxu0 %v4904
        %5002 = vmatmul.bf16.gmra.mxu0 %v4571
        %v5003 = vpop.f32.mrf.mxu0
        %v5004 = vadd.f32 %v4800, %v5003
        %v5005 = vpop.f32.mrf.mxu0
        %v5006 = vadd.f32 %v4800, %v5005
        %5007 = vdwg.mxu0
        %5008 = vmatpush.bf16.msra.mxu0 %v4933
        %5009 = vmatpush.bf16.msra.mxu0 %v4929
        %5010 = vmatpush.bf16.msra.mxu0 %v4925
        %5011 = vmatpush.bf16.msra.mxu0 %v4921
        %5012 = vmatpush.bf16.msra.mxu0 %v4917
        %5013 = vmatpush.bf16.msra.mxu0 %v4913
        %5014 = vmatpush.bf16.msra.mxu0 %v4909
        %5015 = vmatpush.bf16.msra.mxu0 %v4905
        %5016 = vmatmul.bf16.gmra.mxu0 %v4571
        %v5017 = vpop.f32.mrf.mxu0
        %v5018 = vadd.f32 %v4801, %v5017
        %v5019 = vpop.f32.mrf.mxu0
        %v5020 = vadd.f32 %v4801, %v5019
        %5021 = vdwg.mxu0
        %v5022 = vmul.f32 %v4976, %v4976
        %v5023 = vmul.f32 %v4990, %v4990
        %v5024 = vmul.f32 %v5004, %v5004
        %v5025 = vmul.f32 %v5018, %v5018
        %v5026 = vmul.f32 %v4978, %v4978
        %v5027 = vmul.f32 %v4992, %v4992
        %v5028 = vmul.f32 %v5006, %v5006
        %v5029 = vmul.f32 %v5020, %v5020
        %v5030 = vmul.f32 %v4976, %v5022
        %v5031 = vmul.f32 %v4990, %v5023
        %v5032 = vmul.f32 %v5004, %v5024
        %v5033 = vmul.f32 %v5018, %v5025
        %v5034 = vmul.f32 %v4978, %v5026
        %v5035 = vmul.f32 %v4992, %v5027
        %v5036 = vmul.f32 %v5006, %v5028
        %v5037 = vmul.f32 %v5020, %v5029
        %v5038 = vmul.f32 %v5030, 0.044715
        %v5039 = vmul.f32 %v5031, 0.044715
        %v5040 = vmul.f32 %v5032, 0.044715
        %v5041 = vmul.f32 %v5033, 0.044715
        %v5042 = vmul.f32 %v5034, 0.044715
        %v5043 = vmul.f32 %v5035, 0.044715
        %v5044 = vmul.f32 %v5036, 0.044715
        %v5045 = vmul.f32 %v5037, 0.044715
        %v5046 = vadd.f32 %v4976, %v5038
        %v5047 = vadd.f32 %v4990, %v5039
        %v5048 = vadd.f32 %v5004, %v5040
        %v5049 = vadd.f32 %v5018, %v5041
        %v5050 = vadd.f32 %v4978, %v5042
        %v5051 = vadd.f32 %v4992, %v5043
        %v5052 = vadd.f32 %v5006, %v5044
        %v5053 = vadd.f32 %v5020, %v5045
        %v5054 = vmul.f32 %v5046, 0.7978846
        %v5055 = vmul.f32 %v5047, 0.7978846
        %v5056 = vmul.f32 %v5048, 0.7978846
        %v5057 = vmul.f32 %v5049, 0.7978846
        %v5058 = vmul.f32 %v5050, 0.7978846
        %v5059 = vmul.f32 %v5051, 0.7978846
        %v5060 = vmul.f32 %v5052, 0.7978846
        %v5061 = vmul.f32 %v5053, 0.7978846
        %v5062 = vtanh.pop %v5054
        %v5063 = vtanh.pop %v5055
        %v5064 = vtanh.pop %v5056
        %v5065 = vtanh.pop %v5057
        %v5066 = vtanh.pop %v5058
        %v5067 = vtanh.pop %v5059
        %v5068 = vtanh.pop %v5060
        %v5069 = vtanh.pop %v5061
        %v5070 = vadd.f32 %v5062, 1.0
        %v5071 = vadd.f32 %v5063, 1.0
        %v5072 = vadd.f32 %v5064, 1.0
        %v5073 = vadd.f32 %v5065, 1.0
        %v5074 = vadd.f32 %v5066, 1.0
        %v5075 = vadd.f32 %v5067, 1.0
        %v5076 = vadd.f32 %v5068, 1.0
        %v5077 = vadd.f32 %v5069, 1.0
        %v5078 = vmul.f32 %v5070, 0.5
        %v5079 = vmul.f32 %v5071, 0.5
        %v5080 = vmul.f32 %v5072, 0.5
        %v5081 = vmul.f32 %v5073, 0.5
        %v5082 = vmul.f32 %v5074, 0.5
        %v5083 = vmul.f32 %v5075, 0.5
        %v5084 = vmul.f32 %v5076, 0.5
        %v5085 = vmul.f32 %v5077, 0.5
        %v5086 = vmul.f32 %v4976, %v5078
        %v5087 = vmul.f32 %v4990, %v5079
        %v5088 = vmul.f32 %v5004, %v5080
        %v5089 = vmul.f32 %v5018, %v5081
        %v5090 = vmul.f32 %v4978, %v5082
        %v5091 = vmul.f32 %v4992, %v5083
        %v5092 = vmul.f32 %v5006, %v5084
        %v5093 = vmul.f32 %v5020, %v5085
        %v5094 = vmul.f32 %v4751, %v5086
        %v5095 = vmul.f32 %v4765, %v5087
        %v5096 = vmul.f32 %v4779, %v5088
        %v5097 = vmul.f32 %v4793, %v5089
        %v5098 = vmul.f32 %v4753, %v5090
        %v5099 = vmul.f32 %v4767, %v5091
        %v5100 = vmul.f32 %v4781, %v5092
        %v5101 = vmul.f32 %v4795, %v5093
        %v5102 = vpack.c.bf16 %v5098, %v5094
        %v5103 = vpack.c.bf16 %v5099, %v5095
        %v5104 = vpack.c.bf16 %v5100, %v5096
        %v5105 = vpack.c.bf16 %v5101, %v5097
        %v5107 = vperm.slane %v1295, 0
        %v5173 = vunpack.c.l.b16 %v1231
        %v5174 = vunpack.c.l.b16 %v1232
        %v5175 = vunpack.c.l.b16 %v1233
        %v5176 = vunpack.c.l.b16 %v1234
        %v5177 = vunpack.c.l.b16 %v1235
        %v5178 = vunpack.c.l.b16 %v1236
        %v5179 = vunpack.c.l.b16 %v1237
        %v5180 = vunpack.c.l.b16 %v1238
        %v5181 = vunpack.c.l.b16 %v1239
        %v5182 = vunpack.c.l.b16 %v1240
        %v5183 = vunpack.c.l.b16 %v1241
        %v5184 = vunpack.c.l.b16 %v1242
        %v5185 = vunpack.c.l.b16 %v1243
        %v5186 = vunpack.c.l.b16 %v1244
        %v5187 = vunpack.c.l.b16 %v1245
        %v5188 = vunpack.c.l.b16 %v1246
        %v5189 = vunpack.c.l.b16 %v1247
        %v5190 = vunpack.c.l.b16 %v1248
        %v5191 = vunpack.c.l.b16 %v1249
        %v5192 = vunpack.c.l.b16 %v1250
        %v5193 = vunpack.c.l.b16 %v1251
        %v5194 = vunpack.c.l.b16 %v1252
        %v5195 = vunpack.c.l.b16 %v1253
        %v5196 = vunpack.c.l.b16 %v1254
        %v5197 = vunpack.c.l.b16 %v1255
        %v5198 = vunpack.c.l.b16 %v1256
        %v5199 = vunpack.c.l.b16 %v1257
        %v5200 = vunpack.c.l.b16 %v1258
        %v5201 = vunpack.c.l.b16 %v1259
        %v5202 = vunpack.c.l.b16 %v1260
        %v5203 = vunpack.c.l.b16 %v1261
        %v5204 = vunpack.c.l.b16 %v1262
        %v5205 = vunpack.c.l.b16 %v1263
        %v5206 = vunpack.c.l.b16 %v1264
        %v5207 = vunpack.c.l.b16 %v1265
        %v5208 = vunpack.c.l.b16 %v1266
        %v5209 = vunpack.c.l.b16 %v1267
        %v5210 = vunpack.c.l.b16 %v1268
        %v5211 = vunpack.c.l.b16 %v1269
        %v5212 = vunpack.c.l.b16 %v1270
        %v5213 = vunpack.c.l.b16 %v1271
        %v5214 = vunpack.c.l.b16 %v1272
        %v5215 = vunpack.c.l.b16 %v1273
        %v5216 = vunpack.c.l.b16 %v1274
        %v5217 = vunpack.c.l.b16 %v1275
        %v5218 = vunpack.c.l.b16 %v1276
        %v5219 = vunpack.c.l.b16 %v1277
        %v5220 = vunpack.c.l.b16 %v1278
        %v5221 = vunpack.c.l.b16 %v1279
        %v5222 = vunpack.c.l.b16 %v1280
        %v5223 = vunpack.c.l.b16 %v1281
        %v5224 = vunpack.c.l.b16 %v1282
        %v5225 = vunpack.c.l.b16 %v1283
        %v5226 = vunpack.c.l.b16 %v1284
        %v5227 = vunpack.c.l.b16 %v1285
        %v5228 = vunpack.c.l.b16 %v1286
        %v5229 = vunpack.c.l.b16 %v1287
        %v5230 = vunpack.c.l.b16 %v1288
        %v5231 = vunpack.c.l.b16 %v1289
        %v5232 = vunpack.c.l.b16 %v1290
        %v5233 = vunpack.c.l.b16 %v1291
        %v5234 = vunpack.c.l.b16 %v1292
        %v5235 = vunpack.c.l.b16 %v1293
        %v5236 = vunpack.c.l.b16 %v1294
        %v5237 = vpack.c.b16 %v5174, %v5173
        %v5238 = vpack.c.b16 %v5176, %v5175
        %v5239 = vpack.c.b16 %v5178, %v5177
        %v5240 = vpack.c.b16 %v5180, %v5179
        %v5241 = vpack.c.b16 %v5182, %v5181
        %v5242 = vpack.c.b16 %v5184, %v5183
        %v5243 = vpack.c.b16 %v5186, %v5185
        %v5244 = vpack.c.b16 %v5188, %v5187
        %v5245 = vpack.c.b16 %v5190, %v5189
        %v5246 = vpack.c.b16 %v5192, %v5191
        %v5247 = vpack.c.b16 %v5194, %v5193
        %v5248 = vpack.c.b16 %v5196, %v5195
        %v5249 = vpack.c.b16 %v5198, %v5197
        %v5250 = vpack.c.b16 %v5200, %v5199
        %v5251 = vpack.c.b16 %v5202, %v5201
        %v5252 = vpack.c.b16 %v5204, %v5203
        %v5253 = vpack.c.b16 %v5206, %v5205
        %v5254 = vpack.c.b16 %v5208, %v5207
        %v5255 = vpack.c.b16 %v5210, %v5209
        %v5256 = vpack.c.b16 %v5212, %v5211
        %v5257 = vpack.c.b16 %v5214, %v5213
        %v5258 = vpack.c.b16 %v5216, %v5215
        %v5259 = vpack.c.b16 %v5218, %v5217
        %v5260 = vpack.c.b16 %v5220, %v5219
        %v5261 = vpack.c.b16 %v5222, %v5221
        %v5262 = vpack.c.b16 %v5224, %v5223
        %v5263 = vpack.c.b16 %v5226, %v5225
        %v5264 = vpack.c.b16 %v5228, %v5227
        %v5265 = vpack.c.b16 %v5230, %v5229
        %v5266 = vpack.c.b16 %v5232, %v5231
        %v5267 = vpack.c.b16 %v5234, %v5233
        %v5268 = vpack.c.b16 %v5236, %v5235
        %5301 = vmatpush.bf16.msra.mxu0 %v5244
        %5302 = vmatpush.bf16.msra.mxu0 %v5243
        %5303 = vmatpush.bf16.msra.mxu0 %v5242
        %5304 = vmatpush.bf16.msra.mxu0 %v5241
        %5305 = vmatpush.bf16.msra.mxu0 %v5240
        %5306 = vmatpush.bf16.msra.mxu0 %v5239
        %5307 = vmatpush.bf16.msra.mxu0 %v5238
        %5308 = vmatpush.bf16.msra.mxu0 %v5237
        %5309 = vmatmul.bf16.gmra.mxu0 %v5102
        %v5310 = vpop.f32.mrf.mxu0
        %v5311 = vadd.f32 %v5107, %v5310
        %v5312 = vpop.f32.mrf.mxu0
        %v5313 = vadd.f32 %v5107, %v5312
        %5314 = vdwg.mxu0
        %5315 = vmatpush.bf16.msra.mxu0 %v5252
        %5316 = vmatpush.bf16.msra.mxu0 %v5251
        %5317 = vmatpush.bf16.msra.mxu0 %v5250
        %5318 = vmatpush.bf16.msra.mxu0 %v5249
        %5319 = vmatpush.bf16.msra.mxu0 %v5248
        %5320 = vmatpush.bf16.msra.mxu0 %v5247
        %5321 = vmatpush.bf16.msra.mxu0 %v5246
        %5322 = vmatpush.bf16.msra.mxu0 %v5245
        %5323 = vmatmul.bf16.gmra.mxu0 %v5103
        %v5324 = vpop.f32.mrf.mxu0
        %v5325 = vadd.f32 %v5311, %v5324
        %v5326 = vpop.f32.mrf.mxu0
        %v5327 = vadd.f32 %v5313, %v5326
        %5328 = vdwg.mxu0
        %5329 = vmatpush.bf16.msra.mxu0 %v5260
        %5330 = vmatpush.bf16.msra.mxu0 %v5259
        %5331 = vmatpush.bf16.msra.mxu0 %v5258
        %5332 = vmatpush.bf16.msra.mxu0 %v5257
        %5333 = vmatpush.bf16.msra.mxu0 %v5256
        %5334 = vmatpush.bf16.msra.mxu0 %v5255
        %5335 = vmatpush.bf16.msra.mxu0 %v5254
        %5336 = vmatpush.bf16.msra.mxu0 %v5253
        %5337 = vmatmul.bf16.gmra.mxu0 %v5104
        %v5338 = vpop.f32.mrf.mxu0
        %v5339 = vadd.f32 %v5325, %v5338
        %v5340 = vpop.f32.mrf.mxu0
        %v5341 = vadd.f32 %v5327, %v5340
        %5342 = vdwg.mxu0
        %5343 = vmatpush.bf16.msra.mxu0 %v5268
        %5344 = vmatpush.bf16.msra.mxu0 %v5267
        %5345 = vmatpush.bf16.msra.mxu0 %v5266
        %5346 = vmatpush.bf16.msra.mxu0 %v5265
        %5347 = vmatpush.bf16.msra.mxu0 %v5264
        %5348 = vmatpush.bf16.msra.mxu0 %v5263
        %5349 = vmatpush.bf16.msra.mxu0 %v5262
        %5350 = vmatpush.bf16.msra.mxu0 %v5261
        %5351 = vmatmul.bf16.gmra.mxu0 %v5105
        %v5352 = vpop.f32.mrf.mxu0
        %v5353 = vadd.f32 %v5339, %v5352
        %v5354 = vpop.f32.mrf.mxu0
        %v5355 = vadd.f32 %v5341, %v5354
        %5356 = vdwg.mxu0
        %v5357 = vadd.f32 %v5353, %v4519
        %v5358 = vadd.f32 %v5355, %v4520
        %5359 = vst [vmem:[%s1038] sm:$0xff] %v5357
        %5360 = vst [vmem:[%s1038 + $0x8] sm:$0xff] %v5358
        %s5361 = sand.u32 %s573, 1
        %s5362 = scalar_lea.sflag [#allocation4], %s5361
        %s5363 = sand.u32 %s573, 1
        %s5364 = smul.addr %s5363, 16
        %s5365 = scalar_lea.vmem [#allocation29], %s5364
        // Predicated region
        $region185: #{tpu_custom_call.1} parent=115 // pred_check
          %p5366 = pneg %p583
        $region186: #{tpu_custom_call.1} parent=115 // pred_check_branch
          %5368 = sbr.rel (%p5366) target = $region188
        $region187: #{tpu_custom_call.1} parent=115 // pred_region
          %5370 = vsyncadd %s5362, 0
          %s5371 = smul.addr %s51, 2
          %s5372 = smul.addr %s5371, 8
          %s5373 = scalar_lea.hbm %s24, %s5372
          %s5374 = sshll.u32 %s5365, 4
          %s5375 = int_to_ptr.vmem [resolvable:$true] %s5374
          %s5376 = sshll.u32 %s5373, 4
          %s5377 = int_to_ptr.hbm [resolvable:$true] %s5376
          %5382 = dma.vmem_to_hbm [thread:$0]  %s5375, 256, %s5377, %s5362, 128, 128, 8
        $region188: #{tpu_custom_call.1} parent=115 // pred_fallthru
          _
      $region116: #{tpu_custom_call.1} parent=5 // pred_fallthru
        _
      %p5383 = scmp.le.s32.totalorder 2, %s46
      // Predicated region
      $region189: #{tpu_custom_call.1} parent=5 // pred_check
        %p5384 = pneg %p5383
      $region190: #{tpu_custom_call.1} parent=5 // pred_check_branch
        %5386 = sbr.rel (%p5384) target = $region192
      $region191: #{tpu_custom_call.1} parent=5 // pred_region
        %s5387 = ssub.s32 %s46, 2
        // Predicated region
        $region193: #{tpu_custom_call.1} parent=191 // pred_check
          %p5388 = pneg %p589
        $region194: #{tpu_custom_call.1} parent=191 // pred_check_branch
          %5390 = sbr.rel (%p5388) target = $region196
        $region195: #{tpu_custom_call.1} parent=191 // pred_region
          %s5391 = sand.u32 %s574, 1
          %s5392 = scalar_lea.sflag [#allocation4], %s5391
          %s5393 = sand.u32 %s574, 1
          %s5394 = smul.addr %s5393, 16
          %s5395 = scalar_lea.vmem [#allocation29], %s5394
          %5397 = dma.done %s5392, 256
        $region196: #{tpu_custom_call.1} parent=191 // pred_fallthru
          _
      $region192: #{tpu_custom_call.1} parent=5 // pred_fallthru
        _
    $region6: #{tpu_custom_call.1} parent=1 // loop_footer
      %s50 = sadd.s32 1, %s46
    $region7: #{tpu_custom_call.1} parent=1 // loop_footer_branch
      %45 = sbr.rel target = $region3
    $region8: #{tpu_custom_call.1} parent=1 // loop_exit
      _
    %5398 = vsyncpa [#allocation3], 1
    %s5399 = scalar_lea.sflag [#allocation3], 1
    %5400 = vsyncpa %s5399, 1
    %5401 = vsyncpa [#allocation6], 1
    %s5402 = scalar_lea.sflag [#allocation6], 1
    %5403 = vsyncpa %s5402, 1
    %5404 = vsyncpa [#allocation9], 1
    %5405 = vsyncpa [#allocation12], 1
    %5406 = vsyncpa [#allocation15], 1
    %5407 = vsyncpa [#allocation18], 1
    %5408 = vsyncpa [#allocation21], 1
    %5409 = vsyncpa [#allocation24], 1
    %5410 = vsyncpa [#allocation27], 1
    %5411 = vsyncpa [#allocation4], 1
    %s5412 = scalar_lea.sflag [#allocation4], 1
    %5413 = vsyncpa %s5412, 1

</llo_original>
